<compile_context>
chip_gen: v7x
topology: tpu7x:2x2x1
jax: 0.10.0
libtpu: 0.0.40
codegen_flags: <defaults>
</compile_context>

<pallas_src>
import functools

import jax
import jax.numpy as jnp
from jax.experimental import pallas as pl
from jax.experimental.pallas import tpu as pltpu


def _round_up(x, m):
    return -(-x // m) * m


def _cdiv(a, b):
    return -(-a // b)


def _fit_tile(dim, t0, align):
    """Largest tile <= t0 (multiple of `align`) that minimizes padding of `dim`."""
    if dim <= t0:
        return _round_up(dim, align)
    nsteps = _cdiv(dim, t0)
    return _round_up(_cdiv(dim, nsteps), align)


def _tpu_generation():
    try:
        kind = jax.devices()[0].device_kind.lower()
    except Exception:
        return "unknown"
    if "7" in kind:
        return "v7x"
    if "v6" in kind:
        return "v6e"
    if "v5 lite" in kind or "v5e" in kind:
        return "v5e"
    return "other"


def _vmem_capacity_bytes(gen):
    try:
        return int(pltpu.get_tpu_info().vmem_capacity_bytes)
    except Exception:
        # Conservative fallbacks if the query is unavailable.
        return (64 << 20) if gen == "v7x" else (128 << 20)


def _tile_defaults(gen, in_bytes):
    if gen == "v5e":
        # 4x128x128 MXU; 128-alignment suffices, smaller tiles already meet
        # the 197 TF/s / 0.82 TB/s roofline and waste less pad on ragged shapes.
        if in_bytes <= 2:
            return 512, 512, 1024
        return 256, 256, 512
    # v6e / v7x (2x256x256 MXU) and unknown chips.
    if in_bytes <= 2:
        return 1024, 1024, 1024     # bf16/fp8: ~20 MiB double-buffered working set
    return 512, 512, 1024           # f32:      ~12 MiB double-buffered working set


def _matmul_kernel_acc(a_ref, b_ref, o_ref, acc_ref, *, precision):
    # K is the innermost ("arbitrary") grid axis; accumulate in f32 VMEM scratch.
    k = pl.program_id(2)
    prod = jnp.dot(
        a_ref[...], b_ref[...],
        preferred_element_type=jnp.float32, precision=precision,
    )

    @pl.when(k == 0)
    def _():
        acc_ref[...] = prod          # first step: assign, skip zero-init + add

    @pl.when(k > 0)
    def _():
        acc_ref[...] += prod

    @pl.when(k == pl.num_programs(2) - 1)
    def _():
        o_ref[...] = acc_ref[...].astype(o_ref.dtype)


def _matmul_kernel_single_k(a_ref, b_ref, o_ref, *, precision):
    # Whole K in one block: no scratch accumulator, no predicated regions.
    o_ref[...] = jnp.dot(
        a_ref[...], b_ref[...],
        preferred_element_type=jnp.float32, precision=precision,
    ).astype(o_ref.dtype)


def pallas_matmul(x1, x2, *, tm=None, tn=None, tk=None, precision=None):
    M, K = x1.shape
    K2, N = x2.shape
    assert K == K2, "inner dimensions must match"
    out_dtype = jnp.result_type(x1.dtype, x2.dtype)

    # Non-floating dtypes: v7x's MXU has no integer support — use XLA.
    if not jnp.issubdtype(out_dtype, jnp.floating):
        return jnp.dot(x1, x2).astype(out_dtype)

    # Small-shape fast path: for tiny problems the ~0.35 us/step grid overhead
    # and masked (N<128) partial stores make the kernel strictly worse than XLA.
    if (M * N * K) < (128 * 128 * 256) or N < 128 or M < 8 or K < 128:
        return jnp.dot(x1, x2, preferred_element_type=out_dtype).astype(out_dtype)

    # Promote both operands to the result dtype so tile sizing is consistent.
    if x1.dtype != out_dtype:
        x1 = x1.astype(out_dtype)
    if x2.dtype != out_dtype:
        x2 = x2.astype(out_dtype)

    in_bytes = jnp.dtype(out_dtype).itemsize
    out_bytes = in_bytes
    sub = {1: 32, 2: 16, 4: 8}.get(in_bytes, 8)     # sublane packing for tm

    gen = _tpu_generation()
    num_cores = 2 if gen == "v7x" else 1
    vmem_cap = _vmem_capacity_bytes(gen)

    tm0, tn0, tk0 = _tile_defaults(gen, in_bytes)
    tm = tm if tm is not None else _fit_tile(M, tm0, sub)
    tn = tn if tn is not None else _fit_tile(N, tn0, 128)
    tk = tk if tk is not None else _fit_tile(K, tk0, 128)

    gm, gn = _cdiv(M, tm), _cdiv(N, tn)

    # v7x dual-TensorCore: make sure there are >= 2 parallel output blocks.
    if num_cores >= 2 and gm * gn < num_cores:
        if M >= 2 * sub:
            tm = _round_up(_cdiv(M, 2), sub)
        elif N >= 2 * 128:
            tn = _round_up(_cdiv(N, 2), 128)
        gm, gn = _cdiv(M, tm), _cdiv(N, tn)

    # Only K needs padding (zero padding is exact for the accumulation).
    # Ragged M/N is handled by cdiv grids + partial boundary blocks: garbage
    # never reaches the (M, N) output, partial output stores are masked.
    Kp = _round_up(K, tk)
    if Kp != K:
        x1 = jnp.pad(x1, ((0, 0), (0, Kp - K)))
        x2 = jnp.pad(x2, ((0, Kp - K), (0, 0)))
    gk = Kp // tk

    # VMEM budget: double-buffered inputs + double-buffered output + f32
    # accumulator + temporary f32 dot-result tile.
    needed = (
        2 * (tm * tk + tk * tn) * in_bytes
        + 2 * tm * tn * out_bytes
        + 2 * tm * tn * 4
    )
    vmem_limit = int(min(max(int(1.5 * needed), 32 << 20), int(0.75 * vmem_cap)))

    cost = pl.CostEstimate(
        flops=2 * M * N * Kp,
        transcendentals=0,
        bytes_accessed=(
            M * Kp * gn * in_bytes        # A re-read once per j-step
            + Kp * N * gm * in_bytes      # B re-read once per i-step
            + M * N * out_bytes           # C written once
        ),
    )

    # NOTE: default `precision=None` uses the MXU's native (reduced) f32
    # precision, matching XLA's default jnp.dot; pass
    # precision=jax.lax.Precision.HIGHEST for full-f32 numerics (slower).
    # TODO(synk): optional bf16-cast fast path for f32 operands on v6e/v7x.
    if gk == 1:
        kernel = functools.partial(_matmul_kernel_single_k, precision=precision)
        dim_sem = ("parallel", "parallel")
        grid_spec = pltpu.PrefetchScalarGridSpec(
            num_scalar_prefetch=0,
            grid=(gm, gn),
            in_specs=[
                pl.BlockSpec((tm, tk), lambda i, j: (i, 0)),
                pl.BlockSpec((tk, tn), lambda i, j: (0, j)),
            ],
            out_specs=pl.BlockSpec((tm, tn), lambda i, j: (i, j)),
        )
    else:
        kernel = functools.partial(_matmul_kernel_acc, precision=precision)
        dim_sem = ("parallel", "parallel", "arbitrary")
        grid_spec = pltpu.PrefetchScalarGridSpec(
            num_scalar_prefetch=0,
            grid=(gm, gn, gk),
            in_specs=[
                pl.BlockSpec((tm, tk), lambda i, j, k: (i, k)),
                pl.BlockSpec((tk, tn), lambda i, j, k: (k, j)),
            ],
            out_specs=pl.BlockSpec((tm, tn), lambda i, j, k: (i, j)),
            scratch_shapes=[pltpu.VMEM((tm, tn), jnp.float32)],
        )

    return pl.pallas_call(
        kernel,
        out_shape=jax.ShapeDtypeStruct((M, N), out_dtype),
        grid_spec=grid_spec,
        compiler_params=pltpu.CompilerParams(
            dimension_semantics=dim_sem,
            vmem_limit_bytes=vmem_limit,
        ),
        cost_estimate=cost,
    )(x1, x2)


if __name__ == "__main__":
    key = jax.random.PRNGKey(0)
    k1, k2, k3, k4 = jax.random.split(key, 4)

    # Tiled Pallas path: ragged M (640), ragged K (1300 -> padded to a tile
    # multiple), ragged-free N=384; exercises the 3-D grid with the f32 VMEM
    # accumulator and the first-step-assign path. Still only a few MB.
    M, K, N = 640, 1300, 384
    a = jax.random.normal(k1, (M, K), dtype=jnp.float32)
    b = jax.random.normal(k2, (K, N), dtype=jnp.float32)
    out = jax.block_until_ready(pallas_matmul(a, b))
    ref = jnp.dot(a, b, precision=jax.lax.Precision.HIGHEST)
    assert out.shape == ref.shape
    # Default MXU f32 precision vs. HIGHEST reference -> modest tolerance.
    assert jnp.allclose(out, ref, atol=1e-2, rtol=1e-2), float(
        jnp.max(jnp.abs(out - ref))
    )

    # Tiny shapes consistent with the module's forward (seq=8, hidden=32):
    # takes the small-shape fallback (jnp.dot) — the kernel can only lose here.
    m, k, n = 8, 32, 16
    x1 = jax.random.normal(k3, (m, k), dtype=jnp.float32)
    x2 = jax.random.normal(k4, (k, n), dtype=jnp.float32)
    small = jax.block_until_ready(pallas_matmul(x1, x2))
    ref_small = x1 @ x2
    assert small.shape == ref_small.shape
    assert jnp.allclose(small, ref_small, atol=1e-5, rtol=1e-5)

    print("KERNEL_OK")
</pallas_src>

<mosaic_0001>
module attributes {stable_mosaic.version = 11 : i64} {
  func.func @_matmul_kernel_acc(%arg0: i32, %arg1: i32, %arg2: i32, %arg3: memref<320x768xf32, #tpu.memory_space<vmem>>, %arg4: memref<768x384xf32, #tpu.memory_space<vmem>>, %arg5: memref<320x384xf32, #tpu.memory_space<vmem>>, %arg6: memref<320x384xf32, #tpu.memory_space<vmem>>) attributes {dimension_semantics = [#tpu.dimension_semantics<parallel>, #tpu.dimension_semantics<parallel>, #tpu.dimension_semantics<arbitrary>], iteration_bounds = array<i64: 2, 1, 2>, scalar_prefetch = 0 : i64, scratch_operands = 1 : i64, tpu.core_type = #tpu.core_type<tc>, window_params = [{transform_indices = @transform_0, window_bounds = array<i64: 320, 768>}, {transform_indices = @transform_1, window_bounds = array<i64: 768, 384>}, {transform_indices = @transform_2, window_bounds = array<i64: 320, 384>}]} {
    %c0 = arith.constant 0 : index
    %c0_0 = arith.constant 0 : index
    %0 = vector.load %arg3[%c0, %c0_0] : memref<320x768xf32, #tpu.memory_space<vmem>>, vector<320x768xf32>
    %c0_1 = arith.constant 0 : index
    %c0_2 = arith.constant 0 : index
    %1 = vector.load %arg4[%c0_1, %c0_2] : memref<768x384xf32, #tpu.memory_space<vmem>>, vector<768x384xf32>
    %cst = arith.constant dense<0.000000e+00> : vector<320x384xf32>
    %2 = tpu.matmul %0, %1, %cst {dimension_numbers = #tpu.dot_dimension_numbers<[1], [0], [0], [1], [0, 0, 1, 1], [], []>} : vector<320x768xf32>, vector<768x384xf32>, vector<320x384xf32> -> vector<320x384xf32>
    %c0_i32 = arith.constant 0 : i32
    %3 = arith.cmpi eq, %arg2, %c0_i32 : i32
    %4 = arith.extui %3 : i1 to i32
    %c0_i32_3 = arith.constant 0 : i32
    %5 = arith.cmpi ne, %4, %c0_i32_3 : i32
    scf.if %5 {
      %c0_7 = arith.constant 0 : index
      %c0_8 = arith.constant 0 : index
      %12 = vector.load %arg6[%c0_7, %c0_8] : memref<320x384xf32, #tpu.memory_space<vmem>>, vector<320x384xf32>
      tpu.vector_store %arg6[%c0_7, %c0_8], %2 {strides = array<i32>} : memref<320x384xf32, #tpu.memory_space<vmem>>, vector<320x384xf32>,
    } else {
    }
    %c0_i32_4 = arith.constant 0 : i32
    %6 = arith.cmpi sgt, %arg2, %c0_i32_4 : i32
    %7 = arith.extui %6 : i1 to i32
    %c0_i32_5 = arith.constant 0 : i32
    %8 = arith.cmpi ne, %7, %c0_i32_5 : i32
    scf.if %8 {
      %c0_7 = arith.constant 0 : index
      %c0_8 = arith.constant 0 : index
      %12 = vector.load %arg6[%c0_7, %c0_8] : memref<320x384xf32, #tpu.memory_space<vmem>>, vector<320x384xf32>
      %13 = arith.addf %12, %2 : vector<320x384xf32>
      %c0_9 = arith.constant 0 : index
      %c0_10 = arith.constant 0 : index
      %14 = vector.load %arg6[%c0_9, %c0_10] : memref<320x384xf32, #tpu.memory_space<vmem>>, vector<320x384xf32>
      tpu.vector_store %arg6[%c0_9, %c0_10], %13 {strides = array<i32>} : memref<320x384xf32, #tpu.memory_space<vmem>>, vector<320x384xf32>,
    } else {
    }
    %c1_i32 = arith.constant 1 : i32
    %9 = arith.cmpi eq, %arg2, %c1_i32 : i32
    %10 = arith.extui %9 : i1 to i32
    %c0_i32_6 = arith.constant 0 : i32
    %11 = arith.cmpi ne, %10, %c0_i32_6 : i32
    scf.if %11 {
      %c0_7 = arith.constant 0 : index
      %c0_8 = arith.constant 0 : index
      %12 = vector.load %arg6[%c0_7, %c0_8] : memref<320x384xf32, #tpu.memory_space<vmem>>, vector<320x384xf32>
      %c0_9 = arith.constant 0 : index
      %c0_10 = arith.constant 0 : index
      %13 = vector.load %arg5[%c0_9, %c0_10] : memref<320x384xf32, #tpu.memory_space<vmem>>, vector<320x384xf32>
      tpu.vector_store %arg5[%c0_9, %c0_10], %12 {strides = array<i32>} : memref<320x384xf32, #tpu.memory_space<vmem>>, vector<320x384xf32>,
    } else {
    }
    return
  }
  func.func @transform_0(%arg0: i32, %arg1: i32, %arg2: i32) -> (i32, i32) {
    %c0_i32 = arith.constant 0 : i32
    return %arg0, %arg2 : i32, i32
  }
  func.func @transform_1(%arg0: i32, %arg1: i32, %arg2: i32) -> (i32, i32) {
    %c0_i32 = arith.constant 0 : i32
    return %arg2, %arg1 : i32, i32
  }
  func.func @transform_2(%arg0: i32, %arg1: i32, %arg2: i32) -> (i32, i32) {
    %c0_i32 = arith.constant 0 : i32
    return %arg0, %arg1 : i32, i32
  }
}

</mosaic_0001>

<llo_original>
// kernel: tpu_custom_call.1
$region0: #{tpu_custom_call.1}
  #allocation0 [shape = 'u32[]', space=smem, size = 0x4, offset = 0x4, fixed_abs, tag = 'smem constant byte address 0x4 - core index']
  #allocation1 [shape = 'u32[144,128]{1,0:T(1,128)}', space=vmem, size = 0x12000, scoped, tag = 'internal scratch']
  #allocation2 [shape = 'f32[320,384]{1,0:T(8,128)}', space=vmem, size = 0x78000, scoped, tag = 'scratch operand']
  %s0 = inlined_call_operand.hbm [shape: f32[640,1536], index: 0, kind: input, shape index: {}]
  %s1 = inlined_call_operand.hbm [shape: f32[1536,384], index: 1, kind: input, shape index: {}]
  %s2 = inlined_call_operand.hbm [shape: f32[640,384], index: 2, kind: output, shape index: {}]
  %s3 = sld [smem:[#allocation0]]
  $region61: #{tpu_custom_call.1} parent=0
    _
  %s5 = ssub.s32 1, %s3
  %s6 = scalar_select 0, %s5, %s3
  $region1: #{tpu_custom_call.1} parent=0
    #allocation3 [shape = 'u8[1966080]{0}', space=vmem, size = 0x1e0000, scoped, tag = 'input window, operand 0']
    #allocation4 [shape = 's32[2]{0}', space=sflag, size = 0x8, scoped, tag = 'scoped memory for tpu_custom_call.1']
    #allocation5 [shape = 's32[2]{0}', space=sflag, size = 0x8, scoped, tag = 'scoped memory for tpu_custom_call.1']
    #allocation6 [shape = 'u8[2359296]{0}', space=vmem, size = 0x240000, scoped, tag = 'input window, operand 1']
    #allocation7 [shape = 's32[2]{0}', space=sflag, size = 0x8, scoped, tag = 'scoped memory for tpu_custom_call.1']
    #allocation8 [shape = 'u8[983040]{0}', space=vmem, size = 0xf0000, scoped, tag = 'output window, operand 0']
    %7 = vsyncpa [#allocation4], 0
    %s8 = scalar_lea.sflag [#allocation4], 1
    %9 = vsyncpa %s8, 0
    %10 = vsyncpa [#allocation7], 0
    %s11 = scalar_lea.sflag [#allocation7], 1
    %12 = vsyncpa %s11, 0
    %13 = vsyncpa [#allocation5], 0
    %s14 = scalar_lea.sflag [#allocation5], 1
    %15 = vsyncpa %s14, 0
    loop: start=0, step=1, limit=6
    $region2: #{tpu_custom_call.1} parent=1 // loop_pre_header
      _
    $region3: #{tpu_custom_call.1} parent=1 // loop_header
      %s17 = sphi 0, %s21
      %p18 = scmp.ge.s32.totalorder %s17, 6
      %s24 = sphi 0, %s43
      %s25 = sphi 0, %s39
      %s26 = sphi 0, %s35
      %s27 = sphi 0, %s24
      %s28 = sphi 0, %s25
      %s29 = sphi 0, %s26
      %s30 = sphi 0, %s27
      %s31 = sphi 0, %s28
      %s32 = sphi 0, %s29
      %s48 = sphi 0, %s50
      %s51 = sphi 0, %s48
      %s52 = sphi 0, %s51
      %s68 = sphi 0, %s52
      %s76 = sphi 0, %s78
      %s79 = sphi 0, %s76
      %s80 = sphi 0, %s79
      %s96 = sphi 0, %s80
      %s104 = sphi 0, %s106
      %s107 = sphi 0, %s104
      %s108 = sphi 0, %s107
      %s124 = sphi 0, %s108
    $region4: #{tpu_custom_call.1} parent=1 // loop_header_branch
      %20 = sbr.rel (%p18) target = $region8
    $region5: #{tpu_custom_call.1} parent=1 // loop_body
      %s22 = ssub.s32 %s17, 1
      %s23 = ssub.s32 %s17, 2
      %s33 = sadd.s32 1, %s26
      %p34 = scmp.ge.s32.totalorder %s33, 2
      %s35 = scalar_select %p34, 0, %s33
      %s36 = sadd.s32 1, %s25
      %s37 = scalar_select %p34, %s36, %s25
      %p38 = scmp.ge.s32.totalorder %s37, 1
      %s39 = scalar_select %p38, 0, %s37
      %s40 = sadd.s32 1, %s24
      %s41 = scalar_select %p38, %s40, %s24
      %p42 = scmp.ge.s32.totalorder %s41, 2
      %s43 = scalar_select %p42, 0, %s41
      %s44 = ssub.s32 %s24, %s43
      %s45 = ssub.s32 %s26, %s35
      %s46 = sor.u32 %s44, %s45
      %p47 = scmp.eq.s32.totalorder %s46, 0
      %s49 = sadd.s32 %s48, 1
      %s50 = scalar_select %p47, %s48, %s49
      %p53 = pneg %p47
      %p54 = scmp.eq.s32.totalorder %s17, 3
      %p55 = por %p53, %p54
      %p56 = scmp.ne.s32.totalorder %s48, %s51
      %p57 = scmp.eq.s32.totalorder %s17, 0
      %p58 = por %p56, %p57
      %p59 = scmp.ne.s32.totalorder %s48, %s51
      %p60 = scmp.eq.s32.totalorder %s22, 3
      %p61 = por %p59, %p60
      %p62 = scmp.ne.s32.totalorder %s51, %s52
      %p63 = scmp.eq.s32.totalorder %s22, 0
      %p64 = por %p62, %p63
      %p65 = scmp.ne.s32.totalorder %s51, %s52
      %p66 = scmp.eq.s32.totalorder %s23, 3
      %p67 = por %p65, %p66
      %p69 = scmp.ne.s32.totalorder %s52, %s68
      %p70 = scmp.eq.s32.totalorder %s23, 0
      %p71 = por %p69, %p70
      %s72 = ssub.s32 %s26, %s35
      %s73 = ssub.s32 %s25, %s39
      %s74 = sor.u32 %s72, %s73
      %p75 = scmp.eq.s32.totalorder %s74, 0
      %s77 = sadd.s32 %s76, 1
      %s78 = scalar_select %p75, %s76, %s77
      %p81 = pneg %p75
      %p82 = scmp.eq.s32.totalorder %s17, 3
      %p83 = por %p81, %p82
      %p84 = scmp.ne.s32.totalorder %s76, %s79
      %p85 = scmp.eq.s32.totalorder %s17, 0
      %p86 = por %p84, %p85
      %p87 = scmp.ne.s32.totalorder %s76, %s79
      %p88 = scmp.eq.s32.totalorder %s22, 3
      %p89 = por %p87, %p88
      %p90 = scmp.ne.s32.totalorder %s79, %s80
      %p91 = scmp.eq.s32.totalorder %s22, 0
      %p92 = por %p90, %p91
      %p93 = scmp.ne.s32.totalorder %s79, %s80
      %p94 = scmp.eq.s32.totalorder %s23, 3
      %p95 = por %p93, %p94
      %p97 = scmp.ne.s32.totalorder %s80, %s96
      %p98 = scmp.eq.s32.totalorder %s23, 0
      %p99 = por %p97, %p98
      %s100 = ssub.s32 %s24, %s43
      %s101 = ssub.s32 %s25, %s39
      %s102 = sor.u32 %s100, %s101
      %p103 = scmp.eq.s32.totalorder %s102, 0
      %s105 = sadd.s32 %s104, 1
      %s106 = scalar_select %p103, %s104, %s105
      %p109 = pneg %p103
      %p110 = scmp.eq.s32.totalorder %s17, 3
      %p111 = por %p109, %p110
      %p112 = scmp.ne.s32.totalorder %s104, %s107
      %p113 = scmp.eq.s32.totalorder %s17, 0
      %p114 = por %p112, %p113
      %p115 = scmp.ne.s32.totalorder %s104, %s107
      %p116 = scmp.eq.s32.totalorder %s22, 3
      %p117 = por %p115, %p116
      %p118 = scmp.ne.s32.totalorder %s107, %s108
      %p119 = scmp.eq.s32.totalorder %s22, 0
      %p120 = por %p118, %p119
      %p121 = scmp.ne.s32.totalorder %s107, %s108
      %p122 = scmp.eq.s32.totalorder %s23, 3
      %p123 = por %p121, %p122
      %p125 = scmp.ne.s32.totalorder %s108, %s124
      %p126 = scmp.eq.s32.totalorder %s23, 0
      %p127 = por %p125, %p126
      %p128 = scmp.le.s32.totalorder 1, %s17
      %p129 = scmp.lt.s32.totalorder %s17, 5
      %p130 = pnand %p128, %p129
      %p131 = pneg %p130
      // Predicated region
      $region9: #{tpu_custom_call.1} parent=5 // pred_check
        _
      $region10: #{tpu_custom_call.1} parent=5 // pred_check_branch
        %133 = sbr.rel (%p130) target = $region12
      $region11: #{tpu_custom_call.1} parent=5 // pred_region
        %s134 = ssub.s32 %s17, 1
      $region12: #{tpu_custom_call.1} parent=5 // pred_fallthru
        _
      %p135 = scmp.lt.s32.totalorder %s17, 4
      // Predicated region
      $region13: #{tpu_custom_call.1} parent=5 // pred_check
        %p136 = pneg %p135
      $region14: #{tpu_custom_call.1} parent=5 // pred_check_branch
        %138 = sbr.rel (%p136) target = $region16
      $region15: #{tpu_custom_call.1} parent=5 // pred_region
        // Predicated region
        $region17: #{tpu_custom_call.1} parent=15 // pred_check
          %p139 = pneg %p58
        $region18: #{tpu_custom_call.1} parent=15 // pred_check_branch
          %141 = sbr.rel (%p139) target = $region20
        $region19: #{tpu_custom_call.1} parent=15 // pred_region
          %s142 = sand.u32 %s48, 1
          %s143 = scalar_lea.sflag [#allocation4], %s142
          %s144 = sand.u32 %s48, 1
          %s145 = smul.addr %s144, 1920
          %s146 = scalar_lea.vmem [#allocation3], %s145
          %s147 = smul.u32 40, %s24
          %s148 = smul.u32 6, %s26
          %s150 = ssub.s32 30720, 30720
          %151 = vsyncadd %s143, %s150
          %s152 = smul.addr %s147, 12
          %s153 = sadd.s32 %s148, %s152
          %s154 = smul.addr %s153, 128
          %s155 = scalar_lea.hbm %s0, %s154
          %s156 = sshll.u32 %s146, 4
          %s157 = int_to_ptr.vmem [resolvable:$true] %s156
          %162 = dma.hbm_to_vmem [thread:$0]  %s155, 30720, %s157, %s143, 1536, 768, 48
        $region20: #{tpu_custom_call.1} parent=15 // pred_fallthru
          _
        // Predicated region
        $region21: #{tpu_custom_call.1} parent=15 // pred_check
          %p163 = pneg %p86
        $region22: #{tpu_custom_call.1} parent=15 // pred_check_branch
          %165 = sbr.rel (%p163) target = $region24
        $region23: #{tpu_custom_call.1} parent=15 // pred_region
          %s166 = sand.u32 %s76, 1
          %s167 = scalar_lea.sflag [#allocation7], %s166
          %s168 = sand.u32 %s76, 1
          %s169 = smul.addr %s168, 2304
          %s170 = scalar_lea.vmem [#allocation6], %s169
          %s171 = smul.u32 96, %s26
          %s172 = smul.u32 3, %s25
          %s174 = ssub.s32 36864, 36864
          %175 = vsyncadd %s167, %s174
          %s176 = smul.addr %s171, 3
          %s177 = sadd.s32 %s172, %s176
          %s178 = smul.addr %s177, 128
          %s179 = scalar_lea.hbm %s1, %s178
          %s180 = sshll.u32 %s170, 4
          %s181 = int_to_ptr.vmem [resolvable:$true] %s180
          %186 = dma.hbm_to_vmem [thread:$0]  %s179, 36864, %s181, %s167, 384, 384, 24
        $region24: #{tpu_custom_call.1} parent=15 // pred_fallthru
          _
      $region16: #{tpu_custom_call.1} parent=5 // pred_fallthru
        _
      %p187 = scmp.le.s32.totalorder 1, %s17
      %p188 = scmp.lt.s32.totalorder %s17, 5
      %p189 = pnand %p187, %p188
      %p190 = pneg %p189
      // Predicated region
      $region25: #{tpu_custom_call.1} parent=5 // pred_check
        _
      $region26: #{tpu_custom_call.1} parent=5 // pred_check_branch
        %192 = sbr.rel (%p189) target = $region28
      $region27: #{tpu_custom_call.1} parent=5 // pred_region
        %s193 = ssub.s32 %s17, 1
        %s194 = sand.u32 %s51, 1
        %s195 = scalar_lea.sflag [#allocation4], %s194
        %s196 = sand.u32 %s51, 1
        %s197 = smul.addr %s196, 1920
        %s198 = scalar_lea.vmem [#allocation3], %s197
        // Predicated region
        $region29: #{tpu_custom_call.1} parent=27 // pred_check
          %p199 = pneg %p64
        $region30: #{tpu_custom_call.1} parent=27 // pred_check_branch
          %201 = sbr.rel (%p199) target = $region32
        $region31: #{tpu_custom_call.1} parent=27 // pred_region
          %202 = dma.done %s195, 30720
        $region32: #{tpu_custom_call.1} parent=27 // pred_fallthru
          _
        %s203 = sand.u32 %s79, 1
        %s204 = scalar_lea.sflag [#allocation7], %s203
        %s205 = sand.u32 %s79, 1
        %s206 = smul.addr %s205, 2304
        %s207 = scalar_lea.vmem [#allocation6], %s206
        // Predicated region
        $region33: #{tpu_custom_call.1} parent=27 // pred_check
          %p208 = pneg %p92
        $region34: #{tpu_custom_call.1} parent=27 // pred_check_branch
          %210 = sbr.rel (%p208) target = $region36
        $region35: #{tpu_custom_call.1} parent=27 // pred_region
          %211 = dma.done %s204, 36864
        $region36: #{tpu_custom_call.1} parent=27 // pred_fallthru
          _
        %s212 = sand.u32 %s51, 1
        %s213 = scalar_lea.sflag [#allocation4], %s212
        %s214 = sand.u32 %s51, 1
        %s215 = smul.addr %s214, 1920
        %s216 = scalar_lea.vmem [#allocation3], %s215
        %p217 = pneg %p64
        %p218 = pneg %p61
        %s219 = sand.u32 %s79, 1
        %s220 = scalar_lea.sflag [#allocation7], %s219
        %s221 = sand.u32 %s79, 1
        %s222 = smul.addr %s221, 2304
        %s223 = scalar_lea.vmem [#allocation6], %s222
        %p224 = pneg %p92
        %p225 = pneg %p89
        %p226 = pneg %p120
        %p227 = pneg %p117
        %s228 = sand.u32 %s107, 1
        %s229 = scalar_lea.sflag [#allocation5], %s228
        %s230 = sand.u32 %s107, 1
        %s231 = smul.addr %s230, 960
        %s232 = scalar_lea.vmem [#allocation8], %s231
        %s233 = smul.u32 40, %s27
        %s234 = smul.u32 6, %s29
        %s235 = smul.u32 96, %s29
        %s236 = smul.u32 3, %s28
        %s237 = smul.u32 40, %s27
        %s238 = smul.u32 3, %s28
        %v239 = vld [vmem:[%s198] sm:$0xff]
        %v240 = vld [vmem:[%s198 + $0x8] sm:$0xff]
        %v241 = vld [vmem:[%s198 + $0x10] sm:$0xff]
        %v242 = vld [vmem:[%s198 + $0x18] sm:$0xff]
        %v243 = vld [vmem:[%s198 + $0x20] sm:$0xff]
        %v244 = vld [vmem:[%s198 + $0x28] sm:$0xff]
        %v245 = vld [vmem:[%s198 + $0x30] sm:$0xff]
        %v246 = vld [vmem:[%s198 + $0x38] sm:$0xff]
        %v247 = vld [vmem:[%s198 + $0x40] sm:$0xff]
        %v248 = vld [vmem:[%s198 + $0x48] sm:$0xff]
        %v249 = vld [vmem:[%s198 + $0x50] sm:$0xff]
        %v250 = vld [vmem:[%s198 + $0x58] sm:$0xff]
        %v251 = vld [vmem:[%s198 + $0x60] sm:$0xff]
        %v252 = vld [vmem:[%s198 + $0x68] sm:$0xff]
        %v253 = vld [vmem:[%s198 + $0x70] sm:$0xff]
        %v254 = vld [vmem:[%s198 + $0x78] sm:$0xff]
        %v255 = vld [vmem:[%s198 + $0x80] sm:$0xff]
        %v256 = vld [vmem:[%s198 + $0x88] sm:$0xff]
        %v257 = vld [vmem:[%s198 + $0x90] sm:$0xff]
        %v258 = vld [vmem:[%s198 + $0x98] sm:$0xff]
        %v259 = vld [vmem:[%s198 + $0xa0] sm:$0xff]
        %v260 = vld [vmem:[%s198 + $0xa8] sm:$0xff]
        %v261 = vld [vmem:[%s198 + $0xb0] sm:$0xff]
        %v262 = vld [vmem:[%s198 + $0xb8] sm:$0xff]
        %v263 = vld [vmem:[%s198 + $0xc0] sm:$0xff]
        %v264 = vld [vmem:[%s198 + $0xc8] sm:$0xff]
        %v265 = vld [vmem:[%s198 + $0xd0] sm:$0xff]
        %v266 = vld [vmem:[%s198 + $0xd8] sm:$0xff]
        %v267 = vld [vmem:[%s198 + $0xe0] sm:$0xff]
        %v268 = vld [vmem:[%s198 + $0xe8] sm:$0xff]
        %v269 = vld [vmem:[%s198 + $0xf0] sm:$0xff]
        %v270 = vld [vmem:[%s198 + $0xf8] sm:$0xff]
        %v271 = vld [vmem:[%s198 + $0x100] sm:$0xff]
        %v272 = vld [vmem:[%s198 + $0x108] sm:$0xff]
        %v273 = vld [vmem:[%s198 + $0x110] sm:$0xff]
        %v274 = vld [vmem:[%s198 + $0x118] sm:$0xff]
        %v275 = vld [vmem:[%s198 + $0x120] sm:$0xff]
        %v276 = vld [vmem:[%s198 + $0x128] sm:$0xff]
        %v277 = vld [vmem:[%s198 + $0x130] sm:$0xff]
        %v278 = vld [vmem:[%s198 + $0x138] sm:$0xff]
        %v279 = vld [vmem:[%s198 + $0x140] sm:$0xff]
        %v280 = vld [vmem:[%s198 + $0x148] sm:$0xff]
        %v281 = vld [vmem:[%s198 + $0x150] sm:$0xff]
        %v282 = vld [vmem:[%s198 + $0x158] sm:$0xff]
        %v283 = vld [vmem:[%s198 + $0x160] sm:$0xff]
        %v284 = vld [vmem:[%s198 + $0x168] sm:$0xff]
        %v285 = vld [vmem:[%s198 + $0x170] sm:$0xff]
        %v286 = vld [vmem:[%s198 + $0x178] sm:$0xff]
        %v287 = vld [vmem:[%s198 + $0x180] sm:$0xff]
        %v288 = vld [vmem:[%s198 + $0x188] sm:$0xff]
        %v289 = vld [vmem:[%s198 + $0x190] sm:$0xff]
        %v290 = vld [vmem:[%s198 + $0x198] sm:$0xff]
        %v291 = vld [vmem:[%s198 + $0x1a0] sm:$0xff]
        %v292 = vld [vmem:[%s198 + $0x1a8] sm:$0xff]
        %v293 = vld [vmem:[%s198 + $0x1b0] sm:$0xff]
        %v294 = vld [vmem:[%s198 + $0x1b8] sm:$0xff]
        %v295 = vld [vmem:[%s198 + $0x1c0] sm:$0xff]
        %v296 = vld [vmem:[%s198 + $0x1c8] sm:$0xff]
        %v297 = vld [vmem:[%s198 + $0x1d0] sm:$0xff]
        %v298 = vld [vmem:[%s198 + $0x1d8] sm:$0xff]
        %v299 = vld [vmem:[%s198 + $0x1e0] sm:$0xff]
        %v300 = vld [vmem:[%s198 + $0x1e8] sm:$0xff]
        %v301 = vld [vmem:[%s198 + $0x1f0] sm:$0xff]
        %v302 = vld [vmem:[%s198 + $0x1f8] sm:$0xff]
        %v303 = vld [vmem:[%s198 + $0x200] sm:$0xff]
        %v304 = vld [vmem:[%s198 + $0x208] sm:$0xff]
        %v305 = vld [vmem:[%s198 + $0x210] sm:$0xff]
        %v306 = vld [vmem:[%s198 + $0x218] sm:$0xff]
        %v307 = vld [vmem:[%s198 + $0x220] sm:$0xff]
        %v308 = vld [vmem:[%s198 + $0x228] sm:$0xff]
        %v309 = vld [vmem:[%s198 + $0x230] sm:$0xff]
        %v310 = vld [vmem:[%s198 + $0x238] sm:$0xff]
        %v311 = vld [vmem:[%s198 + $0x240] sm:$0xff]
        %v312 = vld [vmem:[%s198 + $0x248] sm:$0xff]
        %v313 = vld [vmem:[%s198 + $0x250] sm:$0xff]
        %v314 = vld [vmem:[%s198 + $0x258] sm:$0xff]
        %v315 = vld [vmem:[%s198 + $0x260] sm:$0xff]
        %v316 = vld [vmem:[%s198 + $0x268] sm:$0xff]
        %v317 = vld [vmem:[%s198 + $0x270] sm:$0xff]
        %v318 = vld [vmem:[%s198 + $0x278] sm:$0xff]
        %v319 = vld [vmem:[%s198 + $0x280] sm:$0xff]
        %v320 = vld [vmem:[%s198 + $0x288] sm:$0xff]
        %v321 = vld [vmem:[%s198 + $0x290] sm:$0xff]
        %v322 = vld [vmem:[%s198 + $0x298] sm:$0xff]
        %v323 = vld [vmem:[%s198 + $0x2a0] sm:$0xff]
        %v324 = vld [vmem:[%s198 + $0x2a8] sm:$0xff]
        %v325 = vld [vmem:[%s198 + $0x2b0] sm:$0xff]
        %v326 = vld [vmem:[%s198 + $0x2b8] sm:$0xff]
        %v327 = vld [vmem:[%s198 + $0x2c0] sm:$0xff]
        %v328 = vld [vmem:[%s198 + $0x2c8] sm:$0xff]
        %v329 = vld [vmem:[%s198 + $0x2d0] sm:$0xff]
        %v330 = vld [vmem:[%s198 + $0x2d8] sm:$0xff]
        %v331 = vld [vmem:[%s198 + $0x2e0] sm:$0xff]
        %v332 = vld [vmem:[%s198 + $0x2e8] sm:$0xff]
        %v333 = vld [vmem:[%s198 + $0x2f0] sm:$0xff]
        %v334 = vld [vmem:[%s198 + $0x2f8] sm:$0xff]
        %v335 = vld [vmem:[%s198 + $0x300] sm:$0xff]
        %v336 = vld [vmem:[%s198 + $0x308] sm:$0xff]
        %v337 = vld [vmem:[%s198 + $0x310] sm:$0xff]
        %v338 = vld [vmem:[%s198 + $0x318] sm:$0xff]
        %v339 = vld [vmem:[%s198 + $0x320] sm:$0xff]
        %v340 = vld [vmem:[%s198 + $0x328] sm:$0xff]
        %v341 = vld [vmem:[%s198 + $0x330] sm:$0xff]
        %v342 = vld [vmem:[%s198 + $0x338] sm:$0xff]
        %v343 = vld [vmem:[%s198 + $0x340] sm:$0xff]
        %v344 = vld [vmem:[%s198 + $0x348] sm:$0xff]
        %v345 = vld [vmem:[%s198 + $0x350] sm:$0xff]
        %v346 = vld [vmem:[%s198 + $0x358] sm:$0xff]
        %v347 = vld [vmem:[%s198 + $0x360] sm:$0xff]
        %v348 = vld [vmem:[%s198 + $0x368] sm:$0xff]
        %v349 = vld [vmem:[%s198 + $0x370] sm:$0xff]
        %v350 = vld [vmem:[%s198 + $0x378] sm:$0xff]
        %v351 = vld [vmem:[%s198 + $0x380] sm:$0xff]
        %v352 = vld [vmem:[%s198 + $0x388] sm:$0xff]
        %v353 = vld [vmem:[%s198 + $0x390] sm:$0xff]
        %v354 = vld [vmem:[%s198 + $0x398] sm:$0xff]
        %v355 = vld [vmem:[%s198 + $0x3a0] sm:$0xff]
        %v356 = vld [vmem:[%s198 + $0x3a8] sm:$0xff]
        %v357 = vld [vmem:[%s198 + $0x3b0] sm:$0xff]
        %v358 = vld [vmem:[%s198 + $0x3b8] sm:$0xff]
        %v359 = vld [vmem:[%s198 + $0x3c0] sm:$0xff]
        %v360 = vld [vmem:[%s198 + $0x3c8] sm:$0xff]
        %v361 = vld [vmem:[%s198 + $0x3d0] sm:$0xff]
        %v362 = vld [vmem:[%s198 + $0x3d8] sm:$0xff]
        %v363 = vld [vmem:[%s198 + $0x3e0] sm:$0xff]
        %v364 = vld [vmem:[%s198 + $0x3e8] sm:$0xff]
        %v365 = vld [vmem:[%s198 + $0x3f0] sm:$0xff]
        %v366 = vld [vmem:[%s198 + $0x3f8] sm:$0xff]
        %v367 = vld [vmem:[%s198 + $0x400] sm:$0xff]
        %v368 = vld [vmem:[%s198 + $0x408] sm:$0xff]
        %v369 = vld [vmem:[%s198 + $0x410] sm:$0xff]
        %v370 = vld [vmem:[%s198 + $0x418] sm:$0xff]
        %v371 = vld [vmem:[%s198 + $0x420] sm:$0xff]
        %v372 = vld [vmem:[%s198 + $0x428] sm:$0xff]
        %v373 = vld [vmem:[%s198 + $0x430] sm:$0xff]
        %v374 = vld [vmem:[%s198 + $0x438] sm:$0xff]
        %v375 = vld [vmem:[%s198 + $0x440] sm:$0xff]
        %v376 = vld [vmem:[%s198 + $0x448] sm:$0xff]
        %v377 = vld [vmem:[%s198 + $0x450] sm:$0xff]
        %v378 = vld [vmem:[%s198 + $0x458] sm:$0xff]
        %v379 = vld [vmem:[%s198 + $0x460] sm:$0xff]
        %v380 = vld [vmem:[%s198 + $0x468] sm:$0xff]
        %v381 = vld [vmem:[%s198 + $0x470] sm:$0xff]
        %v382 = vld [vmem:[%s198 + $0x478] sm:$0xff]
        %v383 = vld [vmem:[%s198 + $0x480] sm:$0xff]
        %v384 = vld [vmem:[%s198 + $0x488] sm:$0xff]
        %v385 = vld [vmem:[%s198 + $0x490] sm:$0xff]
        %v386 = vld [vmem:[%s198 + $0x498] sm:$0xff]
        %v387 = vld [vmem:[%s198 + $0x4a0] sm:$0xff]
        %v388 = vld [vmem:[%s198 + $0x4a8] sm:$0xff]
        %v389 = vld [vmem:[%s198 + $0x4b0] sm:$0xff]
        %v390 = vld [vmem:[%s198 + $0x4b8] sm:$0xff]
        %v391 = vld [vmem:[%s198 + $0x4c0] sm:$0xff]
        %v392 = vld [vmem:[%s198 + $0x4c8] sm:$0xff]
        %v393 = vld [vmem:[%s198 + $0x4d0] sm:$0xff]
        %v394 = vld [vmem:[%s198 + $0x4d8] sm:$0xff]
        %v395 = vld [vmem:[%s198 + $0x4e0] sm:$0xff]
        %v396 = vld [vmem:[%s198 + $0x4e8] sm:$0xff]
        %v397 = vld [vmem:[%s198 + $0x4f0] sm:$0xff]
        %v398 = vld [vmem:[%s198 + $0x4f8] sm:$0xff]
        %v399 = vld [vmem:[%s198 + $0x500] sm:$0xff]
        %v400 = vld [vmem:[%s198 + $0x508] sm:$0xff]
        %v401 = vld [vmem:[%s198 + $0x510] sm:$0xff]
        %v402 = vld [vmem:[%s198 + $0x518] sm:$0xff]
        %v403 = vld [vmem:[%s198 + $0x520] sm:$0xff]
        %v404 = vld [vmem:[%s198 + $0x528] sm:$0xff]
        %v405 = vld [vmem:[%s198 + $0x530] sm:$0xff]
        %v406 = vld [vmem:[%s198 + $0x538] sm:$0xff]
        %v407 = vld [vmem:[%s198 + $0x540] sm:$0xff]
        %v408 = vld [vmem:[%s198 + $0x548] sm:$0xff]
        %v409 = vld [vmem:[%s198 + $0x550] sm:$0xff]
        %v410 = vld [vmem:[%s198 + $0x558] sm:$0xff]
        %v411 = vld [vmem:[%s198 + $0x560] sm:$0xff]
        %v412 = vld [vmem:[%s198 + $0x568] sm:$0xff]
        %v413 = vld [vmem:[%s198 + $0x570] sm:$0xff]
        %v414 = vld [vmem:[%s198 + $0x578] sm:$0xff]
        %v415 = vld [vmem:[%s198 + $0x580] sm:$0xff]
        %v416 = vld [vmem:[%s198 + $0x588] sm:$0xff]
        %v417 = vld [vmem:[%s198 + $0x590] sm:$0xff]
        %v418 = vld [vmem:[%s198 + $0x598] sm:$0xff]
        %v419 = vld [vmem:[%s198 + $0x5a0] sm:$0xff]
        %v420 = vld [vmem:[%s198 + $0x5a8] sm:$0xff]
        %v421 = vld [vmem:[%s198 + $0x5b0] sm:$0xff]
        %v422 = vld [vmem:[%s198 + $0x5b8] sm:$0xff]
        %v423 = vld [vmem:[%s198 + $0x5c0] sm:$0xff]
        %v424 = vld [vmem:[%s198 + $0x5c8] sm:$0xff]
        %v425 = vld [vmem:[%s198 + $0x5d0] sm:$0xff]
        %v426 = vld [vmem:[%s198 + $0x5d8] sm:$0xff]
        %v427 = vld [vmem:[%s198 + $0x5e0] sm:$0xff]
        %v428 = vld [vmem:[%s198 + $0x5e8] sm:$0xff]
        %v429 = vld [vmem:[%s198 + $0x5f0] sm:$0xff]
        %v430 = vld [vmem:[%s198 + $0x5f8] sm:$0xff]
        %v431 = vld [vmem:[%s198 + $0x600] sm:$0xff]
        %v432 = vld [vmem:[%s198 + $0x608] sm:$0xff]
        %v433 = vld [vmem:[%s198 + $0x610] sm:$0xff]
        %v434 = vld [vmem:[%s198 + $0x618] sm:$0xff]
        %v435 = vld [vmem:[%s198 + $0x620] sm:$0xff]
        %v436 = vld [vmem:[%s198 + $0x628] sm:$0xff]
        %v437 = vld [vmem:[%s198 + $0x630] sm:$0xff]
        %v438 = vld [vmem:[%s198 + $0x638] sm:$0xff]
        %v439 = vld [vmem:[%s198 + $0x640] sm:$0xff]
        %v440 = vld [vmem:[%s198 + $0x648] sm:$0xff]
        %v441 = vld [vmem:[%s198 + $0x650] sm:$0xff]
        %v442 = vld [vmem:[%s198 + $0x658] sm:$0xff]
        %v443 = vld [vmem:[%s198 + $0x660] sm:$0xff]
        %v444 = vld [vmem:[%s198 + $0x668] sm:$0xff]
        %v445 = vld [vmem:[%s198 + $0x670] sm:$0xff]
        %v446 = vld [vmem:[%s198 + $0x678] sm:$0xff]
        %v447 = vld [vmem:[%s198 + $0x680] sm:$0xff]
        %v448 = vld [vmem:[%s198 + $0x688] sm:$0xff]
        %v449 = vld [vmem:[%s198 + $0x690] sm:$0xff]
        %v450 = vld [vmem:[%s198 + $0x698] sm:$0xff]
        %v451 = vld [vmem:[%s198 + $0x6a0] sm:$0xff]
        %v452 = vld [vmem:[%s198 + $0x6a8] sm:$0xff]
        %v453 = vld [vmem:[%s198 + $0x6b0] sm:$0xff]
        %v454 = vld [vmem:[%s198 + $0x6b8] sm:$0xff]
        %v455 = vld [vmem:[%s198 + $0x6c0] sm:$0xff]
        %v456 = vld [vmem:[%s198 + $0x6c8] sm:$0xff]
        %v457 = vld [vmem:[%s198 + $0x6d0] sm:$0xff]
        %v458 = vld [vmem:[%s198 + $0x6d8] sm:$0xff]
        %v459 = vld [vmem:[%s198 + $0x6e0] sm:$0xff]
        %v460 = vld [vmem:[%s198 + $0x6e8] sm:$0xff]
        %v461 = vld [vmem:[%s198 + $0x6f0] sm:$0xff]
        %v462 = vld [vmem:[%s198 + $0x6f8] sm:$0xff]
        %v463 = vld [vmem:[%s198 + $0x700] sm:$0xff]
        %v464 = vld [vmem:[%s198 + $0x708] sm:$0xff]
        %v465 = vld [vmem:[%s198 + $0x710] sm:$0xff]
        %v466 = vld [vmem:[%s198 + $0x718] sm:$0xff]
        %v467 = vld [vmem:[%s198 + $0x720] sm:$0xff]
        %v468 = vld [vmem:[%s198 + $0x728] sm:$0xff]
        %v469 = vld [vmem:[%s198 + $0x730] sm:$0xff]
        %v470 = vld [vmem:[%s198 + $0x738] sm:$0xff]
        %v471 = vld [vmem:[%s198 + $0x740] sm:$0xff]
        %v472 = vld [vmem:[%s198 + $0x748] sm:$0xff]
        %v473 = vld [vmem:[%s198 + $0x750] sm:$0xff]
        %v474 = vld [vmem:[%s198 + $0x758] sm:$0xff]
        %v475 = vld [vmem:[%s198 + $0x760] sm:$0xff]
        %v476 = vld [vmem:[%s198 + $0x768] sm:$0xff]
        %v477 = vld [vmem:[%s198 + $0x770] sm:$0xff]
        %v478 = vld [vmem:[%s198 + $0x778] sm:$0xff]
        %v479 = vld [vmem:[%s207] sm:$0xff]
        %v480 = vld [vmem:[%s207 + $0x8] sm:$0xff]
        %v481 = vld [vmem:[%s207 + $0x10] sm:$0xff]
        %v482 = vld [vmem:[%s207 + $0x18] sm:$0xff]
        %v483 = vld [vmem:[%s207 + $0x20] sm:$0xff]
        %v484 = vld [vmem:[%s207 + $0x28] sm:$0xff]
        %v485 = vld [vmem:[%s207 + $0x30] sm:$0xff]
        %v486 = vld [vmem:[%s207 + $0x38] sm:$0xff]
        %v487 = vld [vmem:[%s207 + $0x40] sm:$0xff]
        %v488 = vld [vmem:[%s207 + $0x48] sm:$0xff]
        %v489 = vld [vmem:[%s207 + $0x50] sm:$0xff]
        %v490 = vld [vmem:[%s207 + $0x58] sm:$0xff]
        %v491 = vld [vmem:[%s207 + $0x60] sm:$0xff]
        %v492 = vld [vmem:[%s207 + $0x68] sm:$0xff]
        %v493 = vld [vmem:[%s207 + $0x70] sm:$0xff]
        %v494 = vld [vmem:[%s207 + $0x78] sm:$0xff]
        %v495 = vld [vmem:[%s207 + $0x80] sm:$0xff]
        %v496 = vld [vmem:[%s207 + $0x88] sm:$0xff]
        %v497 = vld [vmem:[%s207 + $0x90] sm:$0xff]
        %v498 = vld [vmem:[%s207 + $0x98] sm:$0xff]
        %v499 = vld [vmem:[%s207 + $0xa0] sm:$0xff]
        %v500 = vld [vmem:[%s207 + $0xa8] sm:$0xff]
        %v501 = vld [vmem:[%s207 + $0xb0] sm:$0xff]
        %v502 = vld [vmem:[%s207 + $0xb8] sm:$0xff]
        %v503 = vld [vmem:[%s207 + $0xc0] sm:$0xff]
        %v504 = vld [vmem:[%s207 + $0xc8] sm:$0xff]
        %v505 = vld [vmem:[%s207 + $0xd0] sm:$0xff]
        %v506 = vld [vmem:[%s207 + $0xd8] sm:$0xff]
        %v507 = vld [vmem:[%s207 + $0xe0] sm:$0xff]
        %v508 = vld [vmem:[%s207 + $0xe8] sm:$0xff]
        %v509 = vld [vmem:[%s207 + $0xf0] sm:$0xff]
        %v510 = vld [vmem:[%s207 + $0xf8] sm:$0xff]
        %v511 = vld [vmem:[%s207 + $0x100] sm:$0xff]
        %v512 = vld [vmem:[%s207 + $0x108] sm:$0xff]
        %v513 = vld [vmem:[%s207 + $0x110] sm:$0xff]
        %v514 = vld [vmem:[%s207 + $0x118] sm:$0xff]
        %v515 = vld [vmem:[%s207 + $0x120] sm:$0xff]
        %v516 = vld [vmem:[%s207 + $0x128] sm:$0xff]
        %v517 = vld [vmem:[%s207 + $0x130] sm:$0xff]
        %v518 = vld [vmem:[%s207 + $0x138] sm:$0xff]
        %v519 = vld [vmem:[%s207 + $0x140] sm:$0xff]
        %v520 = vld [vmem:[%s207 + $0x148] sm:$0xff]
        %v521 = vld [vmem:[%s207 + $0x150] sm:$0xff]
        %v522 = vld [vmem:[%s207 + $0x158] sm:$0xff]
        %v523 = vld [vmem:[%s207 + $0x160] sm:$0xff]
        %v524 = vld [vmem:[%s207 + $0x168] sm:$0xff]
        %v525 = vld [vmem:[%s207 + $0x170] sm:$0xff]
        %v526 = vld [vmem:[%s207 + $0x178] sm:$0xff]
        %v527 = vld [vmem:[%s207 + $0x180] sm:$0xff]
        %v528 = vld [vmem:[%s207 + $0x188] sm:$0xff]
        %v529 = vld [vmem:[%s207 + $0x190] sm:$0xff]
        %v530 = vld [vmem:[%s207 + $0x198] sm:$0xff]
        %v531 = vld [vmem:[%s207 + $0x1a0] sm:$0xff]
        %v532 = vld [vmem:[%s207 + $0x1a8] sm:$0xff]
        %v533 = vld [vmem:[%s207 + $0x1b0] sm:$0xff]
        %v534 = vld [vmem:[%s207 + $0x1b8] sm:$0xff]
        %v535 = vld [vmem:[%s207 + $0x1c0] sm:$0xff]
        %v536 = vld [vmem:[%s207 + $0x1c8] sm:$0xff]
        %v537 = vld [vmem:[%s207 + $0x1d0] sm:$0xff]
        %v538 = vld [vmem:[%s207 + $0x1d8] sm:$0xff]
        %v539 = vld [vmem:[%s207 + $0x1e0] sm:$0xff]
        %v540 = vld [vmem:[%s207 + $0x1e8] sm:$0xff]
        %v541 = vld [vmem:[%s207 + $0x1f0] sm:$0xff]
        %v542 = vld [vmem:[%s207 + $0x1f8] sm:$0xff]
        %v543 = vld [vmem:[%s207 + $0x200] sm:$0xff]
        %v544 = vld [vmem:[%s207 + $0x208] sm:$0xff]
        %v545 = vld [vmem:[%s207 + $0x210] sm:$0xff]
        %v546 = vld [vmem:[%s207 + $0x218] sm:$0xff]
        %v547 = vld [vmem:[%s207 + $0x220] sm:$0xff]
        %v548 = vld [vmem:[%s207 + $0x228] sm:$0xff]
        %v549 = vld [vmem:[%s207 + $0x230] sm:$0xff]
        %v550 = vld [vmem:[%s207 + $0x238] sm:$0xff]
        %v551 = vld [vmem:[%s207 + $0x240] sm:$0xff]
        %v552 = vld [vmem:[%s207 + $0x248] sm:$0xff]
        %v553 = vld [vmem:[%s207 + $0x250] sm:$0xff]
        %v554 = vld [vmem:[%s207 + $0x258] sm:$0xff]
        %v555 = vld [vmem:[%s207 + $0x260] sm:$0xff]
        %v556 = vld [vmem:[%s207 + $0x268] sm:$0xff]
        %v557 = vld [vmem:[%s207 + $0x270] sm:$0xff]
        %v558 = vld [vmem:[%s207 + $0x278] sm:$0xff]
        %v559 = vld [vmem:[%s207 + $0x280] sm:$0xff]
        %v560 = vld [vmem:[%s207 + $0x288] sm:$0xff]
        %v561 = vld [vmem:[%s207 + $0x290] sm:$0xff]
        %v562 = vld [vmem:[%s207 + $0x298] sm:$0xff]
        %v563 = vld [vmem:[%s207 + $0x2a0] sm:$0xff]
        %v564 = vld [vmem:[%s207 + $0x2a8] sm:$0xff]
        %v565 = vld [vmem:[%s207 + $0x2b0] sm:$0xff]
        %v566 = vld [vmem:[%s207 + $0x2b8] sm:$0xff]
        %v567 = vld [vmem:[%s207 + $0x2c0] sm:$0xff]
        %v568 = vld [vmem:[%s207 + $0x2c8] sm:$0xff]
        %v569 = vld [vmem:[%s207 + $0x2d0] sm:$0xff]
        %v570 = vld [vmem:[%s207 + $0x2d8] sm:$0xff]
        %v571 = vld [vmem:[%s207 + $0x2e0] sm:$0xff]
        %v572 = vld [vmem:[%s207 + $0x2e8] sm:$0xff]
        %v573 = vld [vmem:[%s207 + $0x2f0] sm:$0xff]
        %v574 = vld [vmem:[%s207 + $0x2f8] sm:$0xff]
        %v575 = vld [vmem:[%s207 + $0x300] sm:$0xff]
        %v576 = vld [vmem:[%s207 + $0x308] sm:$0xff]
        %v577 = vld [vmem:[%s207 + $0x310] sm:$0xff]
        %v578 = vld [vmem:[%s207 + $0x318] sm:$0xff]
        %v579 = vld [vmem:[%s207 + $0x320] sm:$0xff]
        %v580 = vld [vmem:[%s207 + $0x328] sm:$0xff]
        %v581 = vld [vmem:[%s207 + $0x330] sm:$0xff]
        %v582 = vld [vmem:[%s207 + $0x338] sm:$0xff]
        %v583 = vld [vmem:[%s207 + $0x340] sm:$0xff]
        %v584 = vld [vmem:[%s207 + $0x348] sm:$0xff]
        %v585 = vld [vmem:[%s207 + $0x350] sm:$0xff]
        %v586 = vld [vmem:[%s207 + $0x358] sm:$0xff]
        %v587 = vld [vmem:[%s207 + $0x360] sm:$0xff]
        %v588 = vld [vmem:[%s207 + $0x368] sm:$0xff]
        %v589 = vld [vmem:[%s207 + $0x370] sm:$0xff]
        %v590 = vld [vmem:[%s207 + $0x378] sm:$0xff]
        %v591 = vld [vmem:[%s207 + $0x380] sm:$0xff]
        %v592 = vld [vmem:[%s207 + $0x388] sm:$0xff]
        %v593 = vld [vmem:[%s207 + $0x390] sm:$0xff]
        %v594 = vld [vmem:[%s207 + $0x398] sm:$0xff]
        %v595 = vld [vmem:[%s207 + $0x3a0] sm:$0xff]
        %v596 = vld [vmem:[%s207 + $0x3a8] sm:$0xff]
        %v597 = vld [vmem:[%s207 + $0x3b0] sm:$0xff]
        %v598 = vld [vmem:[%s207 + $0x3b8] sm:$0xff]
        %v599 = vld [vmem:[%s207 + $0x3c0] sm:$0xff]
        %v600 = vld [vmem:[%s207 + $0x3c8] sm:$0xff]
        %v601 = vld [vmem:[%s207 + $0x3d0] sm:$0xff]
        %v602 = vld [vmem:[%s207 + $0x3d8] sm:$0xff]
        %v603 = vld [vmem:[%s207 + $0x3e0] sm:$0xff]
        %v604 = vld [vmem:[%s207 + $0x3e8] sm:$0xff]
        %v605 = vld [vmem:[%s207 + $0x3f0] sm:$0xff]
        %v606 = vld [vmem:[%s207 + $0x3f8] sm:$0xff]
        %v607 = vld [vmem:[%s207 + $0x400] sm:$0xff]
        %v608 = vld [vmem:[%s207 + $0x408] sm:$0xff]
        %v609 = vld [vmem:[%s207 + $0x410] sm:$0xff]
        %v610 = vld [vmem:[%s207 + $0x418] sm:$0xff]
        %v611 = vld [vmem:[%s207 + $0x420] sm:$0xff]
        %v612 = vld [vmem:[%s207 + $0x428] sm:$0xff]
        %v613 = vld [vmem:[%s207 + $0x430] sm:$0xff]
        %v614 = vld [vmem:[%s207 + $0x438] sm:$0xff]
        %v615 = vld [vmem:[%s207 + $0x440] sm:$0xff]
        %v616 = vld [vmem:[%s207 + $0x448] sm:$0xff]
        %v617 = vld [vmem:[%s207 + $0x450] sm:$0xff]
        %v618 = vld [vmem:[%s207 + $0x458] sm:$0xff]
        %v619 = vld [vmem:[%s207 + $0x460] sm:$0xff]
        %v620 = vld [vmem:[%s207 + $0x468] sm:$0xff]
        %v621 = vld [vmem:[%s207 + $0x470] sm:$0xff]
        %v622 = vld [vmem:[%s207 + $0x478] sm:$0xff]
        %v623 = vld [vmem:[%s207 + $0x480] sm:$0xff]
        %v624 = vld [vmem:[%s207 + $0x488] sm:$0xff]
        %v625 = vld [vmem:[%s207 + $0x490] sm:$0xff]
        %v626 = vld [vmem:[%s207 + $0x498] sm:$0xff]
        %v627 = vld [vmem:[%s207 + $0x4a0] sm:$0xff]
        %v628 = vld [vmem:[%s207 + $0x4a8] sm:$0xff]
        %v629 = vld [vmem:[%s207 + $0x4b0] sm:$0xff]
        %v630 = vld [vmem:[%s207 + $0x4b8] sm:$0xff]
        %v631 = vld [vmem:[%s207 + $0x4c0] sm:$0xff]
        %v632 = vld [vmem:[%s207 + $0x4c8] sm:$0xff]
        %v633 = vld [vmem:[%s207 + $0x4d0] sm:$0xff]
        %v634 = vld [vmem:[%s207 + $0x4d8] sm:$0xff]
        %v635 = vld [vmem:[%s207 + $0x4e0] sm:$0xff]
        %v636 = vld [vmem:[%s207 + $0x4e8] sm:$0xff]
        %v637 = vld [vmem:[%s207 + $0x4f0] sm:$0xff]
        %v638 = vld [vmem:[%s207 + $0x4f8] sm:$0xff]
        %v639 = vld [vmem:[%s207 + $0x500] sm:$0xff]
        %v640 = vld [vmem:[%s207 + $0x508] sm:$0xff]
        %v641 = vld [vmem:[%s207 + $0x510] sm:$0xff]
        %v642 = vld [vmem:[%s207 + $0x518] sm:$0xff]
        %v643 = vld [vmem:[%s207 + $0x520] sm:$0xff]
        %v644 = vld [vmem:[%s207 + $0x528] sm:$0xff]
        %v645 = vld [vmem:[%s207 + $0x530] sm:$0xff]
        %v646 = vld [vmem:[%s207 + $0x538] sm:$0xff]
        %v647 = vld [vmem:[%s207 + $0x540] sm:$0xff]
        %v648 = vld [vmem:[%s207 + $0x548] sm:$0xff]
        %v649 = vld [vmem:[%s207 + $0x550] sm:$0xff]
        %v650 = vld [vmem:[%s207 + $0x558] sm:$0xff]
        %v651 = vld [vmem:[%s207 + $0x560] sm:$0xff]
        %v652 = vld [vmem:[%s207 + $0x568] sm:$0xff]
        %v653 = vld [vmem:[%s207 + $0x570] sm:$0xff]
        %v654 = vld [vmem:[%s207 + $0x578] sm:$0xff]
        %v655 = vld [vmem:[%s207 + $0x580] sm:$0xff]
        %v656 = vld [vmem:[%s207 + $0x588] sm:$0xff]
        %v657 = vld [vmem:[%s207 + $0x590] sm:$0xff]
        %v658 = vld [vmem:[%s207 + $0x598] sm:$0xff]
        %v659 = vld [vmem:[%s207 + $0x5a0] sm:$0xff]
        %v660 = vld [vmem:[%s207 + $0x5a8] sm:$0xff]
        %v661 = vld [vmem:[%s207 + $0x5b0] sm:$0xff]
        %v662 = vld [vmem:[%s207 + $0x5b8] sm:$0xff]
        %v663 = vld [vmem:[%s207 + $0x5c0] sm:$0xff]
        %v664 = vld [vmem:[%s207 + $0x5c8] sm:$0xff]
        %v665 = vld [vmem:[%s207 + $0x5d0] sm:$0xff]
        %v666 = vld [vmem:[%s207 + $0x5d8] sm:$0xff]
        %v667 = vld [vmem:[%s207 + $0x5e0] sm:$0xff]
        %v668 = vld [vmem:[%s207 + $0x5e8] sm:$0xff]
        %v669 = vld [vmem:[%s207 + $0x5f0] sm:$0xff]
        %v670 = vld [vmem:[%s207 + $0x5f8] sm:$0xff]
        %v671 = vld [vmem:[%s207 + $0x600] sm:$0xff]
        %v672 = vld [vmem:[%s207 + $0x608] sm:$0xff]
        %v673 = vld [vmem:[%s207 + $0x610] sm:$0xff]
        %v674 = vld [vmem:[%s207 + $0x618] sm:$0xff]
        %v675 = vld [vmem:[%s207 + $0x620] sm:$0xff]
        %v676 = vld [vmem:[%s207 + $0x628] sm:$0xff]
        %v677 = vld [vmem:[%s207 + $0x630] sm:$0xff]
        %v678 = vld [vmem:[%s207 + $0x638] sm:$0xff]
        %v679 = vld [vmem:[%s207 + $0x640] sm:$0xff]
        %v680 = vld [vmem:[%s207 + $0x648] sm:$0xff]
        %v681 = vld [vmem:[%s207 + $0x650] sm:$0xff]
        %v682 = vld [vmem:[%s207 + $0x658] sm:$0xff]
        %v683 = vld [vmem:[%s207 + $0x660] sm:$0xff]
        %v684 = vld [vmem:[%s207 + $0x668] sm:$0xff]
        %v685 = vld [vmem:[%s207 + $0x670] sm:$0xff]
        %v686 = vld [vmem:[%s207 + $0x678] sm:$0xff]
        %v687 = vld [vmem:[%s207 + $0x680] sm:$0xff]
        %v688 = vld [vmem:[%s207 + $0x688] sm:$0xff]
        %v689 = vld [vmem:[%s207 + $0x690] sm:$0xff]
        %v690 = vld [vmem:[%s207 + $0x698] sm:$0xff]
        %v691 = vld [vmem:[%s207 + $0x6a0] sm:$0xff]
        %v692 = vld [vmem:[%s207 + $0x6a8] sm:$0xff]
        %v693 = vld [vmem:[%s207 + $0x6b0] sm:$0xff]
        %v694 = vld [vmem:[%s207 + $0x6b8] sm:$0xff]
        %v695 = vld [vmem:[%s207 + $0x6c0] sm:$0xff]
        %v696 = vld [vmem:[%s207 + $0x6c8] sm:$0xff]
        %v697 = vld [vmem:[%s207 + $0x6d0] sm:$0xff]
        %v698 = vld [vmem:[%s207 + $0x6d8] sm:$0xff]
        %v699 = vld [vmem:[%s207 + $0x6e0] sm:$0xff]
        %v700 = vld [vmem:[%s207 + $0x6e8] sm:$0xff]
        %v701 = vld [vmem:[%s207 + $0x6f0] sm:$0xff]
        %v702 = vld [vmem:[%s207 + $0x6f8] sm:$0xff]
        %v703 = vld [vmem:[%s207 + $0x700] sm:$0xff]
        %v704 = vld [vmem:[%s207 + $0x708] sm:$0xff]
        %v705 = vld [vmem:[%s207 + $0x710] sm:$0xff]
        %v706 = vld [vmem:[%s207 + $0x718] sm:$0xff]
        %v707 = vld [vmem:[%s207 + $0x720] sm:$0xff]
        %v708 = vld [vmem:[%s207 + $0x728] sm:$0xff]
        %v709 = vld [vmem:[%s207 + $0x730] sm:$0xff]
        %v710 = vld [vmem:[%s207 + $0x738] sm:$0xff]
        %v711 = vld [vmem:[%s207 + $0x740] sm:$0xff]
        %v712 = vld [vmem:[%s207 + $0x748] sm:$0xff]
        %v713 = vld [vmem:[%s207 + $0x750] sm:$0xff]
        %v714 = vld [vmem:[%s207 + $0x758] sm:$0xff]
        %v715 = vld [vmem:[%s207 + $0x760] sm:$0xff]
        %v716 = vld [vmem:[%s207 + $0x768] sm:$0xff]
        %v717 = vld [vmem:[%s207 + $0x770] sm:$0xff]
        %v718 = vld [vmem:[%s207 + $0x778] sm:$0xff]
        %v719 = vld [vmem:[%s207 + $0x780] sm:$0xff]
        %v720 = vld [vmem:[%s207 + $0x788] sm:$0xff]
        %v721 = vld [vmem:[%s207 + $0x790] sm:$0xff]
        %v722 = vld [vmem:[%s207 + $0x798] sm:$0xff]
        %v723 = vld [vmem:[%s207 + $0x7a0] sm:$0xff]
        %v724 = vld [vmem:[%s207 + $0x7a8] sm:$0xff]
        %v725 = vld [vmem:[%s207 + $0x7b0] sm:$0xff]
        %v726 = vld [vmem:[%s207 + $0x7b8] sm:$0xff]
        %v727 = vld [vmem:[%s207 + $0x7c0] sm:$0xff]
        %v728 = vld [vmem:[%s207 + $0x7c8] sm:$0xff]
        %v729 = vld [vmem:[%s207 + $0x7d0] sm:$0xff]
        %v730 = vld [vmem:[%s207 + $0x7d8] sm:$0xff]
        %v731 = vld [vmem:[%s207 + $0x7e0] sm:$0xff]
        %v732 = vld [vmem:[%s207 + $0x7e8] sm:$0xff]
        %v733 = vld [vmem:[%s207 + $0x7f0] sm:$0xff]
        %v734 = vld [vmem:[%s207 + $0x7f8] sm:$0xff]
        %v735 = vld [vmem:[%s207 + $0x800] sm:$0xff]
        %v736 = vld [vmem:[%s207 + $0x808] sm:$0xff]
        %v737 = vld [vmem:[%s207 + $0x810] sm:$0xff]
        %v738 = vld [vmem:[%s207 + $0x818] sm:$0xff]
        %v739 = vld [vmem:[%s207 + $0x820] sm:$0xff]
        %v740 = vld [vmem:[%s207 + $0x828] sm:$0xff]
        %v741 = vld [vmem:[%s207 + $0x830] sm:$0xff]
        %v742 = vld [vmem:[%s207 + $0x838] sm:$0xff]
        %v743 = vld [vmem:[%s207 + $0x840] sm:$0xff]
        %v744 = vld [vmem:[%s207 + $0x848] sm:$0xff]
        %v745 = vld [vmem:[%s207 + $0x850] sm:$0xff]
        %v746 = vld [vmem:[%s207 + $0x858] sm:$0xff]
        %v747 = vld [vmem:[%s207 + $0x860] sm:$0xff]
        %v748 = vld [vmem:[%s207 + $0x868] sm:$0xff]
        %v749 = vld [vmem:[%s207 + $0x870] sm:$0xff]
        %v750 = vld [vmem:[%s207 + $0x878] sm:$0xff]
        %v751 = vld [vmem:[%s207 + $0x880] sm:$0xff]
        %v752 = vld [vmem:[%s207 + $0x888] sm:$0xff]
        %v753 = vld [vmem:[%s207 + $0x890] sm:$0xff]
        %v754 = vld [vmem:[%s207 + $0x898] sm:$0xff]
        %v755 = vld [vmem:[%s207 + $0x8a0] sm:$0xff]
        %v756 = vld [vmem:[%s207 + $0x8a8] sm:$0xff]
        %v757 = vld [vmem:[%s207 + $0x8b0] sm:$0xff]
        %v758 = vld [vmem:[%s207 + $0x8b8] sm:$0xff]
        %v759 = vld [vmem:[%s207 + $0x8c0] sm:$0xff]
        %v760 = vld [vmem:[%s207 + $0x8c8] sm:$0xff]
        %v761 = vld [vmem:[%s207 + $0x8d0] sm:$0xff]
        %v762 = vld [vmem:[%s207 + $0x8d8] sm:$0xff]
        %v763 = vld [vmem:[%s207 + $0x8e0] sm:$0xff]
        %v764 = vld [vmem:[%s207 + $0x8e8] sm:$0xff]
        %v765 = vld [vmem:[%s207 + $0x8f0] sm:$0xff]
        %v766 = vld [vmem:[%s207 + $0x8f8] sm:$0xff]
        %767 = vmatprep.subr.mxu0 %v480
        %768 = vmatpush1.msra.mxu0 %v479
        %769 = vmatprep.subr.mxu0 %v483
        %770 = vmatpush1.msra.mxu0 %v482
        %771 = vmatprep.subr.mxu0 %v486
        %772 = vmatpush1.msra.mxu0 %v485
        %773 = vmatprep.subr.mxu0 %v489
        %774 = vmatpush1.msra.mxu0 %v488
        %775 = vmatprep.subr.mxu0 %v492
        %776 = vmatpush1.msra.mxu0 %v491
        %777 = vmatprep.subr.mxu0 %v495
        %778 = vmatpush1.msra.mxu0 %v494
        %779 = vmatprep.subr.mxu0 %v498
        %780 = vmatpush1.msra.mxu0 %v497
        %781 = vmatprep.subr.mxu0 %v501
        %782 = vmatpush1.msra.mxu0 %v500
        %783 = vmatprep.subr.mxu0 %v504
        %784 = vmatpush1.msra.mxu0 %v503
        %785 = vmatprep.subr.mxu0 %v507
        %786 = vmatpush1.msra.mxu0 %v506
        %787 = vmatprep.subr.mxu0 %v510
        %788 = vmatpush1.msra.mxu0 %v509
        %789 = vmatprep.subr.mxu0 %v513
        %790 = vmatpush1.msra.mxu0 %v512
        %791 = vmatprep.subr.mxu0 %v516
        %792 = vmatpush1.msra.mxu0 %v515
        %793 = vmatprep.subr.mxu0 %v519
        %794 = vmatpush1.msra.mxu0 %v518
        %795 = vmatprep.subr.mxu0 %v522
        %796 = vmatpush1.msra.mxu0 %v521
        %797 = vmatprep.subr.mxu0 %v525
        %798 = vmatpush1.msra.mxu0 %v524
        %799 = vmatprep.subr.mxu0 %v528
        %800 = vmatpush1.msra.mxu0 %v527
        %801 = vmatprep.subr.mxu0 %v531
        %802 = vmatpush1.msra.mxu0 %v530
        %803 = vmatprep.subr.mxu0 %v534
        %804 = vmatpush1.msra.mxu0 %v533
        %805 = vmatprep.subr.mxu0 %v537
        %806 = vmatpush1.msra.mxu0 %v536
        %807 = vmatprep.subr.mxu0 %v540
        %808 = vmatpush1.msra.mxu0 %v539
        %809 = vmatprep.subr.mxu0 %v543
        %810 = vmatpush1.msra.mxu0 %v542
        %811 = vmatprep.subr.mxu0 %v546
        %812 = vmatpush1.msra.mxu0 %v545
        %813 = vmatprep.subr.mxu0 %v549
        %814 = vmatpush1.msra.mxu0 %v548
        %815 = vmatprep.subr.mxu0 %v552
        %816 = vmatpush1.msra.mxu0 %v551
        %817 = vmatprep.subr.mxu0 %v555
        %818 = vmatpush1.msra.mxu0 %v554
        %819 = vmatprep.subr.mxu0 %v558
        %820 = vmatpush1.msra.mxu0 %v557
        %821 = vmatprep.subr.mxu0 %v561
        %822 = vmatpush1.msra.mxu0 %v560
        %823 = vmatprep.subr.mxu0 %v564
        %824 = vmatpush1.msra.mxu0 %v563
        %825 = vmatprep.subr.mxu0 %v567
        %826 = vmatpush1.msra.mxu0 %v566
        %827 = vmatprep.subr.mxu0 %v570
        %828 = vmatpush1.msra.mxu0 %v569
        %829 = vmatprep.subr.mxu0 %v573
        %830 = vmatpush1.msra.mxu0 %v572
        %831 = vmatprep.mubr.f32.mxu0 %v240
        %832 = vmatmul.mubr.f32.gmra.mrb[0].mxu0 %v239
        %v833 = vpop.f32.mrb[0].mxu0
        %v834 = vadd.f32 0.0, %v833
        %v835 = vpop.f32.mrb[0].mxu0
        %v836 = vadd.f32 0.0, %v835
        %837 = vmatprep.mubr.f32.mxu0 %v246
        %838 = vmatmul.mubr.f32.gmra.mrb[0].mxu0 %v245
        %v839 = vpop.f32.mrb[0].mxu0
        %v840 = vadd.f32 0.0, %v839
        %v841 = vpop.f32.mrb[0].mxu0
        %v842 = vadd.f32 0.0, %v841
        %843 = vmatprep.mubr.f32.mxu0 %v252
        %844 = vmatmul.mubr.f32.gmra.mrb[0].mxu0 %v251
        %v845 = vpop.f32.mrb[0].mxu0
        %v846 = vadd.f32 0.0, %v845
        %v847 = vpop.f32.mrb[0].mxu0
        %v848 = vadd.f32 0.0, %v847
        %849 = vmatprep.mubr.f32.mxu0 %v258
        %850 = vmatmul.mubr.f32.gmra.mrb[0].mxu0 %v257
        %v851 = vpop.f32.mrb[0].mxu0
        %v852 = vadd.f32 0.0, %v851
        %v853 = vpop.f32.mrb[0].mxu0
        %v854 = vadd.f32 0.0, %v853
        %855 = vmatprep.mubr.f32.mxu0 %v264
        %856 = vmatmul.mubr.f32.gmra.mrb[0].mxu0 %v263
        %v857 = vpop.f32.mrb[0].mxu0
        %v858 = vadd.f32 0.0, %v857
        %v859 = vpop.f32.mrb[0].mxu0
        %v860 = vadd.f32 0.0, %v859
        %861 = vmatprep.mubr.f32.mxu0 %v270
        %862 = vmatmul.mubr.f32.gmra.mrb[0].mxu0 %v269
        %v863 = vpop.f32.mrb[0].mxu0
        %v864 = vadd.f32 0.0, %v863
        %v865 = vpop.f32.mrb[0].mxu0
        %v866 = vadd.f32 0.0, %v865
        %867 = vmatprep.mubr.f32.mxu0 %v276
        %868 = vmatmul.mubr.f32.gmra.mrb[0].mxu0 %v275
        %v869 = vpop.f32.mrb[0].mxu0
        %v870 = vadd.f32 0.0, %v869
        %v871 = vpop.f32.mrb[0].mxu0
        %v872 = vadd.f32 0.0, %v871
        %873 = vmatprep.mubr.f32.mxu0 %v282
        %874 = vmatmul.mubr.f32.gmra.mrb[0].mxu0 %v281
        %v875 = vpop.f32.mrb[0].mxu0
        %v876 = vadd.f32 0.0, %v875
        %v877 = vpop.f32.mrb[0].mxu0
        %v878 = vadd.f32 0.0, %v877
        %879 = vmatprep.mubr.f32.mxu0 %v288
        %880 = vmatmul.mubr.f32.gmra.mrb[0].mxu0 %v287
        %v881 = vpop.f32.mrb[0].mxu0
        %v882 = vadd.f32 0.0, %v881
        %v883 = vpop.f32.mrb[0].mxu0
        %v884 = vadd.f32 0.0, %v883
        %885 = vmatprep.mubr.f32.mxu0 %v294
        %886 = vmatmul.mubr.f32.gmra.mrb[0].mxu0 %v293
        %v887 = vpop.f32.mrb[0].mxu0
        %v888 = vadd.f32 0.0, %v887
        %v889 = vpop.f32.mrb[0].mxu0
        %v890 = vadd.f32 0.0, %v889
        %891 = vmatprep.mubr.f32.mxu0 %v300
        %892 = vmatmul.mubr.f32.gmra.mrb[0].mxu0 %v299
        %v893 = vpop.f32.mrb[0].mxu0
        %v894 = vadd.f32 0.0, %v893
        %v895 = vpop.f32.mrb[0].mxu0
        %v896 = vadd.f32 0.0, %v895
        %897 = vmatprep.mubr.f32.mxu0 %v306
        %898 = vmatmul.mubr.f32.gmra.mrb[0].mxu0 %v305
        %v899 = vpop.f32.mrb[0].mxu0
        %v900 = vadd.f32 0.0, %v899
        %v901 = vpop.f32.mrb[0].mxu0
        %v902 = vadd.f32 0.0, %v901
        %903 = vmatprep.mubr.f32.mxu0 %v312
        %904 = vmatmul.mubr.f32.gmra.mrb[0].mxu0 %v311
        %v905 = vpop.f32.mrb[0].mxu0
        %v906 = vadd.f32 0.0, %v905
        %v907 = vpop.f32.mrb[0].mxu0
        %v908 = vadd.f32 0.0, %v907
        %909 = vmatprep.mubr.f32.mxu0 %v318
        %910 = vmatmul.mubr.f32.gmra.mrb[0].mxu0 %v317
        %v911 = vpop.f32.mrb[0].mxu0
        %v912 = vadd.f32 0.0, %v911
        %v913 = vpop.f32.mrb[0].mxu0
        %v914 = vadd.f32 0.0, %v913
        %915 = vmatprep.mubr.f32.mxu0 %v324
        %916 = vmatmul.mubr.f32.gmra.mrb[0].mxu0 %v323
        %v917 = vpop.f32.mrb[0].mxu0
        %v918 = vadd.f32 0.0, %v917
        %v919 = vpop.f32.mrb[0].mxu0
        %v920 = vadd.f32 0.0, %v919
        %921 = vmatprep.mubr.f32.mxu0 %v330
        %922 = vmatmul.mubr.f32.gmra.mrb[0].mxu0 %v329
        %v923 = vpop.f32.mrb[0].mxu0
        %v924 = vadd.f32 0.0, %v923
        %v925 = vpop.f32.mrb[0].mxu0
        %v926 = vadd.f32 0.0, %v925
        %927 = vmatprep.mubr.f32.mxu0 %v336
        %928 = vmatmul.mubr.f32.gmra.mrb[0].mxu0 %v335
        %v929 = vpop.f32.mrb[0].mxu0
        %v930 = vadd.f32 0.0, %v929
        %v931 = vpop.f32.mrb[0].mxu0
        %v932 = vadd.f32 0.0, %v931
        %933 = vmatprep.mubr.f32.mxu0 %v342
        %934 = vmatmul.mubr.f32.gmra.mrb[0].mxu0 %v341
        %v935 = vpop.f32.mrb[0].mxu0
        %v936 = vadd.f32 0.0, %v935
        %v937 = vpop.f32.mrb[0].mxu0
        %v938 = vadd.f32 0.0, %v937
        %939 = vmatprep.mubr.f32.mxu0 %v348
        %940 = vmatmul.mubr.f32.gmra.mrb[0].mxu0 %v347
        %v941 = vpop.f32.mrb[0].mxu0
        %v942 = vadd.f32 0.0, %v941
        %v943 = vpop.f32.mrb[0].mxu0
        %v944 = vadd.f32 0.0, %v943
        %945 = vmatprep.mubr.f32.mxu0 %v354
        %946 = vmatmul.mubr.f32.gmra.mrb[0].mxu0 %v353
        %v947 = vpop.f32.mrb[0].mxu0
        %v948 = vadd.f32 0.0, %v947
        %v949 = vpop.f32.mrb[0].mxu0
        %v950 = vadd.f32 0.0, %v949
        %951 = vmatprep.mubr.f32.mxu0 %v360
        %952 = vmatmul.mubr.f32.gmra.mrb[0].mxu0 %v359
        %v953 = vpop.f32.mrb[0].mxu0
        %v954 = vadd.f32 0.0, %v953
        %v955 = vpop.f32.mrb[0].mxu0
        %v956 = vadd.f32 0.0, %v955
        %957 = vmatprep.mubr.f32.mxu0 %v366
        %958 = vmatmul.mubr.f32.gmra.mrb[0].mxu0 %v365
        %v959 = vpop.f32.mrb[0].mxu0
        %v960 = vadd.f32 0.0, %v959
        %v961 = vpop.f32.mrb[0].mxu0
        %v962 = vadd.f32 0.0, %v961
        %963 = vmatprep.mubr.f32.mxu0 %v372
        %964 = vmatmul.mubr.f32.gmra.mrb[0].mxu0 %v371
        %v965 = vpop.f32.mrb[0].mxu0
        %v966 = vadd.f32 0.0, %v965
        %v967 = vpop.f32.mrb[0].mxu0
        %v968 = vadd.f32 0.0, %v967
        %969 = vmatprep.mubr.f32.mxu0 %v378
        %970 = vmatmul.mubr.f32.gmra.mrb[0].mxu0 %v377
        %v971 = vpop.f32.mrb[0].mxu0
        %v972 = vadd.f32 0.0, %v971
        %v973 = vpop.f32.mrb[0].mxu0
        %v974 = vadd.f32 0.0, %v973
        %975 = vmatprep.mubr.f32.mxu0 %v384
        %976 = vmatmul.mubr.f32.gmra.mrb[0].mxu0 %v383
        %v977 = vpop.f32.mrb[0].mxu0
        %v978 = vadd.f32 0.0, %v977
        %v979 = vpop.f32.mrb[0].mxu0
        %v980 = vadd.f32 0.0, %v979
        %981 = vmatprep.mubr.f32.mxu0 %v390
        %982 = vmatmul.mubr.f32.gmra.mrb[0].mxu0 %v389
        %v983 = vpop.f32.mrb[0].mxu0
        %v984 = vadd.f32 0.0, %v983
        %v985 = vpop.f32.mrb[0].mxu0
        %v986 = vadd.f32 0.0, %v985
        %987 = vmatprep.mubr.f32.mxu0 %v396
        %988 = vmatmul.mubr.f32.gmra.mrb[0].mxu0 %v395
        %v989 = vpop.f32.mrb[0].mxu0
        %v990 = vadd.f32 0.0, %v989
        %v991 = vpop.f32.mrb[0].mxu0
        %v992 = vadd.f32 0.0, %v991
        %993 = vmatprep.mubr.f32.mxu0 %v402
        %994 = vmatmul.mubr.f32.gmra.mrb[0].mxu0 %v401
        %v995 = vpop.f32.mrb[0].mxu0
        %v996 = vadd.f32 0.0, %v995
        %v997 = vpop.f32.mrb[0].mxu0
        %v998 = vadd.f32 0.0, %v997
        %999 = vmatprep.mubr.f32.mxu0 %v408
        %1000 = vmatmul.mubr.f32.gmra.mrb[0].mxu0 %v407
        %v1001 = vpop.f32.mrb[0].mxu0
        %v1002 = vadd.f32 0.0, %v1001
        %v1003 = vpop.f32.mrb[0].mxu0
        %v1004 = vadd.f32 0.0, %v1003
        %1005 = vmatprep.mubr.f32.mxu0 %v414
        %1006 = vmatmul.mubr.f32.gmra.mrb[0].mxu0 %v413
        %v1007 = vpop.f32.mrb[0].mxu0
        %v1008 = vadd.f32 0.0, %v1007
        %v1009 = vpop.f32.mrb[0].mxu0
        %v1010 = vadd.f32 0.0, %v1009
        %1011 = vmatprep.mubr.f32.mxu0 %v420
        %1012 = vmatmul.mubr.f32.gmra.mrb[0].mxu0 %v419
        %v1013 = vpop.f32.mrb[0].mxu0
        %v1014 = vadd.f32 0.0, %v1013
        %v1015 = vpop.f32.mrb[0].mxu0
        %v1016 = vadd.f32 0.0, %v1015
        %1017 = vmatprep.mubr.f32.mxu0 %v426
        %1018 = vmatmul.mubr.f32.gmra.mrb[0].mxu0 %v425
        %v1019 = vpop.f32.mrb[0].mxu0
        %v1020 = vadd.f32 0.0, %v1019
        %v1021 = vpop.f32.mrb[0].mxu0
        %v1022 = vadd.f32 0.0, %v1021
        %1023 = vmatprep.mubr.f32.mxu0 %v432
        %1024 = vmatmul.mubr.f32.gmra.mrb[0].mxu0 %v431
        %v1025 = vpop.f32.mrb[0].mxu0
        %v1026 = vadd.f32 0.0, %v1025
        %v1027 = vpop.f32.mrb[0].mxu0
        %v1028 = vadd.f32 0.0, %v1027
        %1029 = vmatprep.mubr.f32.mxu0 %v438
        %1030 = vmatmul.mubr.f32.gmra.mrb[0].mxu0 %v437
        %v1031 = vpop.f32.mrb[0].mxu0
        %v1032 = vadd.f32 0.0, %v1031
        %v1033 = vpop.f32.mrb[0].mxu0
        %v1034 = vadd.f32 0.0, %v1033
        %1035 = vmatprep.mubr.f32.mxu0 %v444
        %1036 = vmatmul.mubr.f32.gmra.mrb[0].mxu0 %v443
        %v1037 = vpop.f32.mrb[0].mxu0
        %v1038 = vadd.f32 0.0, %v1037
        %v1039 = vpop.f32.mrb[0].mxu0
        %v1040 = vadd.f32 0.0, %v1039
        %1041 = vmatprep.mubr.f32.mxu0 %v450
        %1042 = vmatmul.mubr.f32.gmra.mrb[0].mxu0 %v449
        %v1043 = vpop.f32.mrb[0].mxu0
        %v1044 = vadd.f32 0.0, %v1043
        %v1045 = vpop.f32.mrb[0].mxu0
        %v1046 = vadd.f32 0.0, %v1045
        %1047 = vmatprep.mubr.f32.mxu0 %v456
        %1048 = vmatmul.mubr.f32.gmra.mrb[0].mxu0 %v455
        %v1049 = vpop.f32.mrb[0].mxu0
        %v1050 = vadd.f32 0.0, %v1049
        %v1051 = vpop.f32.mrb[0].mxu0
        %v1052 = vadd.f32 0.0, %v1051
        %1053 = vmatprep.mubr.f32.mxu0 %v462
        %1054 = vmatmul.mubr.f32.gmra.mrb[0].mxu0 %v461
        %v1055 = vpop.f32.mrb[0].mxu0
        %v1056 = vadd.f32 0.0, %v1055
        %v1057 = vpop.f32.mrb[0].mxu0
        %v1058 = vadd.f32 0.0, %v1057
        %1059 = vmatprep.mubr.f32.mxu0 %v468
        %1060 = vmatmul.mubr.f32.gmra.mrb[0].mxu0 %v467
        %v1061 = vpop.f32.mrb[0].mxu0
        %v1062 = vadd.f32 0.0, %v1061
        %v1063 = vpop.f32.mrb[0].mxu0
        %v1064 = vadd.f32 0.0, %v1063
        %1065 = vmatprep.mubr.f32.mxu0 %v474
        %1066 = vmatmul.mubr.f32.gmra.mrb[0].mxu0 %v473
        %v1067 = vpop.f32.mrb[0].mxu0
        %v1068 = vadd.f32 0.0, %v1067
        %v1069 = vpop.f32.mrb[0].mxu0
        %v1070 = vadd.f32 0.0, %v1069
        %1071 = vdwg.mxu0
        %1072 = vmatprep.subr.mxu0 %v576
        %1073 = vmatpush1.msra.mxu0 %v575
        %1074 = vmatprep.subr.mxu0 %v579
        %1075 = vmatpush1.msra.mxu0 %v578
        %1076 = vmatprep.subr.mxu0 %v582
        %1077 = vmatpush1.msra.mxu0 %v581
        %1078 = vmatprep.subr.mxu0 %v585
        %1079 = vmatpush1.msra.mxu0 %v584
        %1080 = vmatprep.subr.mxu0 %v588
        %1081 = vmatpush1.msra.mxu0 %v587
        %1082 = vmatprep.subr.mxu0 %v591
        %1083 = vmatpush1.msra.mxu0 %v590
        %1084 = vmatprep.subr.mxu0 %v594
        %1085 = vmatpush1.msra.mxu0 %v593
        %1086 = vmatprep.subr.mxu0 %v597
        %1087 = vmatpush1.msra.mxu0 %v596
        %1088 = vmatprep.subr.mxu0 %v600
        %1089 = vmatpush1.msra.mxu0 %v599
        %1090 = vmatprep.subr.mxu0 %v603
        %1091 = vmatpush1.msra.mxu0 %v602
        %1092 = vmatprep.subr.mxu0 %v606
        %1093 = vmatpush1.msra.mxu0 %v605
        %1094 = vmatprep.subr.mxu0 %v609
        %1095 = vmatpush1.msra.mxu0 %v608
        %1096 = vmatprep.subr.mxu0 %v612
        %1097 = vmatpush1.msra.mxu0 %v611
        %1098 = vmatprep.subr.mxu0 %v615
        %1099 = vmatpush1.msra.mxu0 %v614
        %1100 = vmatprep.subr.mxu0 %v618
        %1101 = vmatpush1.msra.mxu0 %v617
        %1102 = vmatprep.subr.mxu0 %v621
        %1103 = vmatpush1.msra.mxu0 %v620
        %1104 = vmatprep.subr.mxu0 %v624
        %1105 = vmatpush1.msra.mxu0 %v623
        %1106 = vmatprep.subr.mxu0 %v627
        %1107 = vmatpush1.msra.mxu0 %v626
        %1108 = vmatprep.subr.mxu0 %v630
        %1109 = vmatpush1.msra.mxu0 %v629
        %1110 = vmatprep.subr.mxu0 %v633
        %1111 = vmatpush1.msra.mxu0 %v632
        %1112 = vmatprep.subr.mxu0 %v636
        %1113 = vmatpush1.msra.mxu0 %v635
        %1114 = vmatprep.subr.mxu0 %v639
        %1115 = vmatpush1.msra.mxu0 %v638
        %1116 = vmatprep.subr.mxu0 %v642
        %1117 = vmatpush1.msra.mxu0 %v641
        %1118 = vmatprep.subr.mxu0 %v645
        %1119 = vmatpush1.msra.mxu0 %v644
        %1120 = vmatprep.subr.mxu0 %v648
        %1121 = vmatpush1.msra.mxu0 %v647
        %1122 = vmatprep.subr.mxu0 %v651
        %1123 = vmatpush1.msra.mxu0 %v650
        %1124 = vmatprep.subr.mxu0 %v654
        %1125 = vmatpush1.msra.mxu0 %v653
        %1126 = vmatprep.subr.mxu0 %v657
        %1127 = vmatpush1.msra.mxu0 %v656
        %1128 = vmatprep.subr.mxu0 %v660
        %1129 = vmatpush1.msra.mxu0 %v659
        %1130 = vmatprep.subr.mxu0 %v663
        %1131 = vmatpush1.msra.mxu0 %v662
        %1132 = vmatprep.subr.mxu0 %v666
        %1133 = vmatpush1.msra.mxu0 %v665
        %1134 = vmatprep.subr.mxu0 %v669
        %1135 = vmatpush1.msra.mxu0 %v668
        %1136 = vmatprep.mubr.f32.mxu0 %v242
        %1137 = vmatmul.mubr.f32.gmra.mrb[0].mxu0 %v241
        %v1138 = vpop.f32.mrb[0].mxu0
        %v1139 = vadd.f32 %v834, %v1138
        %v1140 = vpop.f32.mrb[0].mxu0
        %v1141 = vadd.f32 %v836, %v1140
        %1142 = vmatprep.mubr.f32.mxu0 %v248
        %1143 = vmatmul.mubr.f32.gmra.mrb[0].mxu0 %v247
        %v1144 = vpop.f32.mrb[0].mxu0
        %v1145 = vadd.f32 %v840, %v1144
        %v1146 = vpop.f32.mrb[0].mxu0
        %v1147 = vadd.f32 %v842, %v1146
        %1148 = vmatprep.mubr.f32.mxu0 %v254
        %1149 = vmatmul.mubr.f32.gmra.mrb[0].mxu0 %v253
        %v1150 = vpop.f32.mrb[0].mxu0
        %v1151 = vadd.f32 %v846, %v1150
        %v1152 = vpop.f32.mrb[0].mxu0
        %v1153 = vadd.f32 %v848, %v1152
        %1154 = vmatprep.mubr.f32.mxu0 %v260
        %1155 = vmatmul.mubr.f32.gmra.mrb[0].mxu0 %v259
        %v1156 = vpop.f32.mrb[0].mxu0
        %v1157 = vadd.f32 %v852, %v1156
        %v1158 = vpop.f32.mrb[0].mxu0
        %v1159 = vadd.f32 %v854, %v1158
        %1160 = vmatprep.mubr.f32.mxu0 %v266
        %1161 = vmatmul.mubr.f32.gmra.mrb[0].mxu0 %v265
        %v1162 = vpop.f32.mrb[0].mxu0
        %v1163 = vadd.f32 %v858, %v1162
        %v1164 = vpop.f32.mrb[0].mxu0
        %v1165 = vadd.f32 %v860, %v1164
        %1166 = vmatprep.mubr.f32.mxu0 %v272
        %1167 = vmatmul.mubr.f32.gmra.mrb[0].mxu0 %v271
        %v1168 = vpop.f32.mrb[0].mxu0
        %v1169 = vadd.f32 %v864, %v1168
        %v1170 = vpop.f32.mrb[0].mxu0
        %v1171 = vadd.f32 %v866, %v1170
        %1172 = vmatprep.mubr.f32.mxu0 %v278
        %1173 = vmatmul.mubr.f32.gmra.mrb[0].mxu0 %v277
        %v1174 = vpop.f32.mrb[0].mxu0
        %v1175 = vadd.f32 %v870, %v1174
        %v1176 = vpop.f32.mrb[0].mxu0
        %v1177 = vadd.f32 %v872, %v1176
        %1178 = vmatprep.mubr.f32.mxu0 %v284
        %1179 = vmatmul.mubr.f32.gmra.mrb[0].mxu0 %v283
        %v1180 = vpop.f32.mrb[0].mxu0
        %v1181 = vadd.f32 %v876, %v1180
        %v1182 = vpop.f32.mrb[0].mxu0
        %v1183 = vadd.f32 %v878, %v1182
        %1184 = vmatprep.mubr.f32.mxu0 %v290
        %1185 = vmatmul.mubr.f32.gmra.mrb[0].mxu0 %v289
        %v1186 = vpop.f32.mrb[0].mxu0
        %v1187 = vadd.f32 %v882, %v1186
        %v1188 = vpop.f32.mrb[0].mxu0
        %v1189 = vadd.f32 %v884, %v1188
        %1190 = vmatprep.mubr.f32.mxu0 %v296
        %1191 = vmatmul.mubr.f32.gmra.mrb[0].mxu0 %v295
        %v1192 = vpop.f32.mrb[0].mxu0
        %v1193 = vadd.f32 %v888, %v1192
        %v1194 = vpop.f32.mrb[0].mxu0
        %v1195 = vadd.f32 %v890, %v1194
        %1196 = vmatprep.mubr.f32.mxu0 %v302
        %1197 = vmatmul.mubr.f32.gmra.mrb[0].mxu0 %v301
        %v1198 = vpop.f32.mrb[0].mxu0
        %v1199 = vadd.f32 %v894, %v1198
        %v1200 = vpop.f32.mrb[0].mxu0
        %v1201 = vadd.f32 %v896, %v1200
        %1202 = vmatprep.mubr.f32.mxu0 %v308
        %1203 = vmatmul.mubr.f32.gmra.mrb[0].mxu0 %v307
        %v1204 = vpop.f32.mrb[0].mxu0
        %v1205 = vadd.f32 %v900, %v1204
        %v1206 = vpop.f32.mrb[0].mxu0
        %v1207 = vadd.f32 %v902, %v1206
        %1208 = vmatprep.mubr.f32.mxu0 %v314
        %1209 = vmatmul.mubr.f32.gmra.mrb[0].mxu0 %v313
        %v1210 = vpop.f32.mrb[0].mxu0
        %v1211 = vadd.f32 %v906, %v1210
        %v1212 = vpop.f32.mrb[0].mxu0
        %v1213 = vadd.f32 %v908, %v1212
        %1214 = vmatprep.mubr.f32.mxu0 %v320
        %1215 = vmatmul.mubr.f32.gmra.mrb[0].mxu0 %v319
        %v1216 = vpop.f32.mrb[0].mxu0
        %v1217 = vadd.f32 %v912, %v1216
        %v1218 = vpop.f32.mrb[0].mxu0
        %v1219 = vadd.f32 %v914, %v1218
        %1220 = vmatprep.mubr.f32.mxu0 %v326
        %1221 = vmatmul.mubr.f32.gmra.mrb[0].mxu0 %v325
        %v1222 = vpop.f32.mrb[0].mxu0
        %v1223 = vadd.f32 %v918, %v1222
        %v1224 = vpop.f32.mrb[0].mxu0
        %v1225 = vadd.f32 %v920, %v1224
        %1226 = vmatprep.mubr.f32.mxu0 %v332
        %1227 = vmatmul.mubr.f32.gmra.mrb[0].mxu0 %v331
        %v1228 = vpop.f32.mrb[0].mxu0
        %v1229 = vadd.f32 %v924, %v1228
        %v1230 = vpop.f32.mrb[0].mxu0
        %v1231 = vadd.f32 %v926, %v1230
        %1232 = vmatprep.mubr.f32.mxu0 %v338
        %1233 = vmatmul.mubr.f32.gmra.mrb[0].mxu0 %v337
        %v1234 = vpop.f32.mrb[0].mxu0
        %v1235 = vadd.f32 %v930, %v1234
        %v1236 = vpop.f32.mrb[0].mxu0
        %v1237 = vadd.f32 %v932, %v1236
        %1238 = vmatprep.mubr.f32.mxu0 %v344
        %1239 = vmatmul.mubr.f32.gmra.mrb[0].mxu0 %v343
        %v1240 = vpop.f32.mrb[0].mxu0
        %v1241 = vadd.f32 %v936, %v1240
        %v1242 = vpop.f32.mrb[0].mxu0
        %v1243 = vadd.f32 %v938, %v1242
        %1244 = vmatprep.mubr.f32.mxu0 %v350
        %1245 = vmatmul.mubr.f32.gmra.mrb[0].mxu0 %v349
        %v1246 = vpop.f32.mrb[0].mxu0
        %v1247 = vadd.f32 %v942, %v1246
        %v1248 = vpop.f32.mrb[0].mxu0
        %v1249 = vadd.f32 %v944, %v1248
        %1250 = vmatprep.mubr.f32.mxu0 %v356
        %1251 = vmatmul.mubr.f32.gmra.mrb[0].mxu0 %v355
        %v1252 = vpop.f32.mrb[0].mxu0
        %v1253 = vadd.f32 %v948, %v1252
        %v1254 = vpop.f32.mrb[0].mxu0
        %v1255 = vadd.f32 %v950, %v1254
        %1256 = vmatprep.mubr.f32.mxu0 %v362
        %1257 = vmatmul.mubr.f32.gmra.mrb[0].mxu0 %v361
        %v1258 = vpop.f32.mrb[0].mxu0
        %v1259 = vadd.f32 %v954, %v1258
        %v1260 = vpop.f32.mrb[0].mxu0
        %v1261 = vadd.f32 %v956, %v1260
        %1262 = vmatprep.mubr.f32.mxu0 %v368
        %1263 = vmatmul.mubr.f32.gmra.mrb[0].mxu0 %v367
        %v1264 = vpop.f32.mrb[0].mxu0
        %v1265 = vadd.f32 %v960, %v1264
        %v1266 = vpop.f32.mrb[0].mxu0
        %v1267 = vadd.f32 %v962, %v1266
        %1268 = vmatprep.mubr.f32.mxu0 %v374
        %1269 = vmatmul.mubr.f32.gmra.mrb[0].mxu0 %v373
        %v1270 = vpop.f32.mrb[0].mxu0
        %v1271 = vadd.f32 %v966, %v1270
        %v1272 = vpop.f32.mrb[0].mxu0
        %v1273 = vadd.f32 %v968, %v1272
        %1274 = vmatprep.mubr.f32.mxu0 %v380
        %1275 = vmatmul.mubr.f32.gmra.mrb[0].mxu0 %v379
        %v1276 = vpop.f32.mrb[0].mxu0
        %v1277 = vadd.f32 %v972, %v1276
        %v1278 = vpop.f32.mrb[0].mxu0
        %v1279 = vadd.f32 %v974, %v1278
        %1280 = vmatprep.mubr.f32.mxu0 %v386
        %1281 = vmatmul.mubr.f32.gmra.mrb[0].mxu0 %v385
        %v1282 = vpop.f32.mrb[0].mxu0
        %v1283 = vadd.f32 %v978, %v1282
        %v1284 = vpop.f32.mrb[0].mxu0
        %v1285 = vadd.f32 %v980, %v1284
        %1286 = vmatprep.mubr.f32.mxu0 %v392
        %1287 = vmatmul.mubr.f32.gmra.mrb[0].mxu0 %v391
        %v1288 = vpop.f32.mrb[0].mxu0
        %v1289 = vadd.f32 %v984, %v1288
        %v1290 = vpop.f32.mrb[0].mxu0
        %v1291 = vadd.f32 %v986, %v1290
        %1292 = vmatprep.mubr.f32.mxu0 %v398
        %1293 = vmatmul.mubr.f32.gmra.mrb[0].mxu0 %v397
        %v1294 = vpop.f32.mrb[0].mxu0
        %v1295 = vadd.f32 %v990, %v1294
        %v1296 = vpop.f32.mrb[0].mxu0
        %v1297 = vadd.f32 %v992, %v1296
        %1298 = vmatprep.mubr.f32.mxu0 %v404
        %1299 = vmatmul.mubr.f32.gmra.mrb[0].mxu0 %v403
        %v1300 = vpop.f32.mrb[0].mxu0
        %v1301 = vadd.f32 %v996, %v1300
        %v1302 = vpop.f32.mrb[0].mxu0
        %v1303 = vadd.f32 %v998, %v1302
        %1304 = vmatprep.mubr.f32.mxu0 %v410
        %1305 = vmatmul.mubr.f32.gmra.mrb[0].mxu0 %v409
        %v1306 = vpop.f32.mrb[0].mxu0
        %v1307 = vadd.f32 %v1002, %v1306
        %v1308 = vpop.f32.mrb[0].mxu0
        %v1309 = vadd.f32 %v1004, %v1308
        %1310 = vmatprep.mubr.f32.mxu0 %v416
        %1311 = vmatmul.mubr.f32.gmra.mrb[0].mxu0 %v415
        %v1312 = vpop.f32.mrb[0].mxu0
        %v1313 = vadd.f32 %v1008, %v1312
        %v1314 = vpop.f32.mrb[0].mxu0
        %v1315 = vadd.f32 %v1010, %v1314
        %1316 = vmatprep.mubr.f32.mxu0 %v422
        %1317 = vmatmul.mubr.f32.gmra.mrb[0].mxu0 %v421
        %v1318 = vpop.f32.mrb[0].mxu0
        %v1319 = vadd.f32 %v1014, %v1318
        %v1320 = vpop.f32.mrb[0].mxu0
        %v1321 = vadd.f32 %v1016, %v1320
        %1322 = vmatprep.mubr.f32.mxu0 %v428
        %1323 = vmatmul.mubr.f32.gmra.mrb[0].mxu0 %v427
        %v1324 = vpop.f32.mrb[0].mxu0
        %v1325 = vadd.f32 %v1020, %v1324
        %v1326 = vpop.f32.mrb[0].mxu0
        %v1327 = vadd.f32 %v1022, %v1326
        %1328 = vmatprep.mubr.f32.mxu0 %v434
        %1329 = vmatmul.mubr.f32.gmra.mrb[0].mxu0 %v433
        %v1330 = vpop.f32.mrb[0].mxu0
        %v1331 = vadd.f32 %v1026, %v1330
        %v1332 = vpop.f32.mrb[0].mxu0
        %v1333 = vadd.f32 %v1028, %v1332
        %1334 = vmatprep.mubr.f32.mxu0 %v440
        %1335 = vmatmul.mubr.f32.gmra.mrb[0].mxu0 %v439
        %v1336 = vpop.f32.mrb[0].mxu0
        %v1337 = vadd.f32 %v1032, %v1336
        %v1338 = vpop.f32.mrb[0].mxu0
        %v1339 = vadd.f32 %v1034, %v1338
        %1340 = vmatprep.mubr.f32.mxu0 %v446
        %1341 = vmatmul.mubr.f32.gmra.mrb[0].mxu0 %v445
        %v1342 = vpop.f32.mrb[0].mxu0
        %v1343 = vadd.f32 %v1038, %v1342
        %v1344 = vpop.f32.mrb[0].mxu0
        %v1345 = vadd.f32 %v1040, %v1344
        %1346 = vmatprep.mubr.f32.mxu0 %v452
        %1347 = vmatmul.mubr.f32.gmra.mrb[0].mxu0 %v451
        %v1348 = vpop.f32.mrb[0].mxu0
        %v1349 = vadd.f32 %v1044, %v1348
        %v1350 = vpop.f32.mrb[0].mxu0
        %v1351 = vadd.f32 %v1046, %v1350
        %1352 = vmatprep.mubr.f32.mxu0 %v458
        %1353 = vmatmul.mubr.f32.gmra.mrb[0].mxu0 %v457
        %v1354 = vpop.f32.mrb[0].mxu0
        %v1355 = vadd.f32 %v1050, %v1354
        %v1356 = vpop.f32.mrb[0].mxu0
        %v1357 = vadd.f32 %v1052, %v1356
        %1358 = vmatprep.mubr.f32.mxu0 %v464
        %1359 = vmatmul.mubr.f32.gmra.mrb[0].mxu0 %v463
        %v1360 = vpop.f32.mrb[0].mxu0
        %v1361 = vadd.f32 %v1056, %v1360
        %v1362 = vpop.f32.mrb[0].mxu0
        %v1363 = vadd.f32 %v1058, %v1362
        %1364 = vmatprep.mubr.f32.mxu0 %v470
        %1365 = vmatmul.mubr.f32.gmra.mrb[0].mxu0 %v469
        %v1366 = vpop.f32.mrb[0].mxu0
        %v1367 = vadd.f32 %v1062, %v1366
        %v1368 = vpop.f32.mrb[0].mxu0
        %v1369 = vadd.f32 %v1064, %v1368
        %1370 = vmatprep.mubr.f32.mxu0 %v476
        %1371 = vmatmul.mubr.f32.gmra.mrb[0].mxu0 %v475
        %v1372 = vpop.f32.mrb[0].mxu0
        %v1373 = vadd.f32 %v1068, %v1372
        %v1374 = vpop.f32.mrb[0].mxu0
        %v1375 = vadd.f32 %v1070, %v1374
        %1376 = vdwg.mxu0
        %1377 = vmatprep.subr.mxu0 %v672
        %1378 = vmatpush1.msra.mxu0 %v671
        %1379 = vmatprep.subr.mxu0 %v675
        %1380 = vmatpush1.msra.mxu0 %v674
        %1381 = vmatprep.subr.mxu0 %v678
        %1382 = vmatpush1.msra.mxu0 %v677
        %1383 = vmatprep.subr.mxu0 %v681
        %1384 = vmatpush1.msra.mxu0 %v680
        %1385 = vmatprep.subr.mxu0 %v684
        %1386 = vmatpush1.msra.mxu0 %v683
        %1387 = vmatprep.subr.mxu0 %v687
        %1388 = vmatpush1.msra.mxu0 %v686
        %1389 = vmatprep.subr.mxu0 %v690
        %1390 = vmatpush1.msra.mxu0 %v689
        %1391 = vmatprep.subr.mxu0 %v693
        %1392 = vmatpush1.msra.mxu0 %v692
        %1393 = vmatprep.subr.mxu0 %v696
        %1394 = vmatpush1.msra.mxu0 %v695
        %1395 = vmatprep.subr.mxu0 %v699
        %1396 = vmatpush1.msra.mxu0 %v698
        %1397 = vmatprep.subr.mxu0 %v702
        %1398 = vmatpush1.msra.mxu0 %v701
        %1399 = vmatprep.subr.mxu0 %v705
        %1400 = vmatpush1.msra.mxu0 %v704
        %1401 = vmatprep.subr.mxu0 %v708
        %1402 = vmatpush1.msra.mxu0 %v707
        %1403 = vmatprep.subr.mxu0 %v711
        %1404 = vmatpush1.msra.mxu0 %v710
        %1405 = vmatprep.subr.mxu0 %v714
        %1406 = vmatpush1.msra.mxu0 %v713
        %1407 = vmatprep.subr.mxu0 %v717
        %1408 = vmatpush1.msra.mxu0 %v716
        %1409 = vmatprep.subr.mxu0 %v720
        %1410 = vmatpush1.msra.mxu0 %v719
        %1411 = vmatprep.subr.mxu0 %v723
        %1412 = vmatpush1.msra.mxu0 %v722
        %1413 = vmatprep.subr.mxu0 %v726
        %1414 = vmatpush1.msra.mxu0 %v725
        %1415 = vmatprep.subr.mxu0 %v729
        %1416 = vmatpush1.msra.mxu0 %v728
        %1417 = vmatprep.subr.mxu0 %v732
        %1418 = vmatpush1.msra.mxu0 %v731
        %1419 = vmatprep.subr.mxu0 %v735
        %1420 = vmatpush1.msra.mxu0 %v734
        %1421 = vmatprep.subr.mxu0 %v738
        %1422 = vmatpush1.msra.mxu0 %v737
        %1423 = vmatprep.subr.mxu0 %v741
        %1424 = vmatpush1.msra.mxu0 %v740
        %1425 = vmatprep.subr.mxu0 %v744
        %1426 = vmatpush1.msra.mxu0 %v743
        %1427 = vmatprep.subr.mxu0 %v747
        %1428 = vmatpush1.msra.mxu0 %v746
        %1429 = vmatprep.subr.mxu0 %v750
        %1430 = vmatpush1.msra.mxu0 %v749
        %1431 = vmatprep.subr.mxu0 %v753
        %1432 = vmatpush1.msra.mxu0 %v752
        %1433 = vmatprep.subr.mxu0 %v756
        %1434 = vmatpush1.msra.mxu0 %v755
        %1435 = vmatprep.subr.mxu0 %v759
        %1436 = vmatpush1.msra.mxu0 %v758
        %1437 = vmatprep.subr.mxu0 %v762
        %1438 = vmatpush1.msra.mxu0 %v761
        %1439 = vmatprep.subr.mxu0 %v765
        %1440 = vmatpush1.msra.mxu0 %v764
        %1441 = vmatprep.mubr.f32.mxu0 %v244
        %1442 = vmatmul.mubr.f32.gmra.mrb[0].mxu0 %v243
        %v1443 = vpop.f32.mrb[0].mxu0
        %v1444 = vadd.f32 %v1139, %v1443
        %v1445 = vpop.f32.mrb[0].mxu0
        %v1446 = vadd.f32 %v1141, %v1445
        %1447 = vmatprep.mubr.f32.mxu0 %v250
        %1448 = vmatmul.mubr.f32.gmra.mrb[0].mxu0 %v249
        %v1449 = vpop.f32.mrb[0].mxu0
        %v1450 = vadd.f32 %v1145, %v1449
        %v1451 = vpop.f32.mrb[0].mxu0
        %v1452 = vadd.f32 %v1147, %v1451
        %1453 = vmatprep.mubr.f32.mxu0 %v256
        %1454 = vmatmul.mubr.f32.gmra.mrb[0].mxu0 %v255
        %v1455 = vpop.f32.mrb[0].mxu0
        %v1456 = vadd.f32 %v1151, %v1455
        %v1457 = vpop.f32.mrb[0].mxu0
        %v1458 = vadd.f32 %v1153, %v1457
        %1459 = vmatprep.mubr.f32.mxu0 %v262
        %1460 = vmatmul.mubr.f32.gmra.mrb[0].mxu0 %v261
        %v1461 = vpop.f32.mrb[0].mxu0
        %v1462 = vadd.f32 %v1157, %v1461
        %v1463 = vpop.f32.mrb[0].mxu0
        %v1464 = vadd.f32 %v1159, %v1463
        %1465 = vmatprep.mubr.f32.mxu0 %v268
        %1466 = vmatmul.mubr.f32.gmra.mrb[0].mxu0 %v267
        %v1467 = vpop.f32.mrb[0].mxu0
        %v1468 = vadd.f32 %v1163, %v1467
        %v1469 = vpop.f32.mrb[0].mxu0
        %v1470 = vadd.f32 %v1165, %v1469
        %1471 = vmatprep.mubr.f32.mxu0 %v274
        %1472 = vmatmul.mubr.f32.gmra.mrb[0].mxu0 %v273
        %v1473 = vpop.f32.mrb[0].mxu0
        %v1474 = vadd.f32 %v1169, %v1473
        %v1475 = vpop.f32.mrb[0].mxu0
        %v1476 = vadd.f32 %v1171, %v1475
        %1477 = vmatprep.mubr.f32.mxu0 %v280
        %1478 = vmatmul.mubr.f32.gmra.mrb[0].mxu0 %v279
        %v1479 = vpop.f32.mrb[0].mxu0
        %v1480 = vadd.f32 %v1175, %v1479
        %v1481 = vpop.f32.mrb[0].mxu0
        %v1482 = vadd.f32 %v1177, %v1481
        %1483 = vmatprep.mubr.f32.mxu0 %v286
        %1484 = vmatmul.mubr.f32.gmra.mrb[0].mxu0 %v285
        %v1485 = vpop.f32.mrb[0].mxu0
        %v1486 = vadd.f32 %v1181, %v1485
        %v1487 = vpop.f32.mrb[0].mxu0
        %v1488 = vadd.f32 %v1183, %v1487
        %1489 = vmatprep.mubr.f32.mxu0 %v292
        %1490 = vmatmul.mubr.f32.gmra.mrb[0].mxu0 %v291
        %v1491 = vpop.f32.mrb[0].mxu0
        %v1492 = vadd.f32 %v1187, %v1491
        %v1493 = vpop.f32.mrb[0].mxu0
        %v1494 = vadd.f32 %v1189, %v1493
        %1495 = vmatprep.mubr.f32.mxu0 %v298
        %1496 = vmatmul.mubr.f32.gmra.mrb[0].mxu0 %v297
        %v1497 = vpop.f32.mrb[0].mxu0
        %v1498 = vadd.f32 %v1193, %v1497
        %v1499 = vpop.f32.mrb[0].mxu0
        %v1500 = vadd.f32 %v1195, %v1499
        %1501 = vmatprep.mubr.f32.mxu0 %v304
        %1502 = vmatmul.mubr.f32.gmra.mrb[0].mxu0 %v303
        %v1503 = vpop.f32.mrb[0].mxu0
        %v1504 = vadd.f32 %v1199, %v1503
        %v1505 = vpop.f32.mrb[0].mxu0
        %v1506 = vadd.f32 %v1201, %v1505
        %1507 = vmatprep.mubr.f32.mxu0 %v310
        %1508 = vmatmul.mubr.f32.gmra.mrb[0].mxu0 %v309
        %v1509 = vpop.f32.mrb[0].mxu0
        %v1510 = vadd.f32 %v1205, %v1509
        %v1511 = vpop.f32.mrb[0].mxu0
        %v1512 = vadd.f32 %v1207, %v1511
        %1513 = vmatprep.mubr.f32.mxu0 %v316
        %1514 = vmatmul.mubr.f32.gmra.mrb[0].mxu0 %v315
        %v1515 = vpop.f32.mrb[0].mxu0
        %v1516 = vadd.f32 %v1211, %v1515
        %v1517 = vpop.f32.mrb[0].mxu0
        %v1518 = vadd.f32 %v1213, %v1517
        %1519 = vmatprep.mubr.f32.mxu0 %v322
        %1520 = vmatmul.mubr.f32.gmra.mrb[0].mxu0 %v321
        %v1521 = vpop.f32.mrb[0].mxu0
        %v1522 = vadd.f32 %v1217, %v1521
        %v1523 = vpop.f32.mrb[0].mxu0
        %v1524 = vadd.f32 %v1219, %v1523
        %1525 = vmatprep.mubr.f32.mxu0 %v328
        %1526 = vmatmul.mubr.f32.gmra.mrb[0].mxu0 %v327
        %v1527 = vpop.f32.mrb[0].mxu0
        %v1528 = vadd.f32 %v1223, %v1527
        %v1529 = vpop.f32.mrb[0].mxu0
        %v1530 = vadd.f32 %v1225, %v1529
        %1531 = vmatprep.mubr.f32.mxu0 %v334
        %1532 = vmatmul.mubr.f32.gmra.mrb[0].mxu0 %v333
        %v1533 = vpop.f32.mrb[0].mxu0
        %v1534 = vadd.f32 %v1229, %v1533
        %v1535 = vpop.f32.mrb[0].mxu0
        %v1536 = vadd.f32 %v1231, %v1535
        %1537 = vmatprep.mubr.f32.mxu0 %v340
        %1538 = vmatmul.mubr.f32.gmra.mrb[0].mxu0 %v339
        %v1539 = vpop.f32.mrb[0].mxu0
        %v1540 = vadd.f32 %v1235, %v1539
        %v1541 = vpop.f32.mrb[0].mxu0
        %v1542 = vadd.f32 %v1237, %v1541
        %1543 = vmatprep.mubr.f32.mxu0 %v346
        %1544 = vmatmul.mubr.f32.gmra.mrb[0].mxu0 %v345
        %v1545 = vpop.f32.mrb[0].mxu0
        %v1546 = vadd.f32 %v1241, %v1545
        %v1547 = vpop.f32.mrb[0].mxu0
        %v1548 = vadd.f32 %v1243, %v1547
        %1549 = vmatprep.mubr.f32.mxu0 %v352
        %1550 = vmatmul.mubr.f32.gmra.mrb[0].mxu0 %v351
        %v1551 = vpop.f32.mrb[0].mxu0
        %v1552 = vadd.f32 %v1247, %v1551
        %v1553 = vpop.f32.mrb[0].mxu0
        %v1554 = vadd.f32 %v1249, %v1553
        %1555 = vmatprep.mubr.f32.mxu0 %v358
        %1556 = vmatmul.mubr.f32.gmra.mrb[0].mxu0 %v357
        %v1557 = vpop.f32.mrb[0].mxu0
        %v1558 = vadd.f32 %v1253, %v1557
        %v1559 = vpop.f32.mrb[0].mxu0
        %v1560 = vadd.f32 %v1255, %v1559
        %1561 = vmatprep.mubr.f32.mxu0 %v364
        %1562 = vmatmul.mubr.f32.gmra.mrb[0].mxu0 %v363
        %v1563 = vpop.f32.mrb[0].mxu0
        %v1564 = vadd.f32 %v1259, %v1563
        %v1565 = vpop.f32.mrb[0].mxu0
        %v1566 = vadd.f32 %v1261, %v1565
        %1567 = vmatprep.mubr.f32.mxu0 %v370
        %1568 = vmatmul.mubr.f32.gmra.mrb[0].mxu0 %v369
        %v1569 = vpop.f32.mrb[0].mxu0
        %v1570 = vadd.f32 %v1265, %v1569
        %v1571 = vpop.f32.mrb[0].mxu0
        %v1572 = vadd.f32 %v1267, %v1571
        %1573 = vmatprep.mubr.f32.mxu0 %v376
        %1574 = vmatmul.mubr.f32.gmra.mrb[0].mxu0 %v375
        %v1575 = vpop.f32.mrb[0].mxu0
        %v1576 = vadd.f32 %v1271, %v1575
        %v1577 = vpop.f32.mrb[0].mxu0
        %v1578 = vadd.f32 %v1273, %v1577
        %1579 = vmatprep.mubr.f32.mxu0 %v382
        %1580 = vmatmul.mubr.f32.gmra.mrb[0].mxu0 %v381
        %v1581 = vpop.f32.mrb[0].mxu0
        %v1582 = vadd.f32 %v1277, %v1581
        %v1583 = vpop.f32.mrb[0].mxu0
        %v1584 = vadd.f32 %v1279, %v1583
        %1585 = vmatprep.mubr.f32.mxu0 %v388
        %1586 = vmatmul.mubr.f32.gmra.mrb[0].mxu0 %v387
        %v1587 = vpop.f32.mrb[0].mxu0
        %v1588 = vadd.f32 %v1283, %v1587
        %v1589 = vpop.f32.mrb[0].mxu0
        %v1590 = vadd.f32 %v1285, %v1589
        %1591 = vmatprep.mubr.f32.mxu0 %v394
        %1592 = vmatmul.mubr.f32.gmra.mrb[0].mxu0 %v393
        %v1593 = vpop.f32.mrb[0].mxu0
        %v1594 = vadd.f32 %v1289, %v1593
        %v1595 = vpop.f32.mrb[0].mxu0
        %v1596 = vadd.f32 %v1291, %v1595
        %1597 = vmatprep.mubr.f32.mxu0 %v400
        %1598 = vmatmul.mubr.f32.gmra.mrb[0].mxu0 %v399
        %v1599 = vpop.f32.mrb[0].mxu0
        %v1600 = vadd.f32 %v1295, %v1599
        %v1601 = vpop.f32.mrb[0].mxu0
        %v1602 = vadd.f32 %v1297, %v1601
        %1603 = vmatprep.mubr.f32.mxu0 %v406
        %1604 = vmatmul.mubr.f32.gmra.mrb[0].mxu0 %v405
        %v1605 = vpop.f32.mrb[0].mxu0
        %v1606 = vadd.f32 %v1301, %v1605
        %v1607 = vpop.f32.mrb[0].mxu0
        %v1608 = vadd.f32 %v1303, %v1607
        %1609 = vmatprep.mubr.f32.mxu0 %v412
        %1610 = vmatmul.mubr.f32.gmra.mrb[0].mxu0 %v411
        %v1611 = vpop.f32.mrb[0].mxu0
        %v1612 = vadd.f32 %v1307, %v1611
        %v1613 = vpop.f32.mrb[0].mxu0
        %v1614 = vadd.f32 %v1309, %v1613
        %1615 = vmatprep.mubr.f32.mxu0 %v418
        %1616 = vmatmul.mubr.f32.gmra.mrb[0].mxu0 %v417
        %v1617 = vpop.f32.mrb[0].mxu0
        %v1618 = vadd.f32 %v1313, %v1617
        %v1619 = vpop.f32.mrb[0].mxu0
        %v1620 = vadd.f32 %v1315, %v1619
        %1621 = vmatprep.mubr.f32.mxu0 %v424
        %1622 = vmatmul.mubr.f32.gmra.mrb[0].mxu0 %v423
        %v1623 = vpop.f32.mrb[0].mxu0
        %v1624 = vadd.f32 %v1319, %v1623
        %v1625 = vpop.f32.mrb[0].mxu0
        %v1626 = vadd.f32 %v1321, %v1625
        %1627 = vmatprep.mubr.f32.mxu0 %v430
        %1628 = vmatmul.mubr.f32.gmra.mrb[0].mxu0 %v429
        %v1629 = vpop.f32.mrb[0].mxu0
        %v1630 = vadd.f32 %v1325, %v1629
        %v1631 = vpop.f32.mrb[0].mxu0
        %v1632 = vadd.f32 %v1327, %v1631
        %1633 = vmatprep.mubr.f32.mxu0 %v436
        %1634 = vmatmul.mubr.f32.gmra.mrb[0].mxu0 %v435
        %v1635 = vpop.f32.mrb[0].mxu0
        %v1636 = vadd.f32 %v1331, %v1635
        %v1637 = vpop.f32.mrb[0].mxu0
        %v1638 = vadd.f32 %v1333, %v1637
        %1639 = vmatprep.mubr.f32.mxu0 %v442
        %1640 = vmatmul.mubr.f32.gmra.mrb[0].mxu0 %v441
        %v1641 = vpop.f32.mrb[0].mxu0
        %v1642 = vadd.f32 %v1337, %v1641
        %v1643 = vpop.f32.mrb[0].mxu0
        %v1644 = vadd.f32 %v1339, %v1643
        %1645 = vmatprep.mubr.f32.mxu0 %v448
        %1646 = vmatmul.mubr.f32.gmra.mrb[0].mxu0 %v447
        %v1647 = vpop.f32.mrb[0].mxu0
        %v1648 = vadd.f32 %v1343, %v1647
        %v1649 = vpop.f32.mrb[0].mxu0
        %v1650 = vadd.f32 %v1345, %v1649
        %1651 = vmatprep.mubr.f32.mxu0 %v454
        %1652 = vmatmul.mubr.f32.gmra.mrb[0].mxu0 %v453
        %v1653 = vpop.f32.mrb[0].mxu0
        %v1654 = vadd.f32 %v1349, %v1653
        %v1655 = vpop.f32.mrb[0].mxu0
        %v1656 = vadd.f32 %v1351, %v1655
        %1657 = vmatprep.mubr.f32.mxu0 %v460
        %1658 = vmatmul.mubr.f32.gmra.mrb[0].mxu0 %v459
        %v1659 = vpop.f32.mrb[0].mxu0
        %v1660 = vadd.f32 %v1355, %v1659
        %v1661 = vpop.f32.mrb[0].mxu0
        %v1662 = vadd.f32 %v1357, %v1661
        %1663 = vmatprep.mubr.f32.mxu0 %v466
        %1664 = vmatmul.mubr.f32.gmra.mrb[0].mxu0 %v465
        %v1665 = vpop.f32.mrb[0].mxu0
        %v1666 = vadd.f32 %v1361, %v1665
        %v1667 = vpop.f32.mrb[0].mxu0
        %v1668 = vadd.f32 %v1363, %v1667
        %1669 = vmatprep.mubr.f32.mxu0 %v472
        %1670 = vmatmul.mubr.f32.gmra.mrb[0].mxu0 %v471
        %v1671 = vpop.f32.mrb[0].mxu0
        %v1672 = vadd.f32 %v1367, %v1671
        %v1673 = vpop.f32.mrb[0].mxu0
        %v1674 = vadd.f32 %v1369, %v1673
        %1675 = vmatprep.mubr.f32.mxu0 %v478
        %1676 = vmatmul.mubr.f32.gmra.mrb[0].mxu0 %v477
        %v1677 = vpop.f32.mrb[0].mxu0
        %v1678 = vadd.f32 %v1373, %v1677
        %v1679 = vpop.f32.mrb[0].mxu0
        %v1680 = vadd.f32 %v1375, %v1679
        %1681 = vdwg.mxu0
        %1682 = vmatprep.subr.mxu0 0.0
        %1683 = vmatpush1.msra.mxu0 %v481
        %1684 = vmatprep.subr.mxu0 0.0
        %1685 = vmatpush1.msra.mxu0 %v484
        %1686 = vmatprep.subr.mxu0 0.0
        %1687 = vmatpush1.msra.mxu0 %v487
        %1688 = vmatprep.subr.mxu0 0.0
        %1689 = vmatpush1.msra.mxu0 %v490
        %1690 = vmatprep.subr.mxu0 0.0
        %1691 = vmatpush1.msra.mxu0 %v493
        %1692 = vmatprep.subr.mxu0 0.0
        %1693 = vmatpush1.msra.mxu0 %v496
        %1694 = vmatprep.subr.mxu0 0.0
        %1695 = vmatpush1.msra.mxu0 %v499
        %1696 = vmatprep.subr.mxu0 0.0
        %1697 = vmatpush1.msra.mxu0 %v502
        %1698 = vmatprep.subr.mxu0 0.0
        %1699 = vmatpush1.msra.mxu0 %v505
        %1700 = vmatprep.subr.mxu0 0.0
        %1701 = vmatpush1.msra.mxu0 %v508
        %1702 = vmatprep.subr.mxu0 0.0
        %1703 = vmatpush1.msra.mxu0 %v511
        %1704 = vmatprep.subr.mxu0 0.0
        %1705 = vmatpush1.msra.mxu0 %v514
        %1706 = vmatprep.subr.mxu0 0.0
        %1707 = vmatpush1.msra.mxu0 %v517
        %1708 = vmatprep.subr.mxu0 0.0
        %1709 = vmatpush1.msra.mxu0 %v520
        %1710 = vmatprep.subr.mxu0 0.0
        %1711 = vmatpush1.msra.mxu0 %v523
        %1712 = vmatprep.subr.mxu0 0.0
        %1713 = vmatpush1.msra.mxu0 %v526
        %1714 = vmatprep.subr.mxu0 0.0
        %1715 = vmatpush1.msra.mxu0 %v529
        %1716 = vmatprep.subr.mxu0 0.0
        %1717 = vmatpush1.msra.mxu0 %v532
        %1718 = vmatprep.subr.mxu0 0.0
        %1719 = vmatpush1.msra.mxu0 %v535
        %1720 = vmatprep.subr.mxu0 0.0
        %1721 = vmatpush1.msra.mxu0 %v538
        %1722 = vmatprep.subr.mxu0 0.0
        %1723 = vmatpush1.msra.mxu0 %v541
        %1724 = vmatprep.subr.mxu0 0.0
        %1725 = vmatpush1.msra.mxu0 %v544
        %1726 = vmatprep.subr.mxu0 0.0
        %1727 = vmatpush1.msra.mxu0 %v547
        %1728 = vmatprep.subr.mxu0 0.0
        %1729 = vmatpush1.msra.mxu0 %v550
        %1730 = vmatprep.subr.mxu0 0.0
        %1731 = vmatpush1.msra.mxu0 %v553
        %1732 = vmatprep.subr.mxu0 0.0
        %1733 = vmatpush1.msra.mxu0 %v556
        %1734 = vmatprep.subr.mxu0 0.0
        %1735 = vmatpush1.msra.mxu0 %v559
        %1736 = vmatprep.subr.mxu0 0.0
        %1737 = vmatpush1.msra.mxu0 %v562
        %1738 = vmatprep.subr.mxu0 0.0
        %1739 = vmatpush1.msra.mxu0 %v565
        %1740 = vmatprep.subr.mxu0 0.0
        %1741 = vmatpush1.msra.mxu0 %v568
        %1742 = vmatprep.subr.mxu0 0.0
        %1743 = vmatpush1.msra.mxu0 %v571
        %1744 = vmatprep.subr.mxu0 0.0
        %1745 = vmatpush1.msra.mxu0 %v574
        %1746 = vmatprep.mubr.f32.mxu0 %v240
        %1747 = vmatmul.mubr.f32.gmra.mrb[0].mxu0 %v239
        %v1748 = vpop.f32.mrb[0].mxu0
        %v1749 = vadd.f32 0.0, %v1748
        %v1750 = vpop.f32.mrb[0].mxu0
        %1751 = vmatprep.mubr.f32.mxu0 %v246
        %1752 = vmatmul.mubr.f32.gmra.mrb[0].mxu0 %v245
        %v1753 = vpop.f32.mrb[0].mxu0
        %v1754 = vadd.f32 0.0, %v1753
        %v1755 = vpop.f32.mrb[0].mxu0
        %1756 = vmatprep.mubr.f32.mxu0 %v252
        %1757 = vmatmul.mubr.f32.gmra.mrb[0].mxu0 %v251
        %v1758 = vpop.f32.mrb[0].mxu0
        %v1759 = vadd.f32 0.0, %v1758
        %v1760 = vpop.f32.mrb[0].mxu0
        %1761 = vmatprep.mubr.f32.mxu0 %v258
        %1762 = vmatmul.mubr.f32.gmra.mrb[0].mxu0 %v257
        %v1763 = vpop.f32.mrb[0].mxu0
        %v1764 = vadd.f32 0.0, %v1763
        %v1765 = vpop.f32.mrb[0].mxu0
        %1766 = vmatprep.mubr.f32.mxu0 %v264
        %1767 = vmatmul.mubr.f32.gmra.mrb[0].mxu0 %v263
        %v1768 = vpop.f32.mrb[0].mxu0
        %v1769 = vadd.f32 0.0, %v1768
        %v1770 = vpop.f32.mrb[0].mxu0
        %1771 = vmatprep.mubr.f32.mxu0 %v270
        %1772 = vmatmul.mubr.f32.gmra.mrb[0].mxu0 %v269
        %v1773 = vpop.f32.mrb[0].mxu0
        %v1774 = vadd.f32 0.0, %v1773
        %v1775 = vpop.f32.mrb[0].mxu0
        %1776 = vmatprep.mubr.f32.mxu0 %v276
        %1777 = vmatmul.mubr.f32.gmra.mrb[0].mxu0 %v275
        %v1778 = vpop.f32.mrb[0].mxu0
        %v1779 = vadd.f32 0.0, %v1778
        %v1780 = vpop.f32.mrb[0].mxu0
        %1781 = vmatprep.mubr.f32.mxu0 %v282
        %1782 = vmatmul.mubr.f32.gmra.mrb[0].mxu0 %v281
        %v1783 = vpop.f32.mrb[0].mxu0
        %v1784 = vadd.f32 0.0, %v1783
        %v1785 = vpop.f32.mrb[0].mxu0
        %1786 = vmatprep.mubr.f32.mxu0 %v288
        %1787 = vmatmul.mubr.f32.gmra.mrb[0].mxu0 %v287
        %v1788 = vpop.f32.mrb[0].mxu0
        %v1789 = vadd.f32 0.0, %v1788
        %v1790 = vpop.f32.mrb[0].mxu0
        %1791 = vmatprep.mubr.f32.mxu0 %v294
        %1792 = vmatmul.mubr.f32.gmra.mrb[0].mxu0 %v293
        %v1793 = vpop.f32.mrb[0].mxu0
        %v1794 = vadd.f32 0.0, %v1793
        %v1795 = vpop.f32.mrb[0].mxu0
        %1796 = vmatprep.mubr.f32.mxu0 %v300
        %1797 = vmatmul.mubr.f32.gmra.mrb[0].mxu0 %v299
        %v1798 = vpop.f32.mrb[0].mxu0
        %v1799 = vadd.f32 0.0, %v1798
        %v1800 = vpop.f32.mrb[0].mxu0
        %1801 = vmatprep.mubr.f32.mxu0 %v306
        %1802 = vmatmul.mubr.f32.gmra.mrb[0].mxu0 %v305
        %v1803 = vpop.f32.mrb[0].mxu0
        %v1804 = vadd.f32 0.0, %v1803
        %v1805 = vpop.f32.mrb[0].mxu0
        %1806 = vmatprep.mubr.f32.mxu0 %v312
        %1807 = vmatmul.mubr.f32.gmra.mrb[0].mxu0 %v311
        %v1808 = vpop.f32.mrb[0].mxu0
        %v1809 = vadd.f32 0.0, %v1808
        %v1810 = vpop.f32.mrb[0].mxu0
        %1811 = vmatprep.mubr.f32.mxu0 %v318
        %1812 = vmatmul.mubr.f32.gmra.mrb[0].mxu0 %v317
        %v1813 = vpop.f32.mrb[0].mxu0
        %v1814 = vadd.f32 0.0, %v1813
        %v1815 = vpop.f32.mrb[0].mxu0
        %1816 = vmatprep.mubr.f32.mxu0 %v324
        %1817 = vmatmul.mubr.f32.gmra.mrb[0].mxu0 %v323
        %v1818 = vpop.f32.mrb[0].mxu0
        %v1819 = vadd.f32 0.0, %v1818
        %v1820 = vpop.f32.mrb[0].mxu0
        %1821 = vmatprep.mubr.f32.mxu0 %v330
        %1822 = vmatmul.mubr.f32.gmra.mrb[0].mxu0 %v329
        %v1823 = vpop.f32.mrb[0].mxu0
        %v1824 = vadd.f32 0.0, %v1823
        %v1825 = vpop.f32.mrb[0].mxu0
        %1826 = vmatprep.mubr.f32.mxu0 %v336
        %1827 = vmatmul.mubr.f32.gmra.mrb[0].mxu0 %v335
        %v1828 = vpop.f32.mrb[0].mxu0
        %v1829 = vadd.f32 0.0, %v1828
        %v1830 = vpop.f32.mrb[0].mxu0
        %1831 = vmatprep.mubr.f32.mxu0 %v342
        %1832 = vmatmul.mubr.f32.gmra.mrb[0].mxu0 %v341
        %v1833 = vpop.f32.mrb[0].mxu0
        %v1834 = vadd.f32 0.0, %v1833
        %v1835 = vpop.f32.mrb[0].mxu0
        %1836 = vmatprep.mubr.f32.mxu0 %v348
        %1837 = vmatmul.mubr.f32.gmra.mrb[0].mxu0 %v347
        %v1838 = vpop.f32.mrb[0].mxu0
        %v1839 = vadd.f32 0.0, %v1838
        %v1840 = vpop.f32.mrb[0].mxu0
        %1841 = vmatprep.mubr.f32.mxu0 %v354
        %1842 = vmatmul.mubr.f32.gmra.mrb[0].mxu0 %v353
        %v1843 = vpop.f32.mrb[0].mxu0
        %v1844 = vadd.f32 0.0, %v1843
        %v1845 = vpop.f32.mrb[0].mxu0
        %1846 = vmatprep.mubr.f32.mxu0 %v360
        %1847 = vmatmul.mubr.f32.gmra.mrb[0].mxu0 %v359
        %v1848 = vpop.f32.mrb[0].mxu0
        %v1849 = vadd.f32 0.0, %v1848
        %v1850 = vpop.f32.mrb[0].mxu0
        %1851 = vmatprep.mubr.f32.mxu0 %v366
        %1852 = vmatmul.mubr.f32.gmra.mrb[0].mxu0 %v365
        %v1853 = vpop.f32.mrb[0].mxu0
        %v1854 = vadd.f32 0.0, %v1853
        %v1855 = vpop.f32.mrb[0].mxu0
        %1856 = vmatprep.mubr.f32.mxu0 %v372
        %1857 = vmatmul.mubr.f32.gmra.mrb[0].mxu0 %v371
        %v1858 = vpop.f32.mrb[0].mxu0
        %v1859 = vadd.f32 0.0, %v1858
        %v1860 = vpop.f32.mrb[0].mxu0
        %1861 = vmatprep.mubr.f32.mxu0 %v378
        %1862 = vmatmul.mubr.f32.gmra.mrb[0].mxu0 %v377
        %v1863 = vpop.f32.mrb[0].mxu0
        %v1864 = vadd.f32 0.0, %v1863
        %v1865 = vpop.f32.mrb[0].mxu0
        %1866 = vmatprep.mubr.f32.mxu0 %v384
        %1867 = vmatmul.mubr.f32.gmra.mrb[0].mxu0 %v383
        %v1868 = vpop.f32.mrb[0].mxu0
        %v1869 = vadd.f32 0.0, %v1868
        %v1870 = vpop.f32.mrb[0].mxu0
        %1871 = vmatprep.mubr.f32.mxu0 %v390
        %1872 = vmatmul.mubr.f32.gmra.mrb[0].mxu0 %v389
        %v1873 = vpop.f32.mrb[0].mxu0
        %v1874 = vadd.f32 0.0, %v1873
        %v1875 = vpop.f32.mrb[0].mxu0
        %1876 = vmatprep.mubr.f32.mxu0 %v396
        %1877 = vmatmul.mubr.f32.gmra.mrb[0].mxu0 %v395
        %v1878 = vpop.f32.mrb[0].mxu0
        %v1879 = vadd.f32 0.0, %v1878
        %v1880 = vpop.f32.mrb[0].mxu0
        %1881 = vmatprep.mubr.f32.mxu0 %v402
        %1882 = vmatmul.mubr.f32.gmra.mrb[0].mxu0 %v401
        %v1883 = vpop.f32.mrb[0].mxu0
        %v1884 = vadd.f32 0.0, %v1883
        %v1885 = vpop.f32.mrb[0].mxu0
        %1886 = vmatprep.mubr.f32.mxu0 %v408
        %1887 = vmatmul.mubr.f32.gmra.mrb[0].mxu0 %v407
        %v1888 = vpop.f32.mrb[0].mxu0
        %v1889 = vadd.f32 0.0, %v1888
        %v1890 = vpop.f32.mrb[0].mxu0
        %1891 = vmatprep.mubr.f32.mxu0 %v414
        %1892 = vmatmul.mubr.f32.gmra.mrb[0].mxu0 %v413
        %v1893 = vpop.f32.mrb[0].mxu0
        %v1894 = vadd.f32 0.0, %v1893
        %v1895 = vpop.f32.mrb[0].mxu0
        %1896 = vmatprep.mubr.f32.mxu0 %v420
        %1897 = vmatmul.mubr.f32.gmra.mrb[0].mxu0 %v419
        %v1898 = vpop.f32.mrb[0].mxu0
        %v1899 = vadd.f32 0.0, %v1898
        %v1900 = vpop.f32.mrb[0].mxu0
        %1901 = vmatprep.mubr.f32.mxu0 %v426
        %1902 = vmatmul.mubr.f32.gmra.mrb[0].mxu0 %v425
        %v1903 = vpop.f32.mrb[0].mxu0
        %v1904 = vadd.f32 0.0, %v1903
        %v1905 = vpop.f32.mrb[0].mxu0
        %1906 = vmatprep.mubr.f32.mxu0 %v432
        %1907 = vmatmul.mubr.f32.gmra.mrb[0].mxu0 %v431
        %v1908 = vpop.f32.mrb[0].mxu0
        %v1909 = vadd.f32 0.0, %v1908
        %v1910 = vpop.f32.mrb[0].mxu0
        %1911 = vmatprep.mubr.f32.mxu0 %v438
        %1912 = vmatmul.mubr.f32.gmra.mrb[0].mxu0 %v437
        %v1913 = vpop.f32.mrb[0].mxu0
        %v1914 = vadd.f32 0.0, %v1913
        %v1915 = vpop.f32.mrb[0].mxu0
        %1916 = vmatprep.mubr.f32.mxu0 %v444
        %1917 = vmatmul.mubr.f32.gmra.mrb[0].mxu0 %v443
        %v1918 = vpop.f32.mrb[0].mxu0
        %v1919 = vadd.f32 0.0, %v1918
        %v1920 = vpop.f32.mrb[0].mxu0
        %1921 = vmatprep.mubr.f32.mxu0 %v450
        %1922 = vmatmul.mubr.f32.gmra.mrb[0].mxu0 %v449
        %v1923 = vpop.f32.mrb[0].mxu0
        %v1924 = vadd.f32 0.0, %v1923
        %v1925 = vpop.f32.mrb[0].mxu0
        %1926 = vmatprep.mubr.f32.mxu0 %v456
        %1927 = vmatmul.mubr.f32.gmra.mrb[0].mxu0 %v455
        %v1928 = vpop.f32.mrb[0].mxu0
        %v1929 = vadd.f32 0.0, %v1928
        %v1930 = vpop.f32.mrb[0].mxu0
        %1931 = vmatprep.mubr.f32.mxu0 %v462
        %1932 = vmatmul.mubr.f32.gmra.mrb[0].mxu0 %v461
        %v1933 = vpop.f32.mrb[0].mxu0
        %v1934 = vadd.f32 0.0, %v1933
        %v1935 = vpop.f32.mrb[0].mxu0
        %1936 = vmatprep.mubr.f32.mxu0 %v468
        %1937 = vmatmul.mubr.f32.gmra.mrb[0].mxu0 %v467
        %v1938 = vpop.f32.mrb[0].mxu0
        %v1939 = vadd.f32 0.0, %v1938
        %v1940 = vpop.f32.mrb[0].mxu0
        %1941 = vmatprep.mubr.f32.mxu0 %v474
        %1942 = vmatmul.mubr.f32.gmra.mrb[0].mxu0 %v473
        %v1943 = vpop.f32.mrb[0].mxu0
        %v1944 = vadd.f32 0.0, %v1943
        %v1945 = vpop.f32.mrb[0].mxu0
        %1946 = vdwg.mxu0
        %1947 = vmatprep.subr.mxu0 0.0
        %1948 = vmatpush1.msra.mxu0 %v577
        %1949 = vmatprep.subr.mxu0 0.0
        %1950 = vmatpush1.msra.mxu0 %v580
        %1951 = vmatprep.subr.mxu0 0.0
        %1952 = vmatpush1.msra.mxu0 %v583
        %1953 = vmatprep.subr.mxu0 0.0
        %1954 = vmatpush1.msra.mxu0 %v586
        %1955 = vmatprep.subr.mxu0 0.0
        %1956 = vmatpush1.msra.mxu0 %v589
        %1957 = vmatprep.subr.mxu0 0.0
        %1958 = vmatpush1.msra.mxu0 %v592
        %1959 = vmatprep.subr.mxu0 0.0
        %1960 = vmatpush1.msra.mxu0 %v595
        %1961 = vmatprep.subr.mxu0 0.0
        %1962 = vmatpush1.msra.mxu0 %v598
        %1963 = vmatprep.subr.mxu0 0.0
        %1964 = vmatpush1.msra.mxu0 %v601
        %1965 = vmatprep.subr.mxu0 0.0
        %1966 = vmatpush1.msra.mxu0 %v604
        %1967 = vmatprep.subr.mxu0 0.0
        %1968 = vmatpush1.msra.mxu0 %v607
        %1969 = vmatprep.subr.mxu0 0.0
        %1970 = vmatpush1.msra.mxu0 %v610
        %1971 = vmatprep.subr.mxu0 0.0
        %1972 = vmatpush1.msra.mxu0 %v613
        %1973 = vmatprep.subr.mxu0 0.0
        %1974 = vmatpush1.msra.mxu0 %v616
        %1975 = vmatprep.subr.mxu0 0.0
        %1976 = vmatpush1.msra.mxu0 %v619
        %1977 = vmatprep.subr.mxu0 0.0
        %1978 = vmatpush1.msra.mxu0 %v622
        %1979 = vmatprep.subr.mxu0 0.0
        %1980 = vmatpush1.msra.mxu0 %v625
        %1981 = vmatprep.subr.mxu0 0.0
        %1982 = vmatpush1.msra.mxu0 %v628
        %1983 = vmatprep.subr.mxu0 0.0
        %1984 = vmatpush1.msra.mxu0 %v631
        %1985 = vmatprep.subr.mxu0 0.0
        %1986 = vmatpush1.msra.mxu0 %v634
        %1987 = vmatprep.subr.mxu0 0.0
        %1988 = vmatpush1.msra.mxu0 %v637
        %1989 = vmatprep.subr.mxu0 0.0
        %1990 = vmatpush1.msra.mxu0 %v640
        %1991 = vmatprep.subr.mxu0 0.0
        %1992 = vmatpush1.msra.mxu0 %v643
        %1993 = vmatprep.subr.mxu0 0.0
        %1994 = vmatpush1.msra.mxu0 %v646
        %1995 = vmatprep.subr.mxu0 0.0
        %1996 = vmatpush1.msra.mxu0 %v649
        %1997 = vmatprep.subr.mxu0 0.0
        %1998 = vmatpush1.msra.mxu0 %v652
        %1999 = vmatprep.subr.mxu0 0.0
        %2000 = vmatpush1.msra.mxu0 %v655
        %2001 = vmatprep.subr.mxu0 0.0
        %2002 = vmatpush1.msra.mxu0 %v658
        %2003 = vmatprep.subr.mxu0 0.0
        %2004 = vmatpush1.msra.mxu0 %v661
        %2005 = vmatprep.subr.mxu0 0.0
        %2006 = vmatpush1.msra.mxu0 %v664
        %2007 = vmatprep.subr.mxu0 0.0
        %2008 = vmatpush1.msra.mxu0 %v667
        %2009 = vmatprep.subr.mxu0 0.0
        %2010 = vmatpush1.msra.mxu0 %v670
        %2011 = vmatprep.mubr.f32.mxu0 %v242
        %2012 = vmatmul.mubr.f32.gmra.mrb[0].mxu0 %v241
        %v2013 = vpop.f32.mrb[0].mxu0
        %v2014 = vadd.f32 %v1749, %v2013
        %v2015 = vpop.f32.mrb[0].mxu0
        %2016 = vmatprep.mubr.f32.mxu0 %v248
        %2017 = vmatmul.mubr.f32.gmra.mrb[0].mxu0 %v247
        %v2018 = vpop.f32.mrb[0].mxu0
        %v2019 = vadd.f32 %v1754, %v2018
        %v2020 = vpop.f32.mrb[0].mxu0
        %2021 = vmatprep.mubr.f32.mxu0 %v254
        %2022 = vmatmul.mubr.f32.gmra.mrb[0].mxu0 %v253
        %v2023 = vpop.f32.mrb[0].mxu0
        %v2024 = vadd.f32 %v1759, %v2023
        %v2025 = vpop.f32.mrb[0].mxu0
        %2026 = vmatprep.mubr.f32.mxu0 %v260
        %2027 = vmatmul.mubr.f32.gmra.mrb[0].mxu0 %v259
        %v2028 = vpop.f32.mrb[0].mxu0
        %v2029 = vadd.f32 %v1764, %v2028
        %v2030 = vpop.f32.mrb[0].mxu0
        %2031 = vmatprep.mubr.f32.mxu0 %v266
        %2032 = vmatmul.mubr.f32.gmra.mrb[0].mxu0 %v265
        %v2033 = vpop.f32.mrb[0].mxu0
        %v2034 = vadd.f32 %v1769, %v2033
        %v2035 = vpop.f32.mrb[0].mxu0
        %2036 = vmatprep.mubr.f32.mxu0 %v272
        %2037 = vmatmul.mubr.f32.gmra.mrb[0].mxu0 %v271
        %v2038 = vpop.f32.mrb[0].mxu0
        %v2039 = vadd.f32 %v1774, %v2038
        %v2040 = vpop.f32.mrb[0].mxu0
        %2041 = vmatprep.mubr.f32.mxu0 %v278
        %2042 = vmatmul.mubr.f32.gmra.mrb[0].mxu0 %v277
        %v2043 = vpop.f32.mrb[0].mxu0
        %v2044 = vadd.f32 %v1779, %v2043
        %v2045 = vpop.f32.mrb[0].mxu0
        %2046 = vmatprep.mubr.f32.mxu0 %v284
        %2047 = vmatmul.mubr.f32.gmra.mrb[0].mxu0 %v283
        %v2048 = vpop.f32.mrb[0].mxu0
        %v2049 = vadd.f32 %v1784, %v2048
        %v2050 = vpop.f32.mrb[0].mxu0
        %2051 = vmatprep.mubr.f32.mxu0 %v290
        %2052 = vmatmul.mubr.f32.gmra.mrb[0].mxu0 %v289
        %v2053 = vpop.f32.mrb[0].mxu0
        %v2054 = vadd.f32 %v1789, %v2053
        %v2055 = vpop.f32.mrb[0].mxu0
        %2056 = vmatprep.mubr.f32.mxu0 %v296
        %2057 = vmatmul.mubr.f32.gmra.mrb[0].mxu0 %v295
        %v2058 = vpop.f32.mrb[0].mxu0
        %v2059 = vadd.f32 %v1794, %v2058
        %v2060 = vpop.f32.mrb[0].mxu0
        %2061 = vmatprep.mubr.f32.mxu0 %v302
        %2062 = vmatmul.mubr.f32.gmra.mrb[0].mxu0 %v301
        %v2063 = vpop.f32.mrb[0].mxu0
        %v2064 = vadd.f32 %v1799, %v2063
        %v2065 = vpop.f32.mrb[0].mxu0
        %2066 = vmatprep.mubr.f32.mxu0 %v308
        %2067 = vmatmul.mubr.f32.gmra.mrb[0].mxu0 %v307
        %v2068 = vpop.f32.mrb[0].mxu0
        %v2069 = vadd.f32 %v1804, %v2068
        %v2070 = vpop.f32.mrb[0].mxu0
        %2071 = vmatprep.mubr.f32.mxu0 %v314
        %2072 = vmatmul.mubr.f32.gmra.mrb[0].mxu0 %v313
        %v2073 = vpop.f32.mrb[0].mxu0
        %v2074 = vadd.f32 %v1809, %v2073
        %v2075 = vpop.f32.mrb[0].mxu0
        %2076 = vmatprep.mubr.f32.mxu0 %v320
        %2077 = vmatmul.mubr.f32.gmra.mrb[0].mxu0 %v319
        %v2078 = vpop.f32.mrb[0].mxu0
        %v2079 = vadd.f32 %v1814, %v2078
        %v2080 = vpop.f32.mrb[0].mxu0
        %2081 = vmatprep.mubr.f32.mxu0 %v326
        %2082 = vmatmul.mubr.f32.gmra.mrb[0].mxu0 %v325
        %v2083 = vpop.f32.mrb[0].mxu0
        %v2084 = vadd.f32 %v1819, %v2083
        %v2085 = vpop.f32.mrb[0].mxu0
        %2086 = vmatprep.mubr.f32.mxu0 %v332
        %2087 = vmatmul.mubr.f32.gmra.mrb[0].mxu0 %v331
        %v2088 = vpop.f32.mrb[0].mxu0
        %v2089 = vadd.f32 %v1824, %v2088
        %v2090 = vpop.f32.mrb[0].mxu0
        %2091 = vmatprep.mubr.f32.mxu0 %v338
        %2092 = vmatmul.mubr.f32.gmra.mrb[0].mxu0 %v337
        %v2093 = vpop.f32.mrb[0].mxu0
        %v2094 = vadd.f32 %v1829, %v2093
        %v2095 = vpop.f32.mrb[0].mxu0
        %2096 = vmatprep.mubr.f32.mxu0 %v344
        %2097 = vmatmul.mubr.f32.gmra.mrb[0].mxu0 %v343
        %v2098 = vpop.f32.mrb[0].mxu0
        %v2099 = vadd.f32 %v1834, %v2098
        %v2100 = vpop.f32.mrb[0].mxu0
        %2101 = vmatprep.mubr.f32.mxu0 %v350
        %2102 = vmatmul.mubr.f32.gmra.mrb[0].mxu0 %v349
        %v2103 = vpop.f32.mrb[0].mxu0
        %v2104 = vadd.f32 %v1839, %v2103
        %v2105 = vpop.f32.mrb[0].mxu0
        %2106 = vmatprep.mubr.f32.mxu0 %v356
        %2107 = vmatmul.mubr.f32.gmra.mrb[0].mxu0 %v355
        %v2108 = vpop.f32.mrb[0].mxu0
        %v2109 = vadd.f32 %v1844, %v2108
        %v2110 = vpop.f32.mrb[0].mxu0
        %2111 = vmatprep.mubr.f32.mxu0 %v362
        %2112 = vmatmul.mubr.f32.gmra.mrb[0].mxu0 %v361
        %v2113 = vpop.f32.mrb[0].mxu0
        %v2114 = vadd.f32 %v1849, %v2113
        %v2115 = vpop.f32.mrb[0].mxu0
        %2116 = vmatprep.mubr.f32.mxu0 %v368
        %2117 = vmatmul.mubr.f32.gmra.mrb[0].mxu0 %v367
        %v2118 = vpop.f32.mrb[0].mxu0
        %v2119 = vadd.f32 %v1854, %v2118
        %v2120 = vpop.f32.mrb[0].mxu0
        %2121 = vmatprep.mubr.f32.mxu0 %v374
        %2122 = vmatmul.mubr.f32.gmra.mrb[0].mxu0 %v373
        %v2123 = vpop.f32.mrb[0].mxu0
        %v2124 = vadd.f32 %v1859, %v2123
        %v2125 = vpop.f32.mrb[0].mxu0
        %2126 = vmatprep.mubr.f32.mxu0 %v380
        %2127 = vmatmul.mubr.f32.gmra.mrb[0].mxu0 %v379
        %v2128 = vpop.f32.mrb[0].mxu0
        %v2129 = vadd.f32 %v1864, %v2128
        %v2130 = vpop.f32.mrb[0].mxu0
        %2131 = vmatprep.mubr.f32.mxu0 %v386
        %2132 = vmatmul.mubr.f32.gmra.mrb[0].mxu0 %v385
        %v2133 = vpop.f32.mrb[0].mxu0
        %v2134 = vadd.f32 %v1869, %v2133
        %v2135 = vpop.f32.mrb[0].mxu0
        %2136 = vmatprep.mubr.f32.mxu0 %v392
        %2137 = vmatmul.mubr.f32.gmra.mrb[0].mxu0 %v391
        %v2138 = vpop.f32.mrb[0].mxu0
        %v2139 = vadd.f32 %v1874, %v2138
        %v2140 = vpop.f32.mrb[0].mxu0
        %2141 = vmatprep.mubr.f32.mxu0 %v398
        %2142 = vmatmul.mubr.f32.gmra.mrb[0].mxu0 %v397
        %v2143 = vpop.f32.mrb[0].mxu0
        %v2144 = vadd.f32 %v1879, %v2143
        %v2145 = vpop.f32.mrb[0].mxu0
        %2146 = vmatprep.mubr.f32.mxu0 %v404
        %2147 = vmatmul.mubr.f32.gmra.mrb[0].mxu0 %v403
        %v2148 = vpop.f32.mrb[0].mxu0
        %v2149 = vadd.f32 %v1884, %v2148
        %v2150 = vpop.f32.mrb[0].mxu0
        %2151 = vmatprep.mubr.f32.mxu0 %v410
        %2152 = vmatmul.mubr.f32.gmra.mrb[0].mxu0 %v409
        %v2153 = vpop.f32.mrb[0].mxu0
        %v2154 = vadd.f32 %v1889, %v2153
        %v2155 = vpop.f32.mrb[0].mxu0
        %2156 = vmatprep.mubr.f32.mxu0 %v416
        %2157 = vmatmul.mubr.f32.gmra.mrb[0].mxu0 %v415
        %v2158 = vpop.f32.mrb[0].mxu0
        %v2159 = vadd.f32 %v1894, %v2158
        %v2160 = vpop.f32.mrb[0].mxu0
        %2161 = vmatprep.mubr.f32.mxu0 %v422
        %2162 = vmatmul.mubr.f32.gmra.mrb[0].mxu0 %v421
        %v2163 = vpop.f32.mrb[0].mxu0
        %v2164 = vadd.f32 %v1899, %v2163
        %v2165 = vpop.f32.mrb[0].mxu0
        %2166 = vmatprep.mubr.f32.mxu0 %v428
        %2167 = vmatmul.mubr.f32.gmra.mrb[0].mxu0 %v427
        %v2168 = vpop.f32.mrb[0].mxu0
        %v2169 = vadd.f32 %v1904, %v2168
        %v2170 = vpop.f32.mrb[0].mxu0
        %2171 = vmatprep.mubr.f32.mxu0 %v434
        %2172 = vmatmul.mubr.f32.gmra.mrb[0].mxu0 %v433
        %v2173 = vpop.f32.mrb[0].mxu0
        %v2174 = vadd.f32 %v1909, %v2173
        %v2175 = vpop.f32.mrb[0].mxu0
        %2176 = vmatprep.mubr.f32.mxu0 %v440
        %2177 = vmatmul.mubr.f32.gmra.mrb[0].mxu0 %v439
        %v2178 = vpop.f32.mrb[0].mxu0
        %v2179 = vadd.f32 %v1914, %v2178
        %v2180 = vpop.f32.mrb[0].mxu0
        %2181 = vmatprep.mubr.f32.mxu0 %v446
        %2182 = vmatmul.mubr.f32.gmra.mrb[0].mxu0 %v445
        %v2183 = vpop.f32.mrb[0].mxu0
        %v2184 = vadd.f32 %v1919, %v2183
        %v2185 = vpop.f32.mrb[0].mxu0
        %2186 = vmatprep.mubr.f32.mxu0 %v452
        %2187 = vmatmul.mubr.f32.gmra.mrb[0].mxu0 %v451
        %v2188 = vpop.f32.mrb[0].mxu0
        %v2189 = vadd.f32 %v1924, %v2188
        %v2190 = vpop.f32.mrb[0].mxu0
        %2191 = vmatprep.mubr.f32.mxu0 %v458
        %2192 = vmatmul.mubr.f32.gmra.mrb[0].mxu0 %v457
        %v2193 = vpop.f32.mrb[0].mxu0
        %v2194 = vadd.f32 %v1929, %v2193
        %v2195 = vpop.f32.mrb[0].mxu0
        %2196 = vmatprep.mubr.f32.mxu0 %v464
        %2197 = vmatmul.mubr.f32.gmra.mrb[0].mxu0 %v463
        %v2198 = vpop.f32.mrb[0].mxu0
        %v2199 = vadd.f32 %v1934, %v2198
        %v2200 = vpop.f32.mrb[0].mxu0
        %2201 = vmatprep.mubr.f32.mxu0 %v470
        %2202 = vmatmul.mubr.f32.gmra.mrb[0].mxu0 %v469
        %v2203 = vpop.f32.mrb[0].mxu0
        %v2204 = vadd.f32 %v1939, %v2203
        %v2205 = vpop.f32.mrb[0].mxu0
        %2206 = vmatprep.mubr.f32.mxu0 %v476
        %2207 = vmatmul.mubr.f32.gmra.mrb[0].mxu0 %v475
        %v2208 = vpop.f32.mrb[0].mxu0
        %v2209 = vadd.f32 %v1944, %v2208
        %v2210 = vpop.f32.mrb[0].mxu0
        %2211 = vdwg.mxu0
        %2212 = vmatprep.subr.mxu0 0.0
        %2213 = vmatpush1.msra.mxu0 %v673
        %2214 = vmatprep.subr.mxu0 0.0
        %2215 = vmatpush1.msra.mxu0 %v676
        %2216 = vmatprep.subr.mxu0 0.0
        %2217 = vmatpush1.msra.mxu0 %v679
        %2218 = vmatprep.subr.mxu0 0.0
        %2219 = vmatpush1.msra.mxu0 %v682
        %2220 = vmatprep.subr.mxu0 0.0
        %2221 = vmatpush1.msra.mxu0 %v685
        %2222 = vmatprep.subr.mxu0 0.0
        %2223 = vmatpush1.msra.mxu0 %v688
        %2224 = vmatprep.subr.mxu0 0.0
        %2225 = vmatpush1.msra.mxu0 %v691
        %2226 = vmatprep.subr.mxu0 0.0
        %2227 = vmatpush1.msra.mxu0 %v694
        %2228 = vmatprep.subr.mxu0 0.0
        %2229 = vmatpush1.msra.mxu0 %v697
        %2230 = vmatprep.subr.mxu0 0.0
        %2231 = vmatpush1.msra.mxu0 %v700
        %2232 = vmatprep.subr.mxu0 0.0
        %2233 = vmatpush1.msra.mxu0 %v703
        %2234 = vmatprep.subr.mxu0 0.0
        %2235 = vmatpush1.msra.mxu0 %v706
        %2236 = vmatprep.subr.mxu0 0.0
        %2237 = vmatpush1.msra.mxu0 %v709
        %2238 = vmatprep.subr.mxu0 0.0
        %2239 = vmatpush1.msra.mxu0 %v712
        %2240 = vmatprep.subr.mxu0 0.0
        %2241 = vmatpush1.msra.mxu0 %v715
        %2242 = vmatprep.subr.mxu0 0.0
        %2243 = vmatpush1.msra.mxu0 %v718
        %2244 = vmatprep.subr.mxu0 0.0
        %2245 = vmatpush1.msra.mxu0 %v721
        %2246 = vmatprep.subr.mxu0 0.0
        %2247 = vmatpush1.msra.mxu0 %v724
        %2248 = vmatprep.subr.mxu0 0.0
        %2249 = vmatpush1.msra.mxu0 %v727
        %2250 = vmatprep.subr.mxu0 0.0
        %2251 = vmatpush1.msra.mxu0 %v730
        %2252 = vmatprep.subr.mxu0 0.0
        %2253 = vmatpush1.msra.mxu0 %v733
        %2254 = vmatprep.subr.mxu0 0.0
        %2255 = vmatpush1.msra.mxu0 %v736
        %2256 = vmatprep.subr.mxu0 0.0
        %2257 = vmatpush1.msra.mxu0 %v739
        %2258 = vmatprep.subr.mxu0 0.0
        %2259 = vmatpush1.msra.mxu0 %v742
        %2260 = vmatprep.subr.mxu0 0.0
        %2261 = vmatpush1.msra.mxu0 %v745
        %2262 = vmatprep.subr.mxu0 0.0
        %2263 = vmatpush1.msra.mxu0 %v748
        %2264 = vmatprep.subr.mxu0 0.0
        %2265 = vmatpush1.msra.mxu0 %v751
        %2266 = vmatprep.subr.mxu0 0.0
        %2267 = vmatpush1.msra.mxu0 %v754
        %2268 = vmatprep.subr.mxu0 0.0
        %2269 = vmatpush1.msra.mxu0 %v757
        %2270 = vmatprep.subr.mxu0 0.0
        %2271 = vmatpush1.msra.mxu0 %v760
        %2272 = vmatprep.subr.mxu0 0.0
        %2273 = vmatpush1.msra.mxu0 %v763
        %2274 = vmatprep.subr.mxu0 0.0
        %2275 = vmatpush1.msra.mxu0 %v766
        %2276 = vmatprep.mubr.f32.mxu0 %v244
        %2277 = vmatmul.mubr.f32.gmra.mrb[0].mxu0 %v243
        %v2278 = vpop.f32.mrb[0].mxu0
        %v2279 = vadd.f32 %v2014, %v2278
        %v2280 = vpop.f32.mrb[0].mxu0
        %2281 = vmatprep.mubr.f32.mxu0 %v250
        %2282 = vmatmul.mubr.f32.gmra.mrb[0].mxu0 %v249
        %v2283 = vpop.f32.mrb[0].mxu0
        %v2284 = vadd.f32 %v2019, %v2283
        %v2285 = vpop.f32.mrb[0].mxu0
        %2286 = vmatprep.mubr.f32.mxu0 %v256
        %2287 = vmatmul.mubr.f32.gmra.mrb[0].mxu0 %v255
        %v2288 = vpop.f32.mrb[0].mxu0
        %v2289 = vadd.f32 %v2024, %v2288
        %v2290 = vpop.f32.mrb[0].mxu0
        %2291 = vmatprep.mubr.f32.mxu0 %v262
        %2292 = vmatmul.mubr.f32.gmra.mrb[0].mxu0 %v261
        %v2293 = vpop.f32.mrb[0].mxu0
        %v2294 = vadd.f32 %v2029, %v2293
        %v2295 = vpop.f32.mrb[0].mxu0
        %2296 = vmatprep.mubr.f32.mxu0 %v268
        %2297 = vmatmul.mubr.f32.gmra.mrb[0].mxu0 %v267
        %v2298 = vpop.f32.mrb[0].mxu0
        %v2299 = vadd.f32 %v2034, %v2298
        %v2300 = vpop.f32.mrb[0].mxu0
        %2301 = vmatprep.mubr.f32.mxu0 %v274
        %2302 = vmatmul.mubr.f32.gmra.mrb[0].mxu0 %v273
        %v2303 = vpop.f32.mrb[0].mxu0
        %v2304 = vadd.f32 %v2039, %v2303
        %v2305 = vpop.f32.mrb[0].mxu0
        %2306 = vmatprep.mubr.f32.mxu0 %v280
        %2307 = vmatmul.mubr.f32.gmra.mrb[0].mxu0 %v279
        %v2308 = vpop.f32.mrb[0].mxu0
        %v2309 = vadd.f32 %v2044, %v2308
        %v2310 = vpop.f32.mrb[0].mxu0
        %2311 = vmatprep.mubr.f32.mxu0 %v286
        %2312 = vmatmul.mubr.f32.gmra.mrb[0].mxu0 %v285
        %v2313 = vpop.f32.mrb[0].mxu0
        %v2314 = vadd.f32 %v2049, %v2313
        %v2315 = vpop.f32.mrb[0].mxu0
        %2316 = vmatprep.mubr.f32.mxu0 %v292
        %2317 = vmatmul.mubr.f32.gmra.mrb[0].mxu0 %v291
        %v2318 = vpop.f32.mrb[0].mxu0
        %v2319 = vadd.f32 %v2054, %v2318
        %v2320 = vpop.f32.mrb[0].mxu0
        %2321 = vmatprep.mubr.f32.mxu0 %v298
        %2322 = vmatmul.mubr.f32.gmra.mrb[0].mxu0 %v297
        %v2323 = vpop.f32.mrb[0].mxu0
        %v2324 = vadd.f32 %v2059, %v2323
        %v2325 = vpop.f32.mrb[0].mxu0
        %2326 = vmatprep.mubr.f32.mxu0 %v304
        %2327 = vmatmul.mubr.f32.gmra.mrb[0].mxu0 %v303
        %v2328 = vpop.f32.mrb[0].mxu0
        %v2329 = vadd.f32 %v2064, %v2328
        %v2330 = vpop.f32.mrb[0].mxu0
        %2331 = vmatprep.mubr.f32.mxu0 %v310
        %2332 = vmatmul.mubr.f32.gmra.mrb[0].mxu0 %v309
        %v2333 = vpop.f32.mrb[0].mxu0
        %v2334 = vadd.f32 %v2069, %v2333
        %v2335 = vpop.f32.mrb[0].mxu0
        %2336 = vmatprep.mubr.f32.mxu0 %v316
        %2337 = vmatmul.mubr.f32.gmra.mrb[0].mxu0 %v315
        %v2338 = vpop.f32.mrb[0].mxu0
        %v2339 = vadd.f32 %v2074, %v2338
        %v2340 = vpop.f32.mrb[0].mxu0
        %2341 = vmatprep.mubr.f32.mxu0 %v322
        %2342 = vmatmul.mubr.f32.gmra.mrb[0].mxu0 %v321
        %v2343 = vpop.f32.mrb[0].mxu0
        %v2344 = vadd.f32 %v2079, %v2343
        %v2345 = vpop.f32.mrb[0].mxu0
        %2346 = vmatprep.mubr.f32.mxu0 %v328
        %2347 = vmatmul.mubr.f32.gmra.mrb[0].mxu0 %v327
        %v2348 = vpop.f32.mrb[0].mxu0
        %v2349 = vadd.f32 %v2084, %v2348
        %v2350 = vpop.f32.mrb[0].mxu0
        %2351 = vmatprep.mubr.f32.mxu0 %v334
        %2352 = vmatmul.mubr.f32.gmra.mrb[0].mxu0 %v333
        %v2353 = vpop.f32.mrb[0].mxu0
        %v2354 = vadd.f32 %v2089, %v2353
        %v2355 = vpop.f32.mrb[0].mxu0
        %2356 = vmatprep.mubr.f32.mxu0 %v340
        %2357 = vmatmul.mubr.f32.gmra.mrb[0].mxu0 %v339
        %v2358 = vpop.f32.mrb[0].mxu0
        %v2359 = vadd.f32 %v2094, %v2358
        %v2360 = vpop.f32.mrb[0].mxu0
        %2361 = vmatprep.mubr.f32.mxu0 %v346
        %2362 = vmatmul.mubr.f32.gmra.mrb[0].mxu0 %v345
        %v2363 = vpop.f32.mrb[0].mxu0
        %v2364 = vadd.f32 %v2099, %v2363
        %v2365 = vpop.f32.mrb[0].mxu0
        %2366 = vmatprep.mubr.f32.mxu0 %v352
        %2367 = vmatmul.mubr.f32.gmra.mrb[0].mxu0 %v351
        %v2368 = vpop.f32.mrb[0].mxu0
        %v2369 = vadd.f32 %v2104, %v2368
        %v2370 = vpop.f32.mrb[0].mxu0
        %2371 = vmatprep.mubr.f32.mxu0 %v358
        %2372 = vmatmul.mubr.f32.gmra.mrb[0].mxu0 %v357
        %v2373 = vpop.f32.mrb[0].mxu0
        %v2374 = vadd.f32 %v2109, %v2373
        %v2375 = vpop.f32.mrb[0].mxu0
        %2376 = vmatprep.mubr.f32.mxu0 %v364
        %2377 = vmatmul.mubr.f32.gmra.mrb[0].mxu0 %v363
        %v2378 = vpop.f32.mrb[0].mxu0
        %v2379 = vadd.f32 %v2114, %v2378
        %v2380 = vpop.f32.mrb[0].mxu0
        %2381 = vmatprep.mubr.f32.mxu0 %v370
        %2382 = vmatmul.mubr.f32.gmra.mrb[0].mxu0 %v369
        %v2383 = vpop.f32.mrb[0].mxu0
        %v2384 = vadd.f32 %v2119, %v2383
        %v2385 = vpop.f32.mrb[0].mxu0
        %2386 = vmatprep.mubr.f32.mxu0 %v376
        %2387 = vmatmul.mubr.f32.gmra.mrb[0].mxu0 %v375
        %v2388 = vpop.f32.mrb[0].mxu0
        %v2389 = vadd.f32 %v2124, %v2388
        %v2390 = vpop.f32.mrb[0].mxu0
        %2391 = vmatprep.mubr.f32.mxu0 %v382
        %2392 = vmatmul.mubr.f32.gmra.mrb[0].mxu0 %v381
        %v2393 = vpop.f32.mrb[0].mxu0
        %v2394 = vadd.f32 %v2129, %v2393
        %v2395 = vpop.f32.mrb[0].mxu0
        %2396 = vmatprep.mubr.f32.mxu0 %v388
        %2397 = vmatmul.mubr.f32.gmra.mrb[0].mxu0 %v387
        %v2398 = vpop.f32.mrb[0].mxu0
        %v2399 = vadd.f32 %v2134, %v2398
        %v2400 = vpop.f32.mrb[0].mxu0
        %2401 = vmatprep.mubr.f32.mxu0 %v394
        %2402 = vmatmul.mubr.f32.gmra.mrb[0].mxu0 %v393
        %v2403 = vpop.f32.mrb[0].mxu0
        %v2404 = vadd.f32 %v2139, %v2403
        %v2405 = vpop.f32.mrb[0].mxu0
        %2406 = vmatprep.mubr.f32.mxu0 %v400
        %2407 = vmatmul.mubr.f32.gmra.mrb[0].mxu0 %v399
        %v2408 = vpop.f32.mrb[0].mxu0
        %v2409 = vadd.f32 %v2144, %v2408
        %v2410 = vpop.f32.mrb[0].mxu0
        %2411 = vmatprep.mubr.f32.mxu0 %v406
        %2412 = vmatmul.mubr.f32.gmra.mrb[0].mxu0 %v405
        %v2413 = vpop.f32.mrb[0].mxu0
        %v2414 = vadd.f32 %v2149, %v2413
        %v2415 = vpop.f32.mrb[0].mxu0
        %2416 = vmatprep.mubr.f32.mxu0 %v412
        %2417 = vmatmul.mubr.f32.gmra.mrb[0].mxu0 %v411
        %v2418 = vpop.f32.mrb[0].mxu0
        %v2419 = vadd.f32 %v2154, %v2418
        %v2420 = vpop.f32.mrb[0].mxu0
        %2421 = vmatprep.mubr.f32.mxu0 %v418
        %2422 = vmatmul.mubr.f32.gmra.mrb[0].mxu0 %v417
        %v2423 = vpop.f32.mrb[0].mxu0
        %v2424 = vadd.f32 %v2159, %v2423
        %v2425 = vpop.f32.mrb[0].mxu0
        %2426 = vmatprep.mubr.f32.mxu0 %v424
        %2427 = vmatmul.mubr.f32.gmra.mrb[0].mxu0 %v423
        %v2428 = vpop.f32.mrb[0].mxu0
        %v2429 = vadd.f32 %v2164, %v2428
        %v2430 = vpop.f32.mrb[0].mxu0
        %2431 = vmatprep.mubr.f32.mxu0 %v430
        %2432 = vmatmul.mubr.f32.gmra.mrb[0].mxu0 %v429
        %v2433 = vpop.f32.mrb[0].mxu0
        %v2434 = vadd.f32 %v2169, %v2433
        %v2435 = vpop.f32.mrb[0].mxu0
        %2436 = vmatprep.mubr.f32.mxu0 %v436
        %2437 = vmatmul.mubr.f32.gmra.mrb[0].mxu0 %v435
        %v2438 = vpop.f32.mrb[0].mxu0
        %v2439 = vadd.f32 %v2174, %v2438
        %v2440 = vpop.f32.mrb[0].mxu0
        %2441 = vmatprep.mubr.f32.mxu0 %v442
        %2442 = vmatmul.mubr.f32.gmra.mrb[0].mxu0 %v441
        %v2443 = vpop.f32.mrb[0].mxu0
        %v2444 = vadd.f32 %v2179, %v2443
        %v2445 = vpop.f32.mrb[0].mxu0
        %2446 = vmatprep.mubr.f32.mxu0 %v448
        %2447 = vmatmul.mubr.f32.gmra.mrb[0].mxu0 %v447
        %v2448 = vpop.f32.mrb[0].mxu0
        %v2449 = vadd.f32 %v2184, %v2448
        %v2450 = vpop.f32.mrb[0].mxu0
        %2451 = vmatprep.mubr.f32.mxu0 %v454
        %2452 = vmatmul.mubr.f32.gmra.mrb[0].mxu0 %v453
        %v2453 = vpop.f32.mrb[0].mxu0
        %v2454 = vadd.f32 %v2189, %v2453
        %v2455 = vpop.f32.mrb[0].mxu0
        %2456 = vmatprep.mubr.f32.mxu0 %v460
        %2457 = vmatmul.mubr.f32.gmra.mrb[0].mxu0 %v459
        %v2458 = vpop.f32.mrb[0].mxu0
        %v2459 = vadd.f32 %v2194, %v2458
        %v2460 = vpop.f32.mrb[0].mxu0
        %2461 = vmatprep.mubr.f32.mxu0 %v466
        %2462 = vmatmul.mubr.f32.gmra.mrb[0].mxu0 %v465
        %v2463 = vpop.f32.mrb[0].mxu0
        %v2464 = vadd.f32 %v2199, %v2463
        %v2465 = vpop.f32.mrb[0].mxu0
        %2466 = vmatprep.mubr.f32.mxu0 %v472
        %2467 = vmatmul.mubr.f32.gmra.mrb[0].mxu0 %v471
        %v2468 = vpop.f32.mrb[0].mxu0
        %v2469 = vadd.f32 %v2204, %v2468
        %v2470 = vpop.f32.mrb[0].mxu0
        %2471 = vmatprep.mubr.f32.mxu0 %v478
        %2472 = vmatmul.mubr.f32.gmra.mrb[0].mxu0 %v477
        %v2473 = vpop.f32.mrb[0].mxu0
        %v2474 = vadd.f32 %v2209, %v2473
        %v2475 = vpop.f32.mrb[0].mxu0
        %2476 = vdwg.mxu0
        %p2477 = scmp.eq.s32.totalorder %s29, 0
        // Predicated region
        $region37: #{tpu_custom_call.1} parent=27 // pred_check
          %p2478 = pneg %p2477
        $region38: #{tpu_custom_call.1} parent=27 // pred_check_branch
          %2480 = sbr.rel (%p2478) target = $region40
        $region39: #{tpu_custom_call.1} parent=27 // pred_region
          %2481 = vst [vmem:[#allocation2] sm:$0xff] %v1444
          %2482 = vst [vmem:[#allocation2 + $0x8] sm:$0xff] %v1446
          %2483 = vst [vmem:[#allocation2 + $0x10] sm:$0xff] %v2279
          %2484 = vst [vmem:[#allocation2 + $0x18] sm:$0xff] %v1450
          %2485 = vst [vmem:[#allocation2 + $0x20] sm:$0xff] %v1452
          %2486 = vst [vmem:[#allocation2 + $0x28] sm:$0xff] %v2284
          %2487 = vst [vmem:[#allocation2 + $0x30] sm:$0xff] %v1456
          %2488 = vst [vmem:[#allocation2 + $0x38] sm:$0xff] %v1458
          %2489 = vst [vmem:[#allocation2 + $0x40] sm:$0xff] %v2289
          %2490 = vst [vmem:[#allocation2 + $0x48] sm:$0xff] %v1462
          %2491 = vst [vmem:[#allocation2 + $0x50] sm:$0xff] %v1464
          %2492 = vst [vmem:[#allocation2 + $0x58] sm:$0xff] %v2294
          %2493 = vst [vmem:[#allocation2 + $0x60] sm:$0xff] %v1468
          %2494 = vst [vmem:[#allocation2 + $0x68] sm:$0xff] %v1470
          %2495 = vst [vmem:[#allocation2 + $0x70] sm:$0xff] %v2299
          %2496 = vst [vmem:[#allocation2 + $0x78] sm:$0xff] %v1474
          %2497 = vst [vmem:[#allocation2 + $0x80] sm:$0xff] %v1476
          %2498 = vst [vmem:[#allocation2 + $0x88] sm:$0xff] %v2304
          %2499 = vst [vmem:[#allocation2 + $0x90] sm:$0xff] %v1480
          %2500 = vst [vmem:[#allocation2 + $0x98] sm:$0xff] %v1482
          %2501 = vst [vmem:[#allocation2 + $0xa0] sm:$0xff] %v2309
          %2502 = vst [vmem:[#allocation2 + $0xa8] sm:$0xff] %v1486
          %2503 = vst [vmem:[#allocation2 + $0xb0] sm:$0xff] %v1488
          %2504 = vst [vmem:[#allocation2 + $0xb8] sm:$0xff] %v2314
          %2505 = vst [vmem:[#allocation2 + $0xc0] sm:$0xff] %v1492
          %2506 = vst [vmem:[#allocation2 + $0xc8] sm:$0xff] %v1494
          %2507 = vst [vmem:[#allocation2 + $0xd0] sm:$0xff] %v2319
          %2508 = vst [vmem:[#allocation2 + $0xd8] sm:$0xff] %v1498
          %2509 = vst [vmem:[#allocation2 + $0xe0] sm:$0xff] %v1500
          %2510 = vst [vmem:[#allocation2 + $0xe8] sm:$0xff] %v2324
          %2511 = vst [vmem:[#allocation2 + $0xf0] sm:$0xff] %v1504
          %2512 = vst [vmem:[#allocation2 + $0xf8] sm:$0xff] %v1506
          %2513 = vst [vmem:[#allocation2 + $0x100] sm:$0xff] %v2329
          %2514 = vst [vmem:[#allocation2 + $0x108] sm:$0xff] %v1510
          %2515 = vst [vmem:[#allocation2 + $0x110] sm:$0xff] %v1512
          %2516 = vst [vmem:[#allocation2 + $0x118] sm:$0xff] %v2334
          %2517 = vst [vmem:[#allocation2 + $0x120] sm:$0xff] %v1516
          %2518 = vst [vmem:[#allocation2 + $0x128] sm:$0xff] %v1518
          %2519 = vst [vmem:[#allocation2 + $0x130] sm:$0xff] %v2339
          %2520 = vst [vmem:[#allocation2 + $0x138] sm:$0xff] %v1522
          %2521 = vst [vmem:[#allocation2 + $0x140] sm:$0xff] %v1524
          %2522 = vst [vmem:[#allocation2 + $0x148] sm:$0xff] %v2344
          %2523 = vst [vmem:[#allocation2 + $0x150] sm:$0xff] %v1528
          %2524 = vst [vmem:[#allocation2 + $0x158] sm:$0xff] %v1530
          %2525 = vst [vmem:[#allocation2 + $0x160] sm:$0xff] %v2349
          %2526 = vst [vmem:[#allocation2 + $0x168] sm:$0xff] %v1534
          %2527 = vst [vmem:[#allocation2 + $0x170] sm:$0xff] %v1536
          %2528 = vst [vmem:[#allocation2 + $0x178] sm:$0xff] %v2354
          %2529 = vst [vmem:[#allocation2 + $0x180] sm:$0xff] %v1540
          %2530 = vst [vmem:[#allocation2 + $0x188] sm:$0xff] %v1542
          %2531 = vst [vmem:[#allocation2 + $0x190] sm:$0xff] %v2359
          %2532 = vst [vmem:[#allocation2 + $0x198] sm:$0xff] %v1546
          %2533 = vst [vmem:[#allocation2 + $0x1a0] sm:$0xff] %v1548
          %2534 = vst [vmem:[#allocation2 + $0x1a8] sm:$0xff] %v2364
          %2535 = vst [vmem:[#allocation2 + $0x1b0] sm:$0xff] %v1552
          %2536 = vst [vmem:[#allocation2 + $0x1b8] sm:$0xff] %v1554
          %2537 = vst [vmem:[#allocation2 + $0x1c0] sm:$0xff] %v2369
          %2538 = vst [vmem:[#allocation2 + $0x1c8] sm:$0xff] %v1558
          %2539 = vst [vmem:[#allocation2 + $0x1d0] sm:$0xff] %v1560
          %2540 = vst [vmem:[#allocation2 + $0x1d8] sm:$0xff] %v2374
          %2541 = vst [vmem:[#allocation2 + $0x1e0] sm:$0xff] %v1564
          %2542 = vst [vmem:[#allocation2 + $0x1e8] sm:$0xff] %v1566
          %2543 = vst [vmem:[#allocation2 + $0x1f0] sm:$0xff] %v2379
          %2544 = vst [vmem:[#allocation2 + $0x1f8] sm:$0xff] %v1570
          %2545 = vst [vmem:[#allocation2 + $0x200] sm:$0xff] %v1572
          %2546 = vst [vmem:[#allocation2 + $0x208] sm:$0xff] %v2384
          %2547 = vst [vmem:[#allocation2 + $0x210] sm:$0xff] %v1576
          %2548 = vst [vmem:[#allocation2 + $0x218] sm:$0xff] %v1578
          %2549 = vst [vmem:[#allocation2 + $0x220] sm:$0xff] %v2389
          %2550 = vst [vmem:[#allocation2 + $0x228] sm:$0xff] %v1582
          %2551 = vst [vmem:[#allocation2 + $0x230] sm:$0xff] %v1584
          %2552 = vst [vmem:[#allocation2 + $0x238] sm:$0xff] %v2394
          %2553 = vst [vmem:[#allocation2 + $0x240] sm:$0xff] %v1588
          %2554 = vst [vmem:[#allocation2 + $0x248] sm:$0xff] %v1590
          %2555 = vst [vmem:[#allocation2 + $0x250] sm:$0xff] %v2399
          %2556 = vst [vmem:[#allocation2 + $0x258] sm:$0xff] %v1594
          %2557 = vst [vmem:[#allocation2 + $0x260] sm:$0xff] %v1596
          %2558 = vst [vmem:[#allocation2 + $0x268] sm:$0xff] %v2404
          %2559 = vst [vmem:[#allocation2 + $0x270] sm:$0xff] %v1600
          %2560 = vst [vmem:[#allocation2 + $0x278] sm:$0xff] %v1602
          %2561 = vst [vmem:[#allocation2 + $0x280] sm:$0xff] %v2409
          %2562 = vst [vmem:[#allocation2 + $0x288] sm:$0xff] %v1606
          %2563 = vst [vmem:[#allocation2 + $0x290] sm:$0xff] %v1608
          %2564 = vst [vmem:[#allocation2 + $0x298] sm:$0xff] %v2414
          %2565 = vst [vmem:[#allocation2 + $0x2a0] sm:$0xff] %v1612
          %2566 = vst [vmem:[#allocation2 + $0x2a8] sm:$0xff] %v1614
          %2567 = vst [vmem:[#allocation2 + $0x2b0] sm:$0xff] %v2419
          %2568 = vst [vmem:[#allocation2 + $0x2b8] sm:$0xff] %v1618
          %2569 = vst [vmem:[#allocation2 + $0x2c0] sm:$0xff] %v1620
          %2570 = vst [vmem:[#allocation2 + $0x2c8] sm:$0xff] %v2424
          %2571 = vst [vmem:[#allocation2 + $0x2d0] sm:$0xff] %v1624
          %2572 = vst [vmem:[#allocation2 + $0x2d8] sm:$0xff] %v1626
          %2573 = vst [vmem:[#allocation2 + $0x2e0] sm:$0xff] %v2429
          %2574 = vst [vmem:[#allocation2 + $0x2e8] sm:$0xff] %v1630
          %2575 = vst [vmem:[#allocation2 + $0x2f0] sm:$0xff] %v1632
          %2576 = vst [vmem:[#allocation2 + $0x2f8] sm:$0xff] %v2434
          %2577 = vst [vmem:[#allocation2 + $0x300] sm:$0xff] %v1636
          %2578 = vst [vmem:[#allocation2 + $0x308] sm:$0xff] %v1638
          %2579 = vst [vmem:[#allocation2 + $0x310] sm:$0xff] %v2439
          %2580 = vst [vmem:[#allocation2 + $0x318] sm:$0xff] %v1642
          %2581 = vst [vmem:[#allocation2 + $0x320] sm:$0xff] %v1644
          %2582 = vst [vmem:[#allocation2 + $0x328] sm:$0xff] %v2444
          %2583 = vst [vmem:[#allocation2 + $0x330] sm:$0xff] %v1648
          %2584 = vst [vmem:[#allocation2 + $0x338] sm:$0xff] %v1650
          %2585 = vst [vmem:[#allocation2 + $0x340] sm:$0xff] %v2449
          %2586 = vst [vmem:[#allocation2 + $0x348] sm:$0xff] %v1654
          %2587 = vst [vmem:[#allocation2 + $0x350] sm:$0xff] %v1656
          %2588 = vst [vmem:[#allocation2 + $0x358] sm:$0xff] %v2454
          %2589 = vst [vmem:[#allocation2 + $0x360] sm:$0xff] %v1660
          %2590 = vst [vmem:[#allocation2 + $0x368] sm:$0xff] %v1662
          %2591 = vst [vmem:[#allocation2 + $0x370] sm:$0xff] %v2459
          %2592 = vst [vmem:[#allocation2 + $0x378] sm:$0xff] %v1666
          %2593 = vst [vmem:[#allocation2 + $0x380] sm:$0xff] %v1668
          %2594 = vst [vmem:[#allocation2 + $0x388] sm:$0xff] %v2464
          %2595 = vst [vmem:[#allocation2 + $0x390] sm:$0xff] %v1672
          %2596 = vst [vmem:[#allocation2 + $0x398] sm:$0xff] %v1674
          %2597 = vst [vmem:[#allocation2 + $0x3a0] sm:$0xff] %v2469
          %2598 = vst [vmem:[#allocation2 + $0x3a8] sm:$0xff] %v1678
          %2599 = vst [vmem:[#allocation2 + $0x3b0] sm:$0xff] %v1680
          %2600 = vst [vmem:[#allocation2 + $0x3b8] sm:$0xff] %v2474
        $region40: #{tpu_custom_call.1} parent=27 // pred_fallthru
          _
        %p2601 = scmp.gt.s32.totalorder %s29, 0
        // Predicated region
        $region41: #{tpu_custom_call.1} parent=27 // pred_check
          %p2602 = pneg %p2601
        $region42: #{tpu_custom_call.1} parent=27 // pred_check_branch
          %2604 = sbr.rel (%p2602) target = $region44
        $region43: #{tpu_custom_call.1} parent=27 // pred_region
          %v2605 = vld [vmem:[#allocation2] sm:$0xff]
          %v2606 = vld [vmem:[#allocation2 + $0x8] sm:$0xff]
          %v2607 = vld [vmem:[#allocation2 + $0x10] sm:$0xff]
          %v2608 = vld [vmem:[#allocation2 + $0x18] sm:$0xff]
          %v2609 = vld [vmem:[#allocation2 + $0x20] sm:$0xff]
          %v2610 = vld [vmem:[#allocation2 + $0x28] sm:$0xff]
          %v2611 = vld [vmem:[#allocation2 + $0x30] sm:$0xff]
          %v2612 = vld [vmem:[#allocation2 + $0x38] sm:$0xff]
          %v2613 = vld [vmem:[#allocation2 + $0x40] sm:$0xff]
          %v2614 = vld [vmem:[#allocation2 + $0x48] sm:$0xff]
          %v2615 = vld [vmem:[#allocation2 + $0x50] sm:$0xff]
          %v2616 = vld [vmem:[#allocation2 + $0x58] sm:$0xff]
          %v2617 = vld [vmem:[#allocation2 + $0x60] sm:$0xff]
          %v2618 = vld [vmem:[#allocation2 + $0x68] sm:$0xff]
          %v2619 = vld [vmem:[#allocation2 + $0x70] sm:$0xff]
          %v2620 = vld [vmem:[#allocation2 + $0x78] sm:$0xff]
          %v2621 = vld [vmem:[#allocation2 + $0x80] sm:$0xff]
          %v2622 = vld [vmem:[#allocation2 + $0x88] sm:$0xff]
          %v2623 = vld [vmem:[#allocation2 + $0x90] sm:$0xff]
          %v2624 = vld [vmem:[#allocation2 + $0x98] sm:$0xff]
          %v2625 = vld [vmem:[#allocation2 + $0xa0] sm:$0xff]
          %v2626 = vld [vmem:[#allocation2 + $0xa8] sm:$0xff]
          %v2627 = vld [vmem:[#allocation2 + $0xb0] sm:$0xff]
          %v2628 = vld [vmem:[#allocation2 + $0xb8] sm:$0xff]
          %v2629 = vld [vmem:[#allocation2 + $0xc0] sm:$0xff]
          %v2630 = vld [vmem:[#allocation2 + $0xc8] sm:$0xff]
          %v2631 = vld [vmem:[#allocation2 + $0xd0] sm:$0xff]
          %v2632 = vld [vmem:[#allocation2 + $0xd8] sm:$0xff]
          %v2633 = vld [vmem:[#allocation2 + $0xe0] sm:$0xff]
          %v2634 = vld [vmem:[#allocation2 + $0xe8] sm:$0xff]
          %v2635 = vld [vmem:[#allocation2 + $0xf0] sm:$0xff]
          %v2636 = vld [vmem:[#allocation2 + $0xf8] sm:$0xff]
          %v2637 = vld [vmem:[#allocation2 + $0x100] sm:$0xff]
          %v2638 = vld [vmem:[#allocation2 + $0x108] sm:$0xff]
          %v2639 = vld [vmem:[#allocation2 + $0x110] sm:$0xff]
          %v2640 = vld [vmem:[#allocation2 + $0x118] sm:$0xff]
          %v2641 = vld [vmem:[#allocation2 + $0x120] sm:$0xff]
          %v2642 = vld [vmem:[#allocation2 + $0x128] sm:$0xff]
          %v2643 = vld [vmem:[#allocation2 + $0x130] sm:$0xff]
          %v2644 = vld [vmem:[#allocation2 + $0x138] sm:$0xff]
          %v2645 = vld [vmem:[#allocation2 + $0x140] sm:$0xff]
          %v2646 = vld [vmem:[#allocation2 + $0x148] sm:$0xff]
          %v2647 = vld [vmem:[#allocation2 + $0x150] sm:$0xff]
          %v2648 = vld [vmem:[#allocation2 + $0x158] sm:$0xff]
          %v2649 = vld [vmem:[#allocation2 + $0x160] sm:$0xff]
          %v2650 = vld [vmem:[#allocation2 + $0x168] sm:$0xff]
          %v2651 = vld [vmem:[#allocation2 + $0x170] sm:$0xff]
          %v2652 = vld [vmem:[#allocation2 + $0x178] sm:$0xff]
          %v2653 = vld [vmem:[#allocation2 + $0x180] sm:$0xff]
          %v2654 = vld [vmem:[#allocation2 + $0x188] sm:$0xff]
          %v2655 = vld [vmem:[#allocation2 + $0x190] sm:$0xff]
          %v2656 = vld [vmem:[#allocation2 + $0x198] sm:$0xff]
          %v2657 = vld [vmem:[#allocation2 + $0x1a0] sm:$0xff]
          %v2658 = vld [vmem:[#allocation2 + $0x1a8] sm:$0xff]
          %v2659 = vld [vmem:[#allocation2 + $0x1b0] sm:$0xff]
          %v2660 = vld [vmem:[#allocation2 + $0x1b8] sm:$0xff]
          %v2661 = vld [vmem:[#allocation2 + $0x1c0] sm:$0xff]
          %v2662 = vld [vmem:[#allocation2 + $0x1c8] sm:$0xff]
          %v2663 = vld [vmem:[#allocation2 + $0x1d0] sm:$0xff]
          %v2664 = vld [vmem:[#allocation2 + $0x1d8] sm:$0xff]
          %v2665 = vld [vmem:[#allocation2 + $0x1e0] sm:$0xff]
          %v2666 = vld [vmem:[#allocation2 + $0x1e8] sm:$0xff]
          %v2667 = vld [vmem:[#allocation2 + $0x1f0] sm:$0xff]
          %v2668 = vld [vmem:[#allocation2 + $0x1f8] sm:$0xff]
          %v2669 = vld [vmem:[#allocation2 + $0x200] sm:$0xff]
          %v2670 = vld [vmem:[#allocation2 + $0x208] sm:$0xff]
          %v2671 = vld [vmem:[#allocation2 + $0x210] sm:$0xff]
          %v2672 = vld [vmem:[#allocation2 + $0x218] sm:$0xff]
          %v2673 = vld [vmem:[#allocation2 + $0x220] sm:$0xff]
          %v2674 = vld [vmem:[#allocation2 + $0x228] sm:$0xff]
          %v2675 = vld [vmem:[#allocation2 + $0x230] sm:$0xff]
          %v2676 = vld [vmem:[#allocation2 + $0x238] sm:$0xff]
          %v2677 = vld [vmem:[#allocation2 + $0x240] sm:$0xff]
          %v2678 = vld [vmem:[#allocation2 + $0x248] sm:$0xff]
          %v2679 = vld [vmem:[#allocation2 + $0x250] sm:$0xff]
          %v2680 = vld [vmem:[#allocation2 + $0x258] sm:$0xff]
          %v2681 = vld [vmem:[#allocation2 + $0x260] sm:$0xff]
          %v2682 = vld [vmem:[#allocation2 + $0x268] sm:$0xff]
          %v2683 = vld [vmem:[#allocation2 + $0x270] sm:$0xff]
          %v2684 = vld [vmem:[#allocation2 + $0x278] sm:$0xff]
          %v2685 = vld [vmem:[#allocation2 + $0x280] sm:$0xff]
          %v2686 = vld [vmem:[#allocation2 + $0x288] sm:$0xff]
          %v2687 = vld [vmem:[#allocation2 + $0x290] sm:$0xff]
          %v2688 = vld [vmem:[#allocation2 + $0x298] sm:$0xff]
          %v2689 = vld [vmem:[#allocation2 + $0x2a0] sm:$0xff]
          %v2690 = vld [vmem:[#allocation2 + $0x2a8] sm:$0xff]
          %v2691 = vld [vmem:[#allocation2 + $0x2b0] sm:$0xff]
          %v2692 = vld [vmem:[#allocation2 + $0x2b8] sm:$0xff]
          %v2693 = vld [vmem:[#allocation2 + $0x2c0] sm:$0xff]
          %v2694 = vld [vmem:[#allocation2 + $0x2c8] sm:$0xff]
          %v2695 = vld [vmem:[#allocation2 + $0x2d0] sm:$0xff]
          %v2696 = vld [vmem:[#allocation2 + $0x2d8] sm:$0xff]
          %v2697 = vld [vmem:[#allocation2 + $0x2e0] sm:$0xff]
          %v2698 = vld [vmem:[#allocation2 + $0x2e8] sm:$0xff]
          %v2699 = vld [vmem:[#allocation2 + $0x2f0] sm:$0xff]
          %v2700 = vld [vmem:[#allocation2 + $0x2f8] sm:$0xff]
          %v2701 = vld [vmem:[#allocation2 + $0x300] sm:$0xff]
          %v2702 = vld [vmem:[#allocation2 + $0x308] sm:$0xff]
          %v2703 = vld [vmem:[#allocation2 + $0x310] sm:$0xff]
          %v2704 = vld [vmem:[#allocation2 + $0x318] sm:$0xff]
          %v2705 = vld [vmem:[#allocation2 + $0x320] sm:$0xff]
          %v2706 = vld [vmem:[#allocation2 + $0x328] sm:$0xff]
          %v2707 = vld [vmem:[#allocation2 + $0x330] sm:$0xff]
          %v2708 = vld [vmem:[#allocation2 + $0x338] sm:$0xff]
          %v2709 = vld [vmem:[#allocation2 + $0x340] sm:$0xff]
          %v2710 = vld [vmem:[#allocation2 + $0x348] sm:$0xff]
          %v2711 = vld [vmem:[#allocation2 + $0x350] sm:$0xff]
          %v2712 = vld [vmem:[#allocation2 + $0x358] sm:$0xff]
          %v2713 = vld [vmem:[#allocation2 + $0x360] sm:$0xff]
          %v2714 = vld [vmem:[#allocation2 + $0x368] sm:$0xff]
          %v2715 = vld [vmem:[#allocation2 + $0x370] sm:$0xff]
          %v2716 = vld [vmem:[#allocation2 + $0x378] sm:$0xff]
          %v2717 = vld [vmem:[#allocation2 + $0x380] sm:$0xff]
          %v2718 = vld [vmem:[#allocation2 + $0x388] sm:$0xff]
          %v2719 = vld [vmem:[#allocation2 + $0x390] sm:$0xff]
          %v2720 = vld [vmem:[#allocation2 + $0x398] sm:$0xff]
          %v2721 = vld [vmem:[#allocation2 + $0x3a0] sm:$0xff]
          %v2722 = vld [vmem:[#allocation2 + $0x3a8] sm:$0xff]
          %v2723 = vld [vmem:[#allocation2 + $0x3b0] sm:$0xff]
          %v2724 = vld [vmem:[#allocation2 + $0x3b8] sm:$0xff]
          %v2725 = vadd.f32 %v2605, %v1444
          %v2726 = vadd.f32 %v2606, %v1446
          %v2727 = vadd.f32 %v2607, %v2279
          %v2728 = vadd.f32 %v2608, %v1450
          %v2729 = vadd.f32 %v2609, %v1452
          %v2730 = vadd.f32 %v2610, %v2284
          %v2731 = vadd.f32 %v2611, %v1456
          %v2732 = vadd.f32 %v2612, %v1458
          %v2733 = vadd.f32 %v2613, %v2289
          %v2734 = vadd.f32 %v2614, %v1462
          %v2735 = vadd.f32 %v2615, %v1464
          %v2736 = vadd.f32 %v2616, %v2294
          %v2737 = vadd.f32 %v2617, %v1468
          %v2738 = vadd.f32 %v2618, %v1470
          %v2739 = vadd.f32 %v2619, %v2299
          %v2740 = vadd.f32 %v2620, %v1474
          %v2741 = vadd.f32 %v2621, %v1476
          %v2742 = vadd.f32 %v2622, %v2304
          %v2743 = vadd.f32 %v2623, %v1480
          %v2744 = vadd.f32 %v2624, %v1482
          %v2745 = vadd.f32 %v2625, %v2309
          %v2746 = vadd.f32 %v2626, %v1486
          %v2747 = vadd.f32 %v2627, %v1488
          %v2748 = vadd.f32 %v2628, %v2314
          %v2749 = vadd.f32 %v2629, %v1492
          %v2750 = vadd.f32 %v2630, %v1494
          %v2751 = vadd.f32 %v2631, %v2319
          %v2752 = vadd.f32 %v2632, %v1498
          %v2753 = vadd.f32 %v2633, %v1500
          %v2754 = vadd.f32 %v2634, %v2324
          %v2755 = vadd.f32 %v2635, %v1504
          %v2756 = vadd.f32 %v2636, %v1506
          %v2757 = vadd.f32 %v2637, %v2329
          %v2758 = vadd.f32 %v2638, %v1510
          %v2759 = vadd.f32 %v2639, %v1512
          %v2760 = vadd.f32 %v2640, %v2334
          %v2761 = vadd.f32 %v2641, %v1516
          %v2762 = vadd.f32 %v2642, %v1518
          %v2763 = vadd.f32 %v2643, %v2339
          %v2764 = vadd.f32 %v2644, %v1522
          %v2765 = vadd.f32 %v2645, %v1524
          %v2766 = vadd.f32 %v2646, %v2344
          %v2767 = vadd.f32 %v2647, %v1528
          %v2768 = vadd.f32 %v2648, %v1530
          %v2769 = vadd.f32 %v2649, %v2349
          %v2770 = vadd.f32 %v2650, %v1534
          %v2771 = vadd.f32 %v2651, %v1536
          %v2772 = vadd.f32 %v2652, %v2354
          %v2773 = vadd.f32 %v2653, %v1540
          %v2774 = vadd.f32 %v2654, %v1542
          %v2775 = vadd.f32 %v2655, %v2359
          %v2776 = vadd.f32 %v2656, %v1546
          %v2777 = vadd.f32 %v2657, %v1548
          %v2778 = vadd.f32 %v2658, %v2364
          %v2779 = vadd.f32 %v2659, %v1552
          %v2780 = vadd.f32 %v2660, %v1554
          %v2781 = vadd.f32 %v2661, %v2369
          %v2782 = vadd.f32 %v2662, %v1558
          %v2783 = vadd.f32 %v2663, %v1560
          %v2784 = vadd.f32 %v2664, %v2374
          %v2785 = vadd.f32 %v2665, %v1564
          %v2786 = vadd.f32 %v2666, %v1566
          %v2787 = vadd.f32 %v2667, %v2379
          %v2788 = vadd.f32 %v2668, %v1570
          %v2789 = vadd.f32 %v2669, %v1572
          %v2790 = vadd.f32 %v2670, %v2384
          %v2791 = vadd.f32 %v2671, %v1576
          %v2792 = vadd.f32 %v2672, %v1578
          %v2793 = vadd.f32 %v2673, %v2389
          %v2794 = vadd.f32 %v2674, %v1582
          %v2795 = vadd.f32 %v2675, %v1584
          %v2796 = vadd.f32 %v2676, %v2394
          %v2797 = vadd.f32 %v2677, %v1588
          %v2798 = vadd.f32 %v2678, %v1590
          %v2799 = vadd.f32 %v2679, %v2399
          %v2800 = vadd.f32 %v2680, %v1594
          %v2801 = vadd.f32 %v2681, %v1596
          %v2802 = vadd.f32 %v2682, %v2404
          %v2803 = vadd.f32 %v2683, %v1600
          %v2804 = vadd.f32 %v2684, %v1602
          %v2805 = vadd.f32 %v2685, %v2409
          %v2806 = vadd.f32 %v2686, %v1606
          %v2807 = vadd.f32 %v2687, %v1608
          %v2808 = vadd.f32 %v2688, %v2414
          %v2809 = vadd.f32 %v2689, %v1612
          %v2810 = vadd.f32 %v2690, %v1614
          %v2811 = vadd.f32 %v2691, %v2419
          %v2812 = vadd.f32 %v2692, %v1618
          %v2813 = vadd.f32 %v2693, %v1620
          %v2814 = vadd.f32 %v2694, %v2424
          %v2815 = vadd.f32 %v2695, %v1624
          %v2816 = vadd.f32 %v2696, %v1626
          %v2817 = vadd.f32 %v2697, %v2429
          %v2818 = vadd.f32 %v2698, %v1630
          %v2819 = vadd.f32 %v2699, %v1632
          %v2820 = vadd.f32 %v2700, %v2434
          %v2821 = vadd.f32 %v2701, %v1636
          %v2822 = vadd.f32 %v2702, %v1638
          %v2823 = vadd.f32 %v2703, %v2439
          %v2824 = vadd.f32 %v2704, %v1642
          %v2825 = vadd.f32 %v2705, %v1644
          %v2826 = vadd.f32 %v2706, %v2444
          %v2827 = vadd.f32 %v2707, %v1648
          %v2828 = vadd.f32 %v2708, %v1650
          %v2829 = vadd.f32 %v2709, %v2449
          %v2830 = vadd.f32 %v2710, %v1654
          %v2831 = vadd.f32 %v2711, %v1656
          %v2832 = vadd.f32 %v2712, %v2454
          %v2833 = vadd.f32 %v2713, %v1660
          %v2834 = vadd.f32 %v2714, %v1662
          %v2835 = vadd.f32 %v2715, %v2459
          %v2836 = vadd.f32 %v2716, %v1666
          %v2837 = vadd.f32 %v2717, %v1668
          %v2838 = vadd.f32 %v2718, %v2464
          %v2839 = vadd.f32 %v2719, %v1672
          %v2840 = vadd.f32 %v2720, %v1674
          %v2841 = vadd.f32 %v2721, %v2469
          %v2842 = vadd.f32 %v2722, %v1678
          %v2843 = vadd.f32 %v2723, %v1680
          %v2844 = vadd.f32 %v2724, %v2474
          %2845 = vst [vmem:[#allocation2] sm:$0xff] %v2725
          %2846 = vst [vmem:[#allocation2 + $0x8] sm:$0xff] %v2726
          %2847 = vst [vmem:[#allocation2 + $0x10] sm:$0xff] %v2727
          %2848 = vst [vmem:[#allocation2 + $0x18] sm:$0xff] %v2728
          %2849 = vst [vmem:[#allocation2 + $0x20] sm:$0xff] %v2729
          %2850 = vst [vmem:[#allocation2 + $0x28] sm:$0xff] %v2730
          %2851 = vst [vmem:[#allocation2 + $0x30] sm:$0xff] %v2731
          %2852 = vst [vmem:[#allocation2 + $0x38] sm:$0xff] %v2732
          %2853 = vst [vmem:[#allocation2 + $0x40] sm:$0xff] %v2733
          %2854 = vst [vmem:[#allocation2 + $0x48] sm:$0xff] %v2734
          %2855 = vst [vmem:[#allocation2 + $0x50] sm:$0xff] %v2735
          %2856 = vst [vmem:[#allocation2 + $0x58] sm:$0xff] %v2736
          %2857 = vst [vmem:[#allocation2 + $0x60] sm:$0xff] %v2737
          %2858 = vst [vmem:[#allocation2 + $0x68] sm:$0xff] %v2738
          %2859 = vst [vmem:[#allocation2 + $0x70] sm:$0xff] %v2739
          %2860 = vst [vmem:[#allocation2 + $0x78] sm:$0xff] %v2740
          %2861 = vst [vmem:[#allocation2 + $0x80] sm:$0xff] %v2741
          %2862 = vst [vmem:[#allocation2 + $0x88] sm:$0xff] %v2742
          %2863 = vst [vmem:[#allocation2 + $0x90] sm:$0xff] %v2743
          %2864 = vst [vmem:[#allocation2 + $0x98] sm:$0xff] %v2744
          %2865 = vst [vmem:[#allocation2 + $0xa0] sm:$0xff] %v2745
          %2866 = vst [vmem:[#allocation2 + $0xa8] sm:$0xff] %v2746
          %2867 = vst [vmem:[#allocation2 + $0xb0] sm:$0xff] %v2747
          %2868 = vst [vmem:[#allocation2 + $0xb8] sm:$0xff] %v2748
          %2869 = vst [vmem:[#allocation2 + $0xc0] sm:$0xff] %v2749
          %2870 = vst [vmem:[#allocation2 + $0xc8] sm:$0xff] %v2750
          %2871 = vst [vmem:[#allocation2 + $0xd0] sm:$0xff] %v2751
          %2872 = vst [vmem:[#allocation2 + $0xd8] sm:$0xff] %v2752
          %2873 = vst [vmem:[#allocation2 + $0xe0] sm:$0xff] %v2753
          %2874 = vst [vmem:[#allocation2 + $0xe8] sm:$0xff] %v2754
          %2875 = vst [vmem:[#allocation2 + $0xf0] sm:$0xff] %v2755
          %2876 = vst [vmem:[#allocation2 + $0xf8] sm:$0xff] %v2756
          %2877 = vst [vmem:[#allocation2 + $0x100] sm:$0xff] %v2757
          %2878 = vst [vmem:[#allocation2 + $0x108] sm:$0xff] %v2758
          %2879 = vst [vmem:[#allocation2 + $0x110] sm:$0xff] %v2759
          %2880 = vst [vmem:[#allocation2 + $0x118] sm:$0xff] %v2760
          %2881 = vst [vmem:[#allocation2 + $0x120] sm:$0xff] %v2761
          %2882 = vst [vmem:[#allocation2 + $0x128] sm:$0xff] %v2762
          %2883 = vst [vmem:[#allocation2 + $0x130] sm:$0xff] %v2763
          %2884 = vst [vmem:[#allocation2 + $0x138] sm:$0xff] %v2764
          %2885 = vst [vmem:[#allocation2 + $0x140] sm:$0xff] %v2765
          %2886 = vst [vmem:[#allocation2 + $0x148] sm:$0xff] %v2766
          %2887 = vst [vmem:[#allocation2 + $0x150] sm:$0xff] %v2767
          %2888 = vst [vmem:[#allocation2 + $0x158] sm:$0xff] %v2768
          %2889 = vst [vmem:[#allocation2 + $0x160] sm:$0xff] %v2769
          %2890 = vst [vmem:[#allocation2 + $0x168] sm:$0xff] %v2770
          %2891 = vst [vmem:[#allocation2 + $0x170] sm:$0xff] %v2771
          %2892 = vst [vmem:[#allocation2 + $0x178] sm:$0xff] %v2772
          %2893 = vst [vmem:[#allocation2 + $0x180] sm:$0xff] %v2773
          %2894 = vst [vmem:[#allocation2 + $0x188] sm:$0xff] %v2774
          %2895 = vst [vmem:[#allocation2 + $0x190] sm:$0xff] %v2775
          %2896 = vst [vmem:[#allocation2 + $0x198] sm:$0xff] %v2776
          %2897 = vst [vmem:[#allocation2 + $0x1a0] sm:$0xff] %v2777
          %2898 = vst [vmem:[#allocation2 + $0x1a8] sm:$0xff] %v2778
          %2899 = vst [vmem:[#allocation2 + $0x1b0] sm:$0xff] %v2779
          %2900 = vst [vmem:[#allocation2 + $0x1b8] sm:$0xff] %v2780
          %2901 = vst [vmem:[#allocation2 + $0x1c0] sm:$0xff] %v2781
          %2902 = vst [vmem:[#allocation2 + $0x1c8] sm:$0xff] %v2782
          %2903 = vst [vmem:[#allocation2 + $0x1d0] sm:$0xff] %v2783
          %2904 = vst [vmem:[#allocation2 + $0x1d8] sm:$0xff] %v2784
          %2905 = vst [vmem:[#allocation2 + $0x1e0] sm:$0xff] %v2785
          %2906 = vst [vmem:[#allocation2 + $0x1e8] sm:$0xff] %v2786
          %2907 = vst [vmem:[#allocation2 + $0x1f0] sm:$0xff] %v2787
          %2908 = vst [vmem:[#allocation2 + $0x1f8] sm:$0xff] %v2788
          %2909 = vst [vmem:[#allocation2 + $0x200] sm:$0xff] %v2789
          %2910 = vst [vmem:[#allocation2 + $0x208] sm:$0xff] %v2790
          %2911 = vst [vmem:[#allocation2 + $0x210] sm:$0xff] %v2791
          %2912 = vst [vmem:[#allocation2 + $0x218] sm:$0xff] %v2792
          %2913 = vst [vmem:[#allocation2 + $0x220] sm:$0xff] %v2793
          %2914 = vst [vmem:[#allocation2 + $0x228] sm:$0xff] %v2794
          %2915 = vst [vmem:[#allocation2 + $0x230] sm:$0xff] %v2795
          %2916 = vst [vmem:[#allocation2 + $0x238] sm:$0xff] %v2796
          %2917 = vst [vmem:[#allocation2 + $0x240] sm:$0xff] %v2797
          %2918 = vst [vmem:[#allocation2 + $0x248] sm:$0xff] %v2798
          %2919 = vst [vmem:[#allocation2 + $0x250] sm:$0xff] %v2799
          %2920 = vst [vmem:[#allocation2 + $0x258] sm:$0xff] %v2800
          %2921 = vst [vmem:[#allocation2 + $0x260] sm:$0xff] %v2801
          %2922 = vst [vmem:[#allocation2 + $0x268] sm:$0xff] %v2802
          %2923 = vst [vmem:[#allocation2 + $0x270] sm:$0xff] %v2803
          %2924 = vst [vmem:[#allocation2 + $0x278] sm:$0xff] %v2804
          %2925 = vst [vmem:[#allocation2 + $0x280] sm:$0xff] %v2805
          %2926 = vst [vmem:[#allocation2 + $0x288] sm:$0xff] %v2806
          %2927 = vst [vmem:[#allocation2 + $0x290] sm:$0xff] %v2807
          %2928 = vst [vmem:[#allocation2 + $0x298] sm:$0xff] %v2808
          %2929 = vst [vmem:[#allocation2 + $0x2a0] sm:$0xff] %v2809
          %2930 = vst [vmem:[#allocation2 + $0x2a8] sm:$0xff] %v2810
          %2931 = vst [vmem:[#allocation2 + $0x2b0] sm:$0xff] %v2811
          %2932 = vst [vmem:[#allocation2 + $0x2b8] sm:$0xff] %v2812
          %2933 = vst [vmem:[#allocation2 + $0x2c0] sm:$0xff] %v2813
          %2934 = vst [vmem:[#allocation2 + $0x2c8] sm:$0xff] %v2814
          %2935 = vst [vmem:[#allocation2 + $0x2d0] sm:$0xff] %v2815
          %2936 = vst [vmem:[#allocation2 + $0x2d8] sm:$0xff] %v2816
          %2937 = vst [vmem:[#allocation2 + $0x2e0] sm:$0xff] %v2817
          %2938 = vst [vmem:[#allocation2 + $0x2e8] sm:$0xff] %v2818
          %2939 = vst [vmem:[#allocation2 + $0x2f0] sm:$0xff] %v2819
          %2940 = vst [vmem:[#allocation2 + $0x2f8] sm:$0xff] %v2820
          %2941 = vst [vmem:[#allocation2 + $0x300] sm:$0xff] %v2821
          %2942 = vst [vmem:[#allocation2 + $0x308] sm:$0xff] %v2822
          %2943 = vst [vmem:[#allocation2 + $0x310] sm:$0xff] %v2823
          %2944 = vst [vmem:[#allocation2 + $0x318] sm:$0xff] %v2824
          %2945 = vst [vmem:[#allocation2 + $0x320] sm:$0xff] %v2825
          %2946 = vst [vmem:[#allocation2 + $0x328] sm:$0xff] %v2826
          %2947 = vst [vmem:[#allocation2 + $0x330] sm:$0xff] %v2827
          %2948 = vst [vmem:[#allocation2 + $0x338] sm:$0xff] %v2828
          %2949 = vst [vmem:[#allocation2 + $0x340] sm:$0xff] %v2829
          %2950 = vst [vmem:[#allocation2 + $0x348] sm:$0xff] %v2830
          %2951 = vst [vmem:[#allocation2 + $0x350] sm:$0xff] %v2831
          %2952 = vst [vmem:[#allocation2 + $0x358] sm:$0xff] %v2832
          %2953 = vst [vmem:[#allocation2 + $0x360] sm:$0xff] %v2833
          %2954 = vst [vmem:[#allocation2 + $0x368] sm:$0xff] %v2834
          %2955 = vst [vmem:[#allocation2 + $0x370] sm:$0xff] %v2835
          %2956 = vst [vmem:[#allocation2 + $0x378] sm:$0xff] %v2836
          %2957 = vst [vmem:[#allocation2 + $0x380] sm:$0xff] %v2837
          %2958 = vst [vmem:[#allocation2 + $0x388] sm:$0xff] %v2838
          %2959 = vst [vmem:[#allocation2 + $0x390] sm:$0xff] %v2839
          %2960 = vst [vmem:[#allocation2 + $0x398] sm:$0xff] %v2840
          %2961 = vst [vmem:[#allocation2 + $0x3a0] sm:$0xff] %v2841
          %2962 = vst [vmem:[#allocation2 + $0x3a8] sm:$0xff] %v2842
          %2963 = vst [vmem:[#allocation2 + $0x3b0] sm:$0xff] %v2843
          %2964 = vst [vmem:[#allocation2 + $0x3b8] sm:$0xff] %v2844
        $region44: #{tpu_custom_call.1} parent=27 // pred_fallthru
          _
        %p2965 = scmp.eq.s32.totalorder %s29, 1
        // Predicated region
        $region45: #{tpu_custom_call.1} parent=27 // pred_check
          %p2966 = pneg %p2965
        $region46: #{tpu_custom_call.1} parent=27 // pred_check_branch
          %2968 = sbr.rel (%p2966) target = $region48
        $region47: #{tpu_custom_call.1} parent=27 // pred_region
          %v2969 = vld [vmem:[#allocation2] sm:$0xff]
          %v2970 = vld [vmem:[#allocation2 + $0x8] sm:$0xff]
          %v2971 = vld [vmem:[#allocation2 + $0x10] sm:$0xff]
          %v2972 = vld [vmem:[#allocation2 + $0x18] sm:$0xff]
          %v2973 = vld [vmem:[#allocation2 + $0x20] sm:$0xff]
          %v2974 = vld [vmem:[#allocation2 + $0x28] sm:$0xff]
          %v2975 = vld [vmem:[#allocation2 + $0x30] sm:$0xff]
          %v2976 = vld [vmem:[#allocation2 + $0x38] sm:$0xff]
          %v2977 = vld [vmem:[#allocation2 + $0x40] sm:$0xff]
          %v2978 = vld [vmem:[#allocation2 + $0x48] sm:$0xff]
          %v2979 = vld [vmem:[#allocation2 + $0x50] sm:$0xff]
          %v2980 = vld [vmem:[#allocation2 + $0x58] sm:$0xff]
          %v2981 = vld [vmem:[#allocation2 + $0x60] sm:$0xff]
          %v2982 = vld [vmem:[#allocation2 + $0x68] sm:$0xff]
          %v2983 = vld [vmem:[#allocation2 + $0x70] sm:$0xff]
          %v2984 = vld [vmem:[#allocation2 + $0x78] sm:$0xff]
          %v2985 = vld [vmem:[#allocation2 + $0x80] sm:$0xff]
          %v2986 = vld [vmem:[#allocation2 + $0x88] sm:$0xff]
          %v2987 = vld [vmem:[#allocation2 + $0x90] sm:$0xff]
          %v2988 = vld [vmem:[#allocation2 + $0x98] sm:$0xff]
          %v2989 = vld [vmem:[#allocation2 + $0xa0] sm:$0xff]
          %v2990 = vld [vmem:[#allocation2 + $0xa8] sm:$0xff]
          %v2991 = vld [vmem:[#allocation2 + $0xb0] sm:$0xff]
          %v2992 = vld [vmem:[#allocation2 + $0xb8] sm:$0xff]
          %v2993 = vld [vmem:[#allocation2 + $0xc0] sm:$0xff]
          %v2994 = vld [vmem:[#allocation2 + $0xc8] sm:$0xff]
          %v2995 = vld [vmem:[#allocation2 + $0xd0] sm:$0xff]
          %v2996 = vld [vmem:[#allocation2 + $0xd8] sm:$0xff]
          %v2997 = vld [vmem:[#allocation2 + $0xe0] sm:$0xff]
          %v2998 = vld [vmem:[#allocation2 + $0xe8] sm:$0xff]
          %v2999 = vld [vmem:[#allocation2 + $0xf0] sm:$0xff]
          %v3000 = vld [vmem:[#allocation2 + $0xf8] sm:$0xff]
          %v3001 = vld [vmem:[#allocation2 + $0x100] sm:$0xff]
          %v3002 = vld [vmem:[#allocation2 + $0x108] sm:$0xff]
          %v3003 = vld [vmem:[#allocation2 + $0x110] sm:$0xff]
          %v3004 = vld [vmem:[#allocation2 + $0x118] sm:$0xff]
          %v3005 = vld [vmem:[#allocation2 + $0x120] sm:$0xff]
          %v3006 = vld [vmem:[#allocation2 + $0x128] sm:$0xff]
          %v3007 = vld [vmem:[#allocation2 + $0x130] sm:$0xff]
          %v3008 = vld [vmem:[#allocation2 + $0x138] sm:$0xff]
          %v3009 = vld [vmem:[#allocation2 + $0x140] sm:$0xff]
          %v3010 = vld [vmem:[#allocation2 + $0x148] sm:$0xff]
          %v3011 = vld [vmem:[#allocation2 + $0x150] sm:$0xff]
          %v3012 = vld [vmem:[#allocation2 + $0x158] sm:$0xff]
          %v3013 = vld [vmem:[#allocation2 + $0x160] sm:$0xff]
          %v3014 = vld [vmem:[#allocation2 + $0x168] sm:$0xff]
          %v3015 = vld [vmem:[#allocation2 + $0x170] sm:$0xff]
          %v3016 = vld [vmem:[#allocation2 + $0x178] sm:$0xff]
          %v3017 = vld [vmem:[#allocation2 + $0x180] sm:$0xff]
          %v3018 = vld [vmem:[#allocation2 + $0x188] sm:$0xff]
          %v3019 = vld [vmem:[#allocation2 + $0x190] sm:$0xff]
          %v3020 = vld [vmem:[#allocation2 + $0x198] sm:$0xff]
          %v3021 = vld [vmem:[#allocation2 + $0x1a0] sm:$0xff]
          %v3022 = vld [vmem:[#allocation2 + $0x1a8] sm:$0xff]
          %v3023 = vld [vmem:[#allocation2 + $0x1b0] sm:$0xff]
          %v3024 = vld [vmem:[#allocation2 + $0x1b8] sm:$0xff]
          %v3025 = vld [vmem:[#allocation2 + $0x1c0] sm:$0xff]
          %v3026 = vld [vmem:[#allocation2 + $0x1c8] sm:$0xff]
          %v3027 = vld [vmem:[#allocation2 + $0x1d0] sm:$0xff]
          %v3028 = vld [vmem:[#allocation2 + $0x1d8] sm:$0xff]
          %v3029 = vld [vmem:[#allocation2 + $0x1e0] sm:$0xff]
          %v3030 = vld [vmem:[#allocation2 + $0x1e8] sm:$0xff]
          %v3031 = vld [vmem:[#allocation2 + $0x1f0] sm:$0xff]
          %v3032 = vld [vmem:[#allocation2 + $0x1f8] sm:$0xff]
          %v3033 = vld [vmem:[#allocation2 + $0x200] sm:$0xff]
          %v3034 = vld [vmem:[#allocation2 + $0x208] sm:$0xff]
          %v3035 = vld [vmem:[#allocation2 + $0x210] sm:$0xff]
          %v3036 = vld [vmem:[#allocation2 + $0x218] sm:$0xff]
          %v3037 = vld [vmem:[#allocation2 + $0x220] sm:$0xff]
          %v3038 = vld [vmem:[#allocation2 + $0x228] sm:$0xff]
          %v3039 = vld [vmem:[#allocation2 + $0x230] sm:$0xff]
          %v3040 = vld [vmem:[#allocation2 + $0x238] sm:$0xff]
          %v3041 = vld [vmem:[#allocation2 + $0x240] sm:$0xff]
          %v3042 = vld [vmem:[#allocation2 + $0x248] sm:$0xff]
          %v3043 = vld [vmem:[#allocation2 + $0x250] sm:$0xff]
          %v3044 = vld [vmem:[#allocation2 + $0x258] sm:$0xff]
          %v3045 = vld [vmem:[#allocation2 + $0x260] sm:$0xff]
          %v3046 = vld [vmem:[#allocation2 + $0x268] sm:$0xff]
          %v3047 = vld [vmem:[#allocation2 + $0x270] sm:$0xff]
          %v3048 = vld [vmem:[#allocation2 + $0x278] sm:$0xff]
          %v3049 = vld [vmem:[#allocation2 + $0x280] sm:$0xff]
          %v3050 = vld [vmem:[#allocation2 + $0x288] sm:$0xff]
          %v3051 = vld [vmem:[#allocation2 + $0x290] sm:$0xff]
          %v3052 = vld [vmem:[#allocation2 + $0x298] sm:$0xff]
          %v3053 = vld [vmem:[#allocation2 + $0x2a0] sm:$0xff]
          %v3054 = vld [vmem:[#allocation2 + $0x2a8] sm:$0xff]
          %v3055 = vld [vmem:[#allocation2 + $0x2b0] sm:$0xff]
          %v3056 = vld [vmem:[#allocation2 + $0x2b8] sm:$0xff]
          %v3057 = vld [vmem:[#allocation2 + $0x2c0] sm:$0xff]
          %v3058 = vld [vmem:[#allocation2 + $0x2c8] sm:$0xff]
          %v3059 = vld [vmem:[#allocation2 + $0x2d0] sm:$0xff]
          %v3060 = vld [vmem:[#allocation2 + $0x2d8] sm:$0xff]
          %v3061 = vld [vmem:[#allocation2 + $0x2e0] sm:$0xff]
          %v3062 = vld [vmem:[#allocation2 + $0x2e8] sm:$0xff]
          %v3063 = vld [vmem:[#allocation2 + $0x2f0] sm:$0xff]
          %v3064 = vld [vmem:[#allocation2 + $0x2f8] sm:$0xff]
          %v3065 = vld [vmem:[#allocation2 + $0x300] sm:$0xff]
          %v3066 = vld [vmem:[#allocation2 + $0x308] sm:$0xff]
          %v3067 = vld [vmem:[#allocation2 + $0x310] sm:$0xff]
          %v3068 = vld [vmem:[#allocation2 + $0x318] sm:$0xff]
          %v3069 = vld [vmem:[#allocation2 + $0x320] sm:$0xff]
          %v3070 = vld [vmem:[#allocation2 + $0x328] sm:$0xff]
          %v3071 = vld [vmem:[#allocation2 + $0x330] sm:$0xff]
          %v3072 = vld [vmem:[#allocation2 + $0x338] sm:$0xff]
          %v3073 = vld [vmem:[#allocation2 + $0x340] sm:$0xff]
          %v3074 = vld [vmem:[#allocation2 + $0x348] sm:$0xff]
          %v3075 = vld [vmem:[#allocation2 + $0x350] sm:$0xff]
          %v3076 = vld [vmem:[#allocation2 + $0x358] sm:$0xff]
          %v3077 = vld [vmem:[#allocation2 + $0x360] sm:$0xff]
          %v3078 = vld [vmem:[#allocation2 + $0x368] sm:$0xff]
          %v3079 = vld [vmem:[#allocation2 + $0x370] sm:$0xff]
          %v3080 = vld [vmem:[#allocation2 + $0x378] sm:$0xff]
          %v3081 = vld [vmem:[#allocation2 + $0x380] sm:$0xff]
          %v3082 = vld [vmem:[#allocation2 + $0x388] sm:$0xff]
          %v3083 = vld [vmem:[#allocation2 + $0x390] sm:$0xff]
          %v3084 = vld [vmem:[#allocation2 + $0x398] sm:$0xff]
          %v3085 = vld [vmem:[#allocation2 + $0x3a0] sm:$0xff]
          %v3086 = vld [vmem:[#allocation2 + $0x3a8] sm:$0xff]
          %v3087 = vld [vmem:[#allocation2 + $0x3b0] sm:$0xff]
          %v3088 = vld [vmem:[#allocation2 + $0x3b8] sm:$0xff]
          %3089 = vst [vmem:[%s232] sm:$0xff] %v2969
          %3090 = vst [vmem:[%s232 + $0x8] sm:$0xff] %v2970
          %3091 = vst [vmem:[%s232 + $0x10] sm:$0xff] %v2971
          %3092 = vst [vmem:[%s232 + $0x18] sm:$0xff] %v2972
          %3093 = vst [vmem:[%s232 + $0x20] sm:$0xff] %v2973
          %3094 = vst [vmem:[%s232 + $0x28] sm:$0xff] %v2974
          %3095 = vst [vmem:[%s232 + $0x30] sm:$0xff] %v2975
          %3096 = vst [vmem:[%s232 + $0x38] sm:$0xff] %v2976
          %3097 = vst [vmem:[%s232 + $0x40] sm:$0xff] %v2977
          %3098 = vst [vmem:[%s232 + $0x48] sm:$0xff] %v2978
          %3099 = vst [vmem:[%s232 + $0x50] sm:$0xff] %v2979
          %3100 = vst [vmem:[%s232 + $0x58] sm:$0xff] %v2980
          %3101 = vst [vmem:[%s232 + $0x60] sm:$0xff] %v2981
          %3102 = vst [vmem:[%s232 + $0x68] sm:$0xff] %v2982
          %3103 = vst [vmem:[%s232 + $0x70] sm:$0xff] %v2983
          %3104 = vst [vmem:[%s232 + $0x78] sm:$0xff] %v2984
          %3105 = vst [vmem:[%s232 + $0x80] sm:$0xff] %v2985
          %3106 = vst [vmem:[%s232 + $0x88] sm:$0xff] %v2986
          %3107 = vst [vmem:[%s232 + $0x90] sm:$0xff] %v2987
          %3108 = vst [vmem:[%s232 + $0x98] sm:$0xff] %v2988
          %3109 = vst [vmem:[%s232 + $0xa0] sm:$0xff] %v2989
          %3110 = vst [vmem:[%s232 + $0xa8] sm:$0xff] %v2990
          %3111 = vst [vmem:[%s232 + $0xb0] sm:$0xff] %v2991
          %3112 = vst [vmem:[%s232 + $0xb8] sm:$0xff] %v2992
          %3113 = vst [vmem:[%s232 + $0xc0] sm:$0xff] %v2993
          %3114 = vst [vmem:[%s232 + $0xc8] sm:$0xff] %v2994
          %3115 = vst [vmem:[%s232 + $0xd0] sm:$0xff] %v2995
          %3116 = vst [vmem:[%s232 + $0xd8] sm:$0xff] %v2996
          %3117 = vst [vmem:[%s232 + $0xe0] sm:$0xff] %v2997
          %3118 = vst [vmem:[%s232 + $0xe8] sm:$0xff] %v2998
          %3119 = vst [vmem:[%s232 + $0xf0] sm:$0xff] %v2999
          %3120 = vst [vmem:[%s232 + $0xf8] sm:$0xff] %v3000
          %3121 = vst [vmem:[%s232 + $0x100] sm:$0xff] %v3001
          %3122 = vst [vmem:[%s232 + $0x108] sm:$0xff] %v3002
          %3123 = vst [vmem:[%s232 + $0x110] sm:$0xff] %v3003
          %3124 = vst [vmem:[%s232 + $0x118] sm:$0xff] %v3004
          %3125 = vst [vmem:[%s232 + $0x120] sm:$0xff] %v3005
          %3126 = vst [vmem:[%s232 + $0x128] sm:$0xff] %v3006
          %3127 = vst [vmem:[%s232 + $0x130] sm:$0xff] %v3007
          %3128 = vst [vmem:[%s232 + $0x138] sm:$0xff] %v3008
          %3129 = vst [vmem:[%s232 + $0x140] sm:$0xff] %v3009
          %3130 = vst [vmem:[%s232 + $0x148] sm:$0xff] %v3010
          %3131 = vst [vmem:[%s232 + $0x150] sm:$0xff] %v3011
          %3132 = vst [vmem:[%s232 + $0x158] sm:$0xff] %v3012
          %3133 = vst [vmem:[%s232 + $0x160] sm:$0xff] %v3013
          %3134 = vst [vmem:[%s232 + $0x168] sm:$0xff] %v3014
          %3135 = vst [vmem:[%s232 + $0x170] sm:$0xff] %v3015
          %3136 = vst [vmem:[%s232 + $0x178] sm:$0xff] %v3016
          %3137 = vst [vmem:[%s232 + $0x180] sm:$0xff] %v3017
          %3138 = vst [vmem:[%s232 + $0x188] sm:$0xff] %v3018
          %3139 = vst [vmem:[%s232 + $0x190] sm:$0xff] %v3019
          %3140 = vst [vmem:[%s232 + $0x198] sm:$0xff] %v3020
          %3141 = vst [vmem:[%s232 + $0x1a0] sm:$0xff] %v3021
          %3142 = vst [vmem:[%s232 + $0x1a8] sm:$0xff] %v3022
          %3143 = vst [vmem:[%s232 + $0x1b0] sm:$0xff] %v3023
          %3144 = vst [vmem:[%s232 + $0x1b8] sm:$0xff] %v3024
          %3145 = vst [vmem:[%s232 + $0x1c0] sm:$0xff] %v3025
          %3146 = vst [vmem:[%s232 + $0x1c8] sm:$0xff] %v3026
          %3147 = vst [vmem:[%s232 + $0x1d0] sm:$0xff] %v3027
          %3148 = vst [vmem:[%s232 + $0x1d8] sm:$0xff] %v3028
          %3149 = vst [vmem:[%s232 + $0x1e0] sm:$0xff] %v3029
          %3150 = vst [vmem:[%s232 + $0x1e8] sm:$0xff] %v3030
          %3151 = vst [vmem:[%s232 + $0x1f0] sm:$0xff] %v3031
          %3152 = vst [vmem:[%s232 + $0x1f8] sm:$0xff] %v3032
          %3153 = vst [vmem:[%s232 + $0x200] sm:$0xff] %v3033
          %3154 = vst [vmem:[%s232 + $0x208] sm:$0xff] %v3034
          %3155 = vst [vmem:[%s232 + $0x210] sm:$0xff] %v3035
          %3156 = vst [vmem:[%s232 + $0x218] sm:$0xff] %v3036
          %3157 = vst [vmem:[%s232 + $0x220] sm:$0xff] %v3037
          %3158 = vst [vmem:[%s232 + $0x228] sm:$0xff] %v3038
          %3159 = vst [vmem:[%s232 + $0x230] sm:$0xff] %v3039
          %3160 = vst [vmem:[%s232 + $0x238] sm:$0xff] %v3040
          %3161 = vst [vmem:[%s232 + $0x240] sm:$0xff] %v3041
          %3162 = vst [vmem:[%s232 + $0x248] sm:$0xff] %v3042
          %3163 = vst [vmem:[%s232 + $0x250] sm:$0xff] %v3043
          %3164 = vst [vmem:[%s232 + $0x258] sm:$0xff] %v3044
          %3165 = vst [vmem:[%s232 + $0x260] sm:$0xff] %v3045
          %3166 = vst [vmem:[%s232 + $0x268] sm:$0xff] %v3046
          %3167 = vst [vmem:[%s232 + $0x270] sm:$0xff] %v3047
          %3168 = vst [vmem:[%s232 + $0x278] sm:$0xff] %v3048
          %3169 = vst [vmem:[%s232 + $0x280] sm:$0xff] %v3049
          %3170 = vst [vmem:[%s232 + $0x288] sm:$0xff] %v3050
          %3171 = vst [vmem:[%s232 + $0x290] sm:$0xff] %v3051
          %3172 = vst [vmem:[%s232 + $0x298] sm:$0xff] %v3052
          %3173 = vst [vmem:[%s232 + $0x2a0] sm:$0xff] %v3053
          %3174 = vst [vmem:[%s232 + $0x2a8] sm:$0xff] %v3054
          %3175 = vst [vmem:[%s232 + $0x2b0] sm:$0xff] %v3055
          %3176 = vst [vmem:[%s232 + $0x2b8] sm:$0xff] %v3056
          %3177 = vst [vmem:[%s232 + $0x2c0] sm:$0xff] %v3057
          %3178 = vst [vmem:[%s232 + $0x2c8] sm:$0xff] %v3058
          %3179 = vst [vmem:[%s232 + $0x2d0] sm:$0xff] %v3059
          %3180 = vst [vmem:[%s232 + $0x2d8] sm:$0xff] %v3060
          %3181 = vst [vmem:[%s232 + $0x2e0] sm:$0xff] %v3061
          %3182 = vst [vmem:[%s232 + $0x2e8] sm:$0xff] %v3062
          %3183 = vst [vmem:[%s232 + $0x2f0] sm:$0xff] %v3063
          %3184 = vst [vmem:[%s232 + $0x2f8] sm:$0xff] %v3064
          %3185 = vst [vmem:[%s232 + $0x300] sm:$0xff] %v3065
          %3186 = vst [vmem:[%s232 + $0x308] sm:$0xff] %v3066
          %3187 = vst [vmem:[%s232 + $0x310] sm:$0xff] %v3067
          %3188 = vst [vmem:[%s232 + $0x318] sm:$0xff] %v3068
          %3189 = vst [vmem:[%s232 + $0x320] sm:$0xff] %v3069
          %3190 = vst [vmem:[%s232 + $0x328] sm:$0xff] %v3070
          %3191 = vst [vmem:[%s232 + $0x330] sm:$0xff] %v3071
          %3192 = vst [vmem:[%s232 + $0x338] sm:$0xff] %v3072
          %3193 = vst [vmem:[%s232 + $0x340] sm:$0xff] %v3073
          %3194 = vst [vmem:[%s232 + $0x348] sm:$0xff] %v3074
          %3195 = vst [vmem:[%s232 + $0x350] sm:$0xff] %v3075
          %3196 = vst [vmem:[%s232 + $0x358] sm:$0xff] %v3076
          %3197 = vst [vmem:[%s232 + $0x360] sm:$0xff] %v3077
          %3198 = vst [vmem:[%s232 + $0x368] sm:$0xff] %v3078
          %3199 = vst [vmem:[%s232 + $0x370] sm:$0xff] %v3079
          %3200 = vst [vmem:[%s232 + $0x378] sm:$0xff] %v3080
          %3201 = vst [vmem:[%s232 + $0x380] sm:$0xff] %v3081
          %3202 = vst [vmem:[%s232 + $0x388] sm:$0xff] %v3082
          %3203 = vst [vmem:[%s232 + $0x390] sm:$0xff] %v3083
          %3204 = vst [vmem:[%s232 + $0x398] sm:$0xff] %v3084
          %3205 = vst [vmem:[%s232 + $0x3a0] sm:$0xff] %v3085
          %3206 = vst [vmem:[%s232 + $0x3a8] sm:$0xff] %v3086
          %3207 = vst [vmem:[%s232 + $0x3b0] sm:$0xff] %v3087
          %3208 = vst [vmem:[%s232 + $0x3b8] sm:$0xff] %v3088
        $region48: #{tpu_custom_call.1} parent=27 // pred_fallthru
          _
        %s3209 = sand.u32 %s107, 1
        %s3210 = scalar_lea.sflag [#allocation5], %s3209
        %s3211 = sand.u32 %s107, 1
        %s3212 = smul.addr %s3211, 960
        %s3213 = scalar_lea.vmem [#allocation8], %s3212
        // Predicated region
        $region49: #{tpu_custom_call.1} parent=27 // pred_check
          %p3214 = pneg %p117
        $region50: #{tpu_custom_call.1} parent=27 // pred_check_branch
          %3216 = sbr.rel (%p3214) target = $region52
        $region51: #{tpu_custom_call.1} parent=27 // pred_region
          %s3217 = smul.u32 40, %s27
          %s3218 = smul.u32 3, %s28
          %s3220 = ssub.s32 15360, 15360
          %3221 = vsyncadd %s3210, %s3220
          %s3222 = smul.addr %s3217, 3
          %s3223 = sadd.s32 %s3218, %s3222
          %s3224 = smul.addr %s3223, 128
          %s3225 = scalar_lea.hbm %s2, %s3224
          %s3226 = sshll.u32 %s3213, 4
          %s3227 = int_to_ptr.vmem [resolvable:$true] %s3226
          %3232 = dma.vmem_to_hbm [thread:$0]  %s3227, 15360, %s3225, %s3210, 384, 384, 24
        $region52: #{tpu_custom_call.1} parent=27 // pred_fallthru
          _
      $region28: #{tpu_custom_call.1} parent=5 // pred_fallthru
        _
      %p3233 = scmp.le.s32.totalorder 2, %s17
      // Predicated region
      $region53: #{tpu_custom_call.1} parent=5 // pred_check
        %p3234 = pneg %p3233
      $region54: #{tpu_custom_call.1} parent=5 // pred_check_branch
        %3236 = sbr.rel (%p3234) target = $region56
      $region55: #{tpu_custom_call.1} parent=5 // pred_region
        %s3237 = ssub.s32 %s17, 2
        // Predicated region
        $region57: #{tpu_custom_call.1} parent=55 // pred_check
          %p3238 = pneg %p123
        $region58: #{tpu_custom_call.1} parent=55 // pred_check_branch
          %3240 = sbr.rel (%p3238) target = $region60
        $region59: #{tpu_custom_call.1} parent=55 // pred_region
          %s3241 = sand.u32 %s108, 1
          %s3242 = scalar_lea.sflag [#allocation5], %s3241
          %s3243 = sand.u32 %s108, 1
          %s3244 = smul.addr %s3243, 960
          %s3245 = scalar_lea.vmem [#allocation8], %s3244
          %3246 = dma.done %s3242, 15360
        $region60: #{tpu_custom_call.1} parent=55 // pred_fallthru
          _
      $region56: #{tpu_custom_call.1} parent=5 // pred_fallthru
        _
    $region6: #{tpu_custom_call.1} parent=1 // loop_footer
      %s21 = sadd.s32 1, %s17
    $region7: #{tpu_custom_call.1} parent=1 // loop_footer_branch
      %16 = sbr.rel target = $region3
    $region8: #{tpu_custom_call.1} parent=1 // loop_exit
      _
    %3247 = vsyncpa [#allocation4], 1
    %s3248 = scalar_lea.sflag [#allocation4], 1
    %3249 = vsyncpa %s3248, 1
    %3250 = vsyncpa [#allocation7], 1
    %s3251 = scalar_lea.sflag [#allocation7], 1
    %3252 = vsyncpa %s3251, 1
    %3253 = vsyncpa [#allocation5], 1
    %s3254 = scalar_lea.sflag [#allocation5], 1
    %3255 = vsyncpa %s3254, 1

</llo_original>
